<compile_context>
chip_gen: v6e
topology: v6e:2x2x1
jax: 0.10.0
libtpu: 0.0.40
codegen_flags: <defaults>
</compile_context>

<pallas_src>
import functools

import jax
import jax.numpy as jnp
from jax.experimental import pallas as pl
from jax.experimental.pallas import tpu as pltpu


# ----------------------------------------------------------------------------
# Static view / relation structure (baked into the kernel trace).
# ----------------------------------------------------------------------------
ALL_RELS = ("gene_rel", "methy_rel", "mirna_rel")

VIEW_RELS = {
    "coarse": ("gene_rel", "methy_rel", "mirna_rel"),
    "medium1": ("gene_rel", "methy_rel"),
    "medium2": ("gene_rel", "mirna_rel"),
    "medium3": ("methy_rel", "mirna_rel"),
    "fine1": ("gene_rel",),
    "fine2": ("methy_rel",),
    "fine3": ("mirna_rel",),
}
VIEW_ORDER = tuple(VIEW_RELS.keys())
NUM_VIEWS = len(VIEW_ORDER)                                   # 7
REL_COUNTS = tuple(len(VIEW_RELS[v]) for v in VIEW_ORDER)     # (3,2,2,2,1,1,1)
R_MAX = max(REL_COUNTS)                                       # 3
_offs, _acc = [], 0
for _c in REL_COUNTS:
    _offs.append(_acc)
    _acc += _c
REL_OFFSETS = tuple(_offs)                                    # (0,3,5,7,9,10,11)
R_TOTAL = _acc                                                # 12


# ----------------------------------------------------------------------------
# Fused Pallas kernel: one grid step computes all 7 view embeddings.
# ----------------------------------------------------------------------------
def _heco_fused_kernel(x_ref, w_ref, a_ref, b_ref, o_ref, *, hidden, out_cols):
    """x_ref: [V, N, F_max]            bf16  (zero-padded node features per view)
    w_ref: [V, F_max, (1+R_max)*H]     bf16  (cols [0:H]=W_self, [(r+1)H:(r+2)H]=W_r)
    a_ref: [R_total, N, N]             bf16  (all relations, view-major order)
    b_ref: [V, 1, H]                   f32
    o_ref: [N, out_cols]               f32   (view v occupies cols [v*H:(v+1)*H])
    """
    n = x_ref.shape[1]
    h = hidden
    pieces = []
    for v in range(NUM_VIEWS):
        # Stage 1: one MXU matmul fuses the self-loop and every relation weight.
        xw = jnp.dot(x_ref[v], w_ref[v], preferred_element_type=jnp.float32)
        acc = xw[:, :h] + b_ref[v]                      # self term + bias (f32)
        # Stage 2: per-relation message passing, accumulated in registers.
        off = REL_OFFSETS[v]
        for r in range(REL_COUNTS[v]):
            xw_r = xw[:, (r + 1) * h:(r + 2) * h].astype(jnp.bfloat16)
            acc = acc + jnp.dot(a_ref[off + r], xw_r,
                                preferred_element_type=jnp.float32)
        pieces.append(acc * jax.nn.sigmoid(acc))        # SiLU (f32 epilogue)
    z = jnp.concatenate(pieces, axis=1)                 # [N, V*H]
    pad = out_cols - NUM_VIEWS * h
    if pad > 0:                                         # lane-dense output slab
        z = jnp.concatenate([z, jnp.zeros((n, pad), jnp.float32)], axis=1)
    o_ref[...] = z


def heco_forward_packed(x_all, w_all, a_pack, b_all, *, hidden):
    """Single pallas_call over the packed multi-view graph. Returns [N, out_cols]."""
    v, n, _ = x_all.shape
    out_cols = ((v * hidden + 127) // 128) * 128        # pad 7*32=224 -> 256
    kernel = functools.partial(_heco_fused_kernel, hidden=hidden, out_cols=out_cols)
    grid_spec = pltpu.PrefetchScalarGridSpec(
        num_scalar_prefetch=0,
        grid=(1,),
        in_specs=[
            pl.BlockSpec(x_all.shape, lambda i: (0, 0, 0)),   # X (all views, resident)
            pl.BlockSpec(w_all.shape, lambda i: (0, 0, 0)),   # packed W_all per view
            pl.BlockSpec(a_pack.shape, lambda i: (0, 0, 0)),  # all 12 adjacencies
            pl.BlockSpec(b_all.shape, lambda i: (0, 0, 0)),   # biases
        ],
        out_specs=pl.BlockSpec((n, out_cols), lambda i: (0, 0)),
    )
    return pl.pallas_call(
        kernel,
        out_shape=jax.ShapeDtypeStruct((n, out_cols), jnp.float32),
        grid_spec=grid_spec,
        compiler_params=pltpu.CompilerParams(dimension_semantics=("arbitrary",)),
    )(x_all, w_all, a_pack, b_all)


# ----------------------------------------------------------------------------
# Parameter / data packing (hoisted out of the forward path).
# ----------------------------------------------------------------------------
def init_heco_params(key, feature_dims, hidden_dim):
    params = {}
    for view, rels in VIEW_RELS.items():
        f = feature_dims[view]
        key, k_self, k_b = jax.random.split(key, 3)
        w_rels = []
        for _ in rels:
            key, k_w = jax.random.split(key)
            w_rels.append(jax.random.normal(k_w, (f, hidden_dim), jnp.float32)
                          * (1.0 / jnp.sqrt(f)))
        params[view] = {
            "w_stack": jnp.stack(w_rels, axis=0),                       # [R, F, H]
            "w_self": jax.random.normal(k_self, (f, hidden_dim), jnp.float32)
            * (1.0 / jnp.sqrt(f)),
            "b": jax.random.normal(k_b, (1, hidden_dim), jnp.float32) * 0.01,
        }
    return params


def pack_params(params, hidden):
    """Concat [W_self | W_1 .. W_R] per view into [V, F_max, (1+R_max)*H] bf16."""
    f_max = max(p["w_self"].shape[0] for p in params.values())
    w_all, b_all = [], []
    for view in VIEW_ORDER:
        p = params[view]
        f = p["w_self"].shape[0]
        w = jnp.zeros((f_max, (1 + R_MAX) * hidden), jnp.float32)
        w = w.at[:f, :hidden].set(p["w_self"])
        for r in range(len(VIEW_RELS[view])):
            w = w.at[:f, (r + 1) * hidden:(r + 2) * hidden].set(p["w_stack"][r])
        w_all.append(w)
        b_all.append(p["b"].reshape(1, hidden))
    return (jnp.stack(w_all).astype(jnp.bfloat16),      # [V, F_max, (1+R_max)*H]
            jnp.stack(b_all).astype(jnp.float32),       # [V, 1, H]
            f_max)


def pack_data(data, f_max):
    """Zero-pad features to F_max and stack all relation adjacencies once."""
    x_all, a_list = [], []
    for view in VIEW_ORDER:
        x = data[view]["x"]
        x_all.append(jnp.pad(x, ((0, 0), (0, f_max - x.shape[1]))))
        for rel in VIEW_RELS[view]:
            a_list.append(data[view]["adj"][rel])
    return (jnp.stack(x_all).astype(jnp.bfloat16),      # [V, N, F_max]
            jnp.stack(a_list).astype(jnp.bfloat16))     # [R_total, N, N]


# ----------------------------------------------------------------------------
# Pure-JAX reference (mirrors the kernel's bf16-input / f32-accumulate math).
# ----------------------------------------------------------------------------
def _bf16_round(x):
    return x.astype(jnp.bfloat16).astype(jnp.float32)


def heco_reference(params, data):
    hp = jax.lax.Precision.HIGHEST
    out = {}
    for view, rels in VIEW_RELS.items():
        x = _bf16_round(data[view]["x"])
        p = params[view]
        z = jnp.dot(x, _bf16_round(p["w_self"]), precision=hp) + p["b"]
        for r, rel in enumerate(rels):
            xw_r = _bf16_round(jnp.dot(x, _bf16_round(p["w_stack"][r]), precision=hp))
            z = z + jnp.dot(_bf16_round(data[view]["adj"][rel]), xw_r, precision=hp)
        out[view] = z * jax.nn.sigmoid(z)
    return out


def _row_normalized_adj(key, n):
    a = (jax.random.uniform(key, (n, n)) > 0.7).astype(jnp.float32)
    a = a + jnp.eye(n, dtype=jnp.float32)
    deg = jnp.sum(a, axis=1, keepdims=True)
    return a / jnp.maximum(deg, 1.0)


if __name__ == "__main__":
    key = jax.random.PRNGKey(0)

    N = 64        # nodes per view
    HIDDEN = 32   # encoder output dim
    feature_dims = {
        "coarse": 32,
        "medium1": 24, "medium2": 24, "medium3": 24,
        "fine1": 16, "fine2": 16, "fine3": 16,
    }

    key, pkey = jax.random.split(key)
    params = init_heco_params(pkey, feature_dims, HIDDEN)

    data = {}
    for view, rels in VIEW_RELS.items():
        key, kx = jax.random.split(key)
        x = jax.random.normal(kx, (N, feature_dims[view]), jnp.float32)
        adj = {}
        for rel in rels:
            key, ka = jax.random.split(key)
            adj[rel] = _row_normalized_adj(ka, N)
        data[view] = {"x": x, "adj": adj}

    # Packing hoisted out of the forward path (done once per dataset / params).
    w_all, b_all, f_max = pack_params(params, HIDDEN)
    x_all, a_pack = pack_data(data, f_max)

    out_slab = heco_forward_packed(x_all, w_all, a_pack, b_all, hidden=HIDDEN)
    jax.block_until_ready(out_slab)

    embeds = {view: out_slab[:, v * HIDDEN:(v + 1) * HIDDEN]
              for v, view in enumerate(VIEW_ORDER)}

    # Correctness vs. pure-JAX reference (same bf16 input rounding).
    ref = heco_reference(params, data)
    for view in VIEW_ORDER:
        assert embeds[view].shape == (N, HIDDEN), embeds[view].shape
        err = float(jnp.max(jnp.abs(embeds[view] - ref[view])))
        assert err < 1e-2, (view, err)

    print("KERNEL_OK")
</pallas_src>

<mosaic_0001>
module attributes {stable_mosaic.version = 11 : i64} {
  func.func @_heco_fused_kernel(%arg0: i32, %arg1: memref<7x64x32xbf16, #tpu.memory_space<vmem>>, %arg2: memref<7x32x128xbf16, #tpu.memory_space<vmem>>, %arg3: memref<12x64x64xbf16, #tpu.memory_space<vmem>>, %arg4: memref<7x1x32xf32, #tpu.memory_space<vmem>>, %arg5: memref<64x256xf32, #tpu.memory_space<vmem>>) attributes {dimension_semantics = [#tpu.dimension_semantics<arbitrary>], iteration_bounds = array<i64: 1>, scalar_prefetch = 0 : i64, scratch_operands = 0 : i64, tpu.core_type = #tpu.core_type<tc>, window_params = [{pipeline_mode = #tpu.pipeline_mode<synchronous>, transform_indices = @transform_0, window_bounds = array<i64: 7, 64, 32>}, {pipeline_mode = #tpu.pipeline_mode<synchronous>, transform_indices = @transform_1, window_bounds = array<i64: 7, 32, 128>}, {pipeline_mode = #tpu.pipeline_mode<synchronous>, transform_indices = @transform_2, window_bounds = array<i64: 12, 64, 64>}, {pipeline_mode = #tpu.pipeline_mode<synchronous>, transform_indices = @transform_3, window_bounds = array<i64: 7, 1, 32>}, {pipeline_mode = #tpu.pipeline_mode<synchronous>, transform_indices = @transform_4, window_bounds = array<i64: 64, 256>}]} {
    %c0 = arith.constant 0 : index
    %c0_0 = arith.constant 0 : index
    %c0_1 = arith.constant 0 : index
    %0 = vector.load %arg1[%c0, %c0_0, %c0_1] : memref<7x64x32xbf16, #tpu.memory_space<vmem>>, vector<1x64x32xbf16>
    %1 = vector.shape_cast %0 : vector<1x64x32xbf16> to vector<64x32xbf16>
    %c0_2 = arith.constant 0 : index
    %c0_3 = arith.constant 0 : index
    %c0_4 = arith.constant 0 : index
    %2 = vector.load %arg2[%c0_2, %c0_3, %c0_4] : memref<7x32x128xbf16, #tpu.memory_space<vmem>>, vector<1x32x128xbf16>
    %3 = vector.shape_cast %2 : vector<1x32x128xbf16> to vector<32x128xbf16>
    %cst = arith.constant dense<0.000000e+00> : vector<64x128xf32>
    %4 = tpu.matmul %1, %3, %cst {dimension_numbers = #tpu.dot_dimension_numbers<[1], [0], [0], [1], [0, 0, 1, 1], [], []>} : vector<64x32xbf16>, vector<32x128xbf16>, vector<64x128xf32> -> vector<64x128xf32>
    %5 = vector.extract_strided_slice %4 {offsets = [0, 0], sizes = [64, 32], strides = [1, 1]} : vector<64x128xf32> to vector<64x32xf32>
    %c0_5 = arith.constant 0 : index
    %c0_6 = arith.constant 0 : index
    %c0_7 = arith.constant 0 : index
    %6 = vector.load %arg4[%c0_5, %c0_6, %c0_7] : memref<7x1x32xf32, #tpu.memory_space<vmem>>, vector<1x1x32xf32>
    %7 = vector.shape_cast %6 : vector<1x1x32xf32> to vector<1x32xf32>
    %8 = vector.broadcast %7 : vector<1x32xf32> to vector<64x32xf32>
    %9 = arith.addf %5, %8 : vector<64x32xf32>
    %10 = vector.extract_strided_slice %4 {offsets = [0, 32], sizes = [64, 32], strides = [1, 1]} : vector<64x128xf32> to vector<64x32xf32>
    %11 = arith.truncf %10 : vector<64x32xf32> to vector<64x32xbf16>
    %c0_8 = arith.constant 0 : index
    %c0_9 = arith.constant 0 : index
    %c0_10 = arith.constant 0 : index
    %12 = vector.load %arg3[%c0_8, %c0_9, %c0_10] : memref<12x64x64xbf16, #tpu.memory_space<vmem>>, vector<1x64x64xbf16>
    %13 = vector.shape_cast %12 : vector<1x64x64xbf16> to vector<64x64xbf16>
    %cst_11 = arith.constant dense<0.000000e+00> : vector<64x32xf32>
    %14 = tpu.matmul %13, %11, %cst_11 {dimension_numbers = #tpu.dot_dimension_numbers<[1], [0], [0], [1], [0, 0, 1, 1], [], []>} : vector<64x64xbf16>, vector<64x32xbf16>, vector<64x32xf32> -> vector<64x32xf32>
    %15 = arith.addf %9, %14 : vector<64x32xf32>
    %16 = vector.extract_strided_slice %4 {offsets = [0, 64], sizes = [64, 32], strides = [1, 1]} : vector<64x128xf32> to vector<64x32xf32>
    %17 = arith.truncf %16 : vector<64x32xf32> to vector<64x32xbf16>
    %c1 = arith.constant 1 : index
    %c0_12 = arith.constant 0 : index
    %c0_13 = arith.constant 0 : index
    %18 = vector.load %arg3[%c1, %c0_12, %c0_13] : memref<12x64x64xbf16, #tpu.memory_space<vmem>>, vector<1x64x64xbf16>
    %19 = vector.shape_cast %18 : vector<1x64x64xbf16> to vector<64x64xbf16>
    %cst_14 = arith.constant dense<0.000000e+00> : vector<64x32xf32>
    %20 = tpu.matmul %19, %17, %cst_14 {dimension_numbers = #tpu.dot_dimension_numbers<[1], [0], [0], [1], [0, 0, 1, 1], [], []>} : vector<64x64xbf16>, vector<64x32xbf16>, vector<64x32xf32> -> vector<64x32xf32>
    %21 = arith.addf %15, %20 : vector<64x32xf32>
    %22 = vector.extract_strided_slice %4 {offsets = [0, 96], sizes = [64, 32], strides = [1, 1]} : vector<64x128xf32> to vector<64x32xf32>
    %23 = arith.truncf %22 : vector<64x32xf32> to vector<64x32xbf16>
    %c2 = arith.constant 2 : index
    %c0_15 = arith.constant 0 : index
    %c0_16 = arith.constant 0 : index
    %24 = vector.load %arg3[%c2, %c0_15, %c0_16] : memref<12x64x64xbf16, #tpu.memory_space<vmem>>, vector<1x64x64xbf16>
    %25 = vector.shape_cast %24 : vector<1x64x64xbf16> to vector<64x64xbf16>
    %cst_17 = arith.constant dense<0.000000e+00> : vector<64x32xf32>
    %26 = tpu.matmul %25, %23, %cst_17 {dimension_numbers = #tpu.dot_dimension_numbers<[1], [0], [0], [1], [0, 0, 1, 1], [], []>} : vector<64x64xbf16>, vector<64x32xbf16>, vector<64x32xf32> -> vector<64x32xf32>
    %27 = arith.addf %21, %26 : vector<64x32xf32>
    %28 = arith.negf %27 : vector<64x32xf32>
    %29 = math.exp %28 : vector<64x32xf32>
    %cst_18 = arith.constant 1.000000e+00 : f32
    %30 = vector.broadcast %cst_18 : f32 to vector<64x32xf32>
    %31 = arith.addf %30, %29 : vector<64x32xf32>
    %32 = arith.divf %30, %31 : vector<64x32xf32>
    %33 = arith.mulf %27, %32 : vector<64x32xf32>
    %c1_19 = arith.constant 1 : index
    %c0_20 = arith.constant 0 : index
    %c0_21 = arith.constant 0 : index
    %34 = vector.load %arg1[%c1_19, %c0_20, %c0_21] : memref<7x64x32xbf16, #tpu.memory_space<vmem>>, vector<1x64x32xbf16>
    %35 = vector.shape_cast %34 : vector<1x64x32xbf16> to vector<64x32xbf16>
    %c1_22 = arith.constant 1 : index
    %c0_23 = arith.constant 0 : index
    %c0_24 = arith.constant 0 : index
    %36 = vector.load %arg2[%c1_22, %c0_23, %c0_24] : memref<7x32x128xbf16, #tpu.memory_space<vmem>>, vector<1x32x128xbf16>
    %37 = vector.shape_cast %36 : vector<1x32x128xbf16> to vector<32x128xbf16>
    %cst_25 = arith.constant dense<0.000000e+00> : vector<64x128xf32>
    %38 = tpu.matmul %35, %37, %cst_25 {dimension_numbers = #tpu.dot_dimension_numbers<[1], [0], [0], [1], [0, 0, 1, 1], [], []>} : vector<64x32xbf16>, vector<32x128xbf16>, vector<64x128xf32> -> vector<64x128xf32>
    %39 = vector.extract_strided_slice %38 {offsets = [0, 0], sizes = [64, 32], strides = [1, 1]} : vector<64x128xf32> to vector<64x32xf32>
    %c1_26 = arith.constant 1 : index
    %c0_27 = arith.constant 0 : index
    %c0_28 = arith.constant 0 : index
    %40 = vector.load %arg4[%c1_26, %c0_27, %c0_28] : memref<7x1x32xf32, #tpu.memory_space<vmem>>, vector<1x1x32xf32>
    %41 = vector.shape_cast %40 : vector<1x1x32xf32> to vector<1x32xf32>
    %42 = vector.broadcast %41 : vector<1x32xf32> to vector<64x32xf32>
    %43 = arith.addf %39, %42 : vector<64x32xf32>
    %44 = vector.extract_strided_slice %38 {offsets = [0, 32], sizes = [64, 32], strides = [1, 1]} : vector<64x128xf32> to vector<64x32xf32>
    %45 = arith.truncf %44 : vector<64x32xf32> to vector<64x32xbf16>
    %c3 = arith.constant 3 : index
    %c0_29 = arith.constant 0 : index
    %c0_30 = arith.constant 0 : index
    %46 = vector.load %arg3[%c3, %c0_29, %c0_30] : memref<12x64x64xbf16, #tpu.memory_space<vmem>>, vector<1x64x64xbf16>
    %47 = vector.shape_cast %46 : vector<1x64x64xbf16> to vector<64x64xbf16>
    %cst_31 = arith.constant dense<0.000000e+00> : vector<64x32xf32>
    %48 = tpu.matmul %47, %45, %cst_31 {dimension_numbers = #tpu.dot_dimension_numbers<[1], [0], [0], [1], [0, 0, 1, 1], [], []>} : vector<64x64xbf16>, vector<64x32xbf16>, vector<64x32xf32> -> vector<64x32xf32>
    %49 = arith.addf %43, %48 : vector<64x32xf32>
    %50 = vector.extract_strided_slice %38 {offsets = [0, 64], sizes = [64, 32], strides = [1, 1]} : vector<64x128xf32> to vector<64x32xf32>
    %51 = arith.truncf %50 : vector<64x32xf32> to vector<64x32xbf16>
    %c4 = arith.constant 4 : index
    %c0_32 = arith.constant 0 : index
    %c0_33 = arith.constant 0 : index
    %52 = vector.load %arg3[%c4, %c0_32, %c0_33] : memref<12x64x64xbf16, #tpu.memory_space<vmem>>, vector<1x64x64xbf16>
    %53 = vector.shape_cast %52 : vector<1x64x64xbf16> to vector<64x64xbf16>
    %cst_34 = arith.constant dense<0.000000e+00> : vector<64x32xf32>
    %54 = tpu.matmul %53, %51, %cst_34 {dimension_numbers = #tpu.dot_dimension_numbers<[1], [0], [0], [1], [0, 0, 1, 1], [], []>} : vector<64x64xbf16>, vector<64x32xbf16>, vector<64x32xf32> -> vector<64x32xf32>
    %55 = arith.addf %49, %54 : vector<64x32xf32>
    %56 = arith.negf %55 : vector<64x32xf32>
    %57 = math.exp %56 : vector<64x32xf32>
    %cst_35 = arith.constant 1.000000e+00 : f32
    %58 = vector.broadcast %cst_35 : f32 to vector<64x32xf32>
    %59 = arith.addf %58, %57 : vector<64x32xf32>
    %60 = arith.divf %58, %59 : vector<64x32xf32>
    %61 = arith.mulf %55, %60 : vector<64x32xf32>
    %c2_36 = arith.constant 2 : index
    %c0_37 = arith.constant 0 : index
    %c0_38 = arith.constant 0 : index
    %62 = vector.load %arg1[%c2_36, %c0_37, %c0_38] : memref<7x64x32xbf16, #tpu.memory_space<vmem>>, vector<1x64x32xbf16>
    %63 = vector.shape_cast %62 : vector<1x64x32xbf16> to vector<64x32xbf16>
    %c2_39 = arith.constant 2 : index
    %c0_40 = arith.constant 0 : index
    %c0_41 = arith.constant 0 : index
    %64 = vector.load %arg2[%c2_39, %c0_40, %c0_41] : memref<7x32x128xbf16, #tpu.memory_space<vmem>>, vector<1x32x128xbf16>
    %65 = vector.shape_cast %64 : vector<1x32x128xbf16> to vector<32x128xbf16>
    %cst_42 = arith.constant dense<0.000000e+00> : vector<64x128xf32>
    %66 = tpu.matmul %63, %65, %cst_42 {dimension_numbers = #tpu.dot_dimension_numbers<[1], [0], [0], [1], [0, 0, 1, 1], [], []>} : vector<64x32xbf16>, vector<32x128xbf16>, vector<64x128xf32> -> vector<64x128xf32>
    %67 = vector.extract_strided_slice %66 {offsets = [0, 0], sizes = [64, 32], strides = [1, 1]} : vector<64x128xf32> to vector<64x32xf32>
    %c2_43 = arith.constant 2 : index
    %c0_44 = arith.constant 0 : index
    %c0_45 = arith.constant 0 : index
    %68 = vector.load %arg4[%c2_43, %c0_44, %c0_45] : memref<7x1x32xf32, #tpu.memory_space<vmem>>, vector<1x1x32xf32>
    %69 = vector.shape_cast %68 : vector<1x1x32xf32> to vector<1x32xf32>
    %70 = vector.broadcast %69 : vector<1x32xf32> to vector<64x32xf32>
    %71 = arith.addf %67, %70 : vector<64x32xf32>
    %72 = vector.extract_strided_slice %66 {offsets = [0, 32], sizes = [64, 32], strides = [1, 1]} : vector<64x128xf32> to vector<64x32xf32>
    %73 = arith.truncf %72 : vector<64x32xf32> to vector<64x32xbf16>
    %c5 = arith.constant 5 : index
    %c0_46 = arith.constant 0 : index
    %c0_47 = arith.constant 0 : index
    %74 = vector.load %arg3[%c5, %c0_46, %c0_47] : memref<12x64x64xbf16, #tpu.memory_space<vmem>>, vector<1x64x64xbf16>
    %75 = vector.shape_cast %74 : vector<1x64x64xbf16> to vector<64x64xbf16>
    %cst_48 = arith.constant dense<0.000000e+00> : vector<64x32xf32>
    %76 = tpu.matmul %75, %73, %cst_48 {dimension_numbers = #tpu.dot_dimension_numbers<[1], [0], [0], [1], [0, 0, 1, 1], [], []>} : vector<64x64xbf16>, vector<64x32xbf16>, vector<64x32xf32> -> vector<64x32xf32>
    %77 = arith.addf %71, %76 : vector<64x32xf32>
    %78 = vector.extract_strided_slice %66 {offsets = [0, 64], sizes = [64, 32], strides = [1, 1]} : vector<64x128xf32> to vector<64x32xf32>
    %79 = arith.truncf %78 : vector<64x32xf32> to vector<64x32xbf16>
    %c6 = arith.constant 6 : index
    %c0_49 = arith.constant 0 : index
    %c0_50 = arith.constant 0 : index
    %80 = vector.load %arg3[%c6, %c0_49, %c0_50] : memref<12x64x64xbf16, #tpu.memory_space<vmem>>, vector<1x64x64xbf16>
    %81 = vector.shape_cast %80 : vector<1x64x64xbf16> to vector<64x64xbf16>
    %cst_51 = arith.constant dense<0.000000e+00> : vector<64x32xf32>
    %82 = tpu.matmul %81, %79, %cst_51 {dimension_numbers = #tpu.dot_dimension_numbers<[1], [0], [0], [1], [0, 0, 1, 1], [], []>} : vector<64x64xbf16>, vector<64x32xbf16>, vector<64x32xf32> -> vector<64x32xf32>
    %83 = arith.addf %77, %82 : vector<64x32xf32>
    %84 = arith.negf %83 : vector<64x32xf32>
    %85 = math.exp %84 : vector<64x32xf32>
    %cst_52 = arith.constant 1.000000e+00 : f32
    %86 = vector.broadcast %cst_52 : f32 to vector<64x32xf32>
    %87 = arith.addf %86, %85 : vector<64x32xf32>
    %88 = arith.divf %86, %87 : vector<64x32xf32>
    %89 = arith.mulf %83, %88 : vector<64x32xf32>
    %c3_53 = arith.constant 3 : index
    %c0_54 = arith.constant 0 : index
    %c0_55 = arith.constant 0 : index
    %90 = vector.load %arg1[%c3_53, %c0_54, %c0_55] : memref<7x64x32xbf16, #tpu.memory_space<vmem>>, vector<1x64x32xbf16>
    %91 = vector.shape_cast %90 : vector<1x64x32xbf16> to vector<64x32xbf16>
    %c3_56 = arith.constant 3 : index
    %c0_57 = arith.constant 0 : index
    %c0_58 = arith.constant 0 : index
    %92 = vector.load %arg2[%c3_56, %c0_57, %c0_58] : memref<7x32x128xbf16, #tpu.memory_space<vmem>>, vector<1x32x128xbf16>
    %93 = vector.shape_cast %92 : vector<1x32x128xbf16> to vector<32x128xbf16>
    %cst_59 = arith.constant dense<0.000000e+00> : vector<64x128xf32>
    %94 = tpu.matmul %91, %93, %cst_59 {dimension_numbers = #tpu.dot_dimension_numbers<[1], [0], [0], [1], [0, 0, 1, 1], [], []>} : vector<64x32xbf16>, vector<32x128xbf16>, vector<64x128xf32> -> vector<64x128xf32>
    %95 = vector.extract_strided_slice %94 {offsets = [0, 0], sizes = [64, 32], strides = [1, 1]} : vector<64x128xf32> to vector<64x32xf32>
    %c3_60 = arith.constant 3 : index
    %c0_61 = arith.constant 0 : index
    %c0_62 = arith.constant 0 : index
    %96 = vector.load %arg4[%c3_60, %c0_61, %c0_62] : memref<7x1x32xf32, #tpu.memory_space<vmem>>, vector<1x1x32xf32>
    %97 = vector.shape_cast %96 : vector<1x1x32xf32> to vector<1x32xf32>
    %98 = vector.broadcast %97 : vector<1x32xf32> to vector<64x32xf32>
    %99 = arith.addf %95, %98 : vector<64x32xf32>
    %100 = vector.extract_strided_slice %94 {offsets = [0, 32], sizes = [64, 32], strides = [1, 1]} : vector<64x128xf32> to vector<64x32xf32>
    %101 = arith.truncf %100 : vector<64x32xf32> to vector<64x32xbf16>
    %c7 = arith.constant 7 : index
    %c0_63 = arith.constant 0 : index
    %c0_64 = arith.constant 0 : index
    %102 = vector.load %arg3[%c7, %c0_63, %c0_64] : memref<12x64x64xbf16, #tpu.memory_space<vmem>>, vector<1x64x64xbf16>
    %103 = vector.shape_cast %102 : vector<1x64x64xbf16> to vector<64x64xbf16>
    %cst_65 = arith.constant dense<0.000000e+00> : vector<64x32xf32>
    %104 = tpu.matmul %103, %101, %cst_65 {dimension_numbers = #tpu.dot_dimension_numbers<[1], [0], [0], [1], [0, 0, 1, 1], [], []>} : vector<64x64xbf16>, vector<64x32xbf16>, vector<64x32xf32> -> vector<64x32xf32>
    %105 = arith.addf %99, %104 : vector<64x32xf32>
    %106 = vector.extract_strided_slice %94 {offsets = [0, 64], sizes = [64, 32], strides = [1, 1]} : vector<64x128xf32> to vector<64x32xf32>
    %107 = arith.truncf %106 : vector<64x32xf32> to vector<64x32xbf16>
    %c8 = arith.constant 8 : index
    %c0_66 = arith.constant 0 : index
    %c0_67 = arith.constant 0 : index
    %108 = vector.load %arg3[%c8, %c0_66, %c0_67] : memref<12x64x64xbf16, #tpu.memory_space<vmem>>, vector<1x64x64xbf16>
    %109 = vector.shape_cast %108 : vector<1x64x64xbf16> to vector<64x64xbf16>
    %cst_68 = arith.constant dense<0.000000e+00> : vector<64x32xf32>
    %110 = tpu.matmul %109, %107, %cst_68 {dimension_numbers = #tpu.dot_dimension_numbers<[1], [0], [0], [1], [0, 0, 1, 1], [], []>} : vector<64x64xbf16>, vector<64x32xbf16>, vector<64x32xf32> -> vector<64x32xf32>
    %111 = arith.addf %105, %110 : vector<64x32xf32>
    %112 = arith.negf %111 : vector<64x32xf32>
    %113 = math.exp %112 : vector<64x32xf32>
    %cst_69 = arith.constant 1.000000e+00 : f32
    %114 = vector.broadcast %cst_69 : f32 to vector<64x32xf32>
    %115 = arith.addf %114, %113 : vector<64x32xf32>
    %116 = arith.divf %114, %115 : vector<64x32xf32>
    %117 = arith.mulf %111, %116 : vector<64x32xf32>
    %c4_70 = arith.constant 4 : index
    %c0_71 = arith.constant 0 : index
    %c0_72 = arith.constant 0 : index
    %118 = vector.load %arg1[%c4_70, %c0_71, %c0_72] : memref<7x64x32xbf16, #tpu.memory_space<vmem>>, vector<1x64x32xbf16>
    %119 = vector.shape_cast %118 : vector<1x64x32xbf16> to vector<64x32xbf16>
    %c4_73 = arith.constant 4 : index
    %c0_74 = arith.constant 0 : index
    %c0_75 = arith.constant 0 : index
    %120 = vector.load %arg2[%c4_73, %c0_74, %c0_75] : memref<7x32x128xbf16, #tpu.memory_space<vmem>>, vector<1x32x128xbf16>
    %121 = vector.shape_cast %120 : vector<1x32x128xbf16> to vector<32x128xbf16>
    %cst_76 = arith.constant dense<0.000000e+00> : vector<64x128xf32>
    %122 = tpu.matmul %119, %121, %cst_76 {dimension_numbers = #tpu.dot_dimension_numbers<[1], [0], [0], [1], [0, 0, 1, 1], [], []>} : vector<64x32xbf16>, vector<32x128xbf16>, vector<64x128xf32> -> vector<64x128xf32>
    %123 = vector.extract_strided_slice %122 {offsets = [0, 0], sizes = [64, 32], strides = [1, 1]} : vector<64x128xf32> to vector<64x32xf32>
    %c4_77 = arith.constant 4 : index
    %c0_78 = arith.constant 0 : index
    %c0_79 = arith.constant 0 : index
    %124 = vector.load %arg4[%c4_77, %c0_78, %c0_79] : memref<7x1x32xf32, #tpu.memory_space<vmem>>, vector<1x1x32xf32>
    %125 = vector.shape_cast %124 : vector<1x1x32xf32> to vector<1x32xf32>
    %126 = vector.broadcast %125 : vector<1x32xf32> to vector<64x32xf32>
    %127 = arith.addf %123, %126 : vector<64x32xf32>
    %128 = vector.extract_strided_slice %122 {offsets = [0, 32], sizes = [64, 32], strides = [1, 1]} : vector<64x128xf32> to vector<64x32xf32>
    %129 = arith.truncf %128 : vector<64x32xf32> to vector<64x32xbf16>
    %c9 = arith.constant 9 : index
    %c0_80 = arith.constant 0 : index
    %c0_81 = arith.constant 0 : index
    %130 = vector.load %arg3[%c9, %c0_80, %c0_81] : memref<12x64x64xbf16, #tpu.memory_space<vmem>>, vector<1x64x64xbf16>
    %131 = vector.shape_cast %130 : vector<1x64x64xbf16> to vector<64x64xbf16>
    %cst_82 = arith.constant dense<0.000000e+00> : vector<64x32xf32>
    %132 = tpu.matmul %131, %129, %cst_82 {dimension_numbers = #tpu.dot_dimension_numbers<[1], [0], [0], [1], [0, 0, 1, 1], [], []>} : vector<64x64xbf16>, vector<64x32xbf16>, vector<64x32xf32> -> vector<64x32xf32>
    %133 = arith.addf %127, %132 : vector<64x32xf32>
    %134 = arith.negf %133 : vector<64x32xf32>
    %135 = math.exp %134 : vector<64x32xf32>
    %cst_83 = arith.constant 1.000000e+00 : f32
    %136 = vector.broadcast %cst_83 : f32 to vector<64x32xf32>
    %137 = arith.addf %136, %135 : vector<64x32xf32>
    %138 = arith.divf %136, %137 : vector<64x32xf32>
    %139 = arith.mulf %133, %138 : vector<64x32xf32>
    %c5_84 = arith.constant 5 : index
    %c0_85 = arith.constant 0 : index
    %c0_86 = arith.constant 0 : index
    %140 = vector.load %arg1[%c5_84, %c0_85, %c0_86] : memref<7x64x32xbf16, #tpu.memory_space<vmem>>, vector<1x64x32xbf16>
    %141 = vector.shape_cast %140 : vector<1x64x32xbf16> to vector<64x32xbf16>
    %c5_87 = arith.constant 5 : index
    %c0_88 = arith.constant 0 : index
    %c0_89 = arith.constant 0 : index
    %142 = vector.load %arg2[%c5_87, %c0_88, %c0_89] : memref<7x32x128xbf16, #tpu.memory_space<vmem>>, vector<1x32x128xbf16>
    %143 = vector.shape_cast %142 : vector<1x32x128xbf16> to vector<32x128xbf16>
    %cst_90 = arith.constant dense<0.000000e+00> : vector<64x128xf32>
    %144 = tpu.matmul %141, %143, %cst_90 {dimension_numbers = #tpu.dot_dimension_numbers<[1], [0], [0], [1], [0, 0, 1, 1], [], []>} : vector<64x32xbf16>, vector<32x128xbf16>, vector<64x128xf32> -> vector<64x128xf32>
    %145 = vector.extract_strided_slice %144 {offsets = [0, 0], sizes = [64, 32], strides = [1, 1]} : vector<64x128xf32> to vector<64x32xf32>
    %c5_91 = arith.constant 5 : index
    %c0_92 = arith.constant 0 : index
    %c0_93 = arith.constant 0 : index
    %146 = vector.load %arg4[%c5_91, %c0_92, %c0_93] : memref<7x1x32xf32, #tpu.memory_space<vmem>>, vector<1x1x32xf32>
    %147 = vector.shape_cast %146 : vector<1x1x32xf32> to vector<1x32xf32>
    %148 = vector.broadcast %147 : vector<1x32xf32> to vector<64x32xf32>
    %149 = arith.addf %145, %148 : vector<64x32xf32>
    %150 = vector.extract_strided_slice %144 {offsets = [0, 32], sizes = [64, 32], strides = [1, 1]} : vector<64x128xf32> to vector<64x32xf32>
    %151 = arith.truncf %150 : vector<64x32xf32> to vector<64x32xbf16>
    %c10 = arith.constant 10 : index
    %c0_94 = arith.constant 0 : index
    %c0_95 = arith.constant 0 : index
    %152 = vector.load %arg3[%c10, %c0_94, %c0_95] : memref<12x64x64xbf16, #tpu.memory_space<vmem>>, vector<1x64x64xbf16>
    %153 = vector.shape_cast %152 : vector<1x64x64xbf16> to vector<64x64xbf16>
    %cst_96 = arith.constant dense<0.000000e+00> : vector<64x32xf32>
    %154 = tpu.matmul %153, %151, %cst_96 {dimension_numbers = #tpu.dot_dimension_numbers<[1], [0], [0], [1], [0, 0, 1, 1], [], []>} : vector<64x64xbf16>, vector<64x32xbf16>, vector<64x32xf32> -> vector<64x32xf32>
    %155 = arith.addf %149, %154 : vector<64x32xf32>
    %156 = arith.negf %155 : vector<64x32xf32>
    %157 = math.exp %156 : vector<64x32xf32>
    %cst_97 = arith.constant 1.000000e+00 : f32
    %158 = vector.broadcast %cst_97 : f32 to vector<64x32xf32>
    %159 = arith.addf %158, %157 : vector<64x32xf32>
    %160 = arith.divf %158, %159 : vector<64x32xf32>
    %161 = arith.mulf %155, %160 : vector<64x32xf32>
    %c6_98 = arith.constant 6 : index
    %c0_99 = arith.constant 0 : index
    %c0_100 = arith.constant 0 : index
    %162 = vector.load %arg1[%c6_98, %c0_99, %c0_100] : memref<7x64x32xbf16, #tpu.memory_space<vmem>>, vector<1x64x32xbf16>
    %163 = vector.shape_cast %162 : vector<1x64x32xbf16> to vector<64x32xbf16>
    %c6_101 = arith.constant 6 : index
    %c0_102 = arith.constant 0 : index
    %c0_103 = arith.constant 0 : index
    %164 = vector.load %arg2[%c6_101, %c0_102, %c0_103] : memref<7x32x128xbf16, #tpu.memory_space<vmem>>, vector<1x32x128xbf16>
    %165 = vector.shape_cast %164 : vector<1x32x128xbf16> to vector<32x128xbf16>
    %cst_104 = arith.constant dense<0.000000e+00> : vector<64x128xf32>
    %166 = tpu.matmul %163, %165, %cst_104 {dimension_numbers = #tpu.dot_dimension_numbers<[1], [0], [0], [1], [0, 0, 1, 1], [], []>} : vector<64x32xbf16>, vector<32x128xbf16>, vector<64x128xf32> -> vector<64x128xf32>
    %167 = vector.extract_strided_slice %166 {offsets = [0, 0], sizes = [64, 32], strides = [1, 1]} : vector<64x128xf32> to vector<64x32xf32>
    %c6_105 = arith.constant 6 : index
    %c0_106 = arith.constant 0 : index
    %c0_107 = arith.constant 0 : index
    %168 = vector.load %arg4[%c6_105, %c0_106, %c0_107] : memref<7x1x32xf32, #tpu.memory_space<vmem>>, vector<1x1x32xf32>
    %169 = vector.shape_cast %168 : vector<1x1x32xf32> to vector<1x32xf32>
    %170 = vector.broadcast %169 : vector<1x32xf32> to vector<64x32xf32>
    %171 = arith.addf %167, %170 : vector<64x32xf32>
    %172 = vector.extract_strided_slice %166 {offsets = [0, 32], sizes = [64, 32], strides = [1, 1]} : vector<64x128xf32> to vector<64x32xf32>
    %173 = arith.truncf %172 : vector<64x32xf32> to vector<64x32xbf16>
    %c11 = arith.constant 11 : index
    %c0_108 = arith.constant 0 : index
    %c0_109 = arith.constant 0 : index
    %174 = vector.load %arg3[%c11, %c0_108, %c0_109] : memref<12x64x64xbf16, #tpu.memory_space<vmem>>, vector<1x64x64xbf16>
    %175 = vector.shape_cast %174 : vector<1x64x64xbf16> to vector<64x64xbf16>
    %cst_110 = arith.constant dense<0.000000e+00> : vector<64x32xf32>
    %176 = tpu.matmul %175, %173, %cst_110 {dimension_numbers = #tpu.dot_dimension_numbers<[1], [0], [0], [1], [0, 0, 1, 1], [], []>} : vector<64x64xbf16>, vector<64x32xbf16>, vector<64x32xf32> -> vector<64x32xf32>
    %177 = arith.addf %171, %176 : vector<64x32xf32>
    %178 = arith.negf %177 : vector<64x32xf32>
    %179 = math.exp %178 : vector<64x32xf32>
    %cst_111 = arith.constant 1.000000e+00 : f32
    %180 = vector.broadcast %cst_111 : f32 to vector<64x32xf32>
    %181 = arith.addf %180, %179 : vector<64x32xf32>
    %182 = arith.divf %180, %181 : vector<64x32xf32>
    %183 = arith.mulf %177, %182 : vector<64x32xf32>
    %184 = tpu.concatenate %33, %61, %89, %117, %139, %161, %183 in 1 : vector<64x32xf32>, vector<64x32xf32>, vector<64x32xf32>, vector<64x32xf32>, vector<64x32xf32>, vector<64x32xf32>, vector<64x32xf32> -> vector<64x224xf32>
    %cst_112 = arith.constant 0.000000e+00 : f32
    %185 = vector.broadcast %cst_112 : f32 to vector<64x32xf32>
    %186 = tpu.concatenate %184, %185 in 1 : vector<64x224xf32>, vector<64x32xf32> -> vector<64x256xf32>
    %c0_113 = arith.constant 0 : index
    %c0_114 = arith.constant 0 : index
    %187 = vector.load %arg5[%c0_113, %c0_114] : memref<64x256xf32, #tpu.memory_space<vmem>>, vector<64x256xf32>
    tpu.vector_store %arg5[%c0_113, %c0_114], %186 {strides = array<i32>} : memref<64x256xf32, #tpu.memory_space<vmem>>, vector<64x256xf32>,
    return
  }
  func.func @transform_0(%arg0: i32) -> (i32, i32, i32) {
    %c0_i32 = arith.constant 0 : i32
    %c0_i32_0 = arith.constant 0 : i32
    %c0_i32_1 = arith.constant 0 : i32
    %c0_i32_2 = arith.constant 0 : i32
    return %c0_i32, %c0_i32_0, %c0_i32_1 : i32, i32, i32
  }
  func.func @transform_1(%arg0: i32) -> (i32, i32, i32) {
    %c0_i32 = arith.constant 0 : i32
    %c0_i32_0 = arith.constant 0 : i32
    %c0_i32_1 = arith.constant 0 : i32
    %c0_i32_2 = arith.constant 0 : i32
    return %c0_i32, %c0_i32_0, %c0_i32_1 : i32, i32, i32
  }
  func.func @transform_2(%arg0: i32) -> (i32, i32, i32) {
    %c0_i32 = arith.constant 0 : i32
    %c0_i32_0 = arith.constant 0 : i32
    %c0_i32_1 = arith.constant 0 : i32
    %c0_i32_2 = arith.constant 0 : i32
    return %c0_i32, %c0_i32_0, %c0_i32_1 : i32, i32, i32
  }
  func.func @transform_3(%arg0: i32) -> (i32, i32, i32) {
    %c0_i32 = arith.constant 0 : i32
    %c0_i32_0 = arith.constant 0 : i32
    %c0_i32_1 = arith.constant 0 : i32
    %c0_i32_2 = arith.constant 0 : i32
    return %c0_i32, %c0_i32_0, %c0_i32_1 : i32, i32, i32
  }
  func.func @transform_4(%arg0: i32) -> (i32, i32) {
    %c0_i32 = arith.constant 0 : i32
    %c0_i32_0 = arith.constant 0 : i32
    %c0_i32_1 = arith.constant 0 : i32
    return %c0_i32, %c0_i32_0 : i32, i32
  }
}

</mosaic_0001>

<llo_original>
// kernel: tpu_custom_call.1
$region0: #{tpu_custom_call.1}
  #allocation0 [shape = 'u32[]', space=smem, size = 0x4, offset = 0x4, fixed_abs, tag = 'smem constant byte address 0x4 - core index']
  #allocation1 [shape = 'u32[144,128]{1,0:T(1,128)}', space=vmem, size = 0x12000, scoped, tag = 'internal scratch']
  %s0 = inlined_call_operand.vmem [shape: bf16[7,64,32], index: 0, kind: input, shape index: {}]
  %s1 = inlined_call_operand.vmem [shape: bf16[7,32,128], index: 1, kind: input, shape index: {}]
  %s2 = inlined_call_operand.hbm [shape: bf16[12,64,64], index: 2, kind: input, shape index: {}]
  %s3 = inlined_call_operand.vmem [shape: f32[7,1,32], index: 3, kind: input, shape index: {}]
  %s4 = inlined_call_operand.hbm [shape: f32[64,256], index: 4, kind: output, shape index: {}]
  %s5 = sld [smem:[#allocation0]]
  $region30: #{tpu_custom_call.1} parent=0
    _
  %s7 = ssub.s32 1, %s5
  %s8 = scalar_select 0, %s7, %s5
  $region1: #{tpu_custom_call.1} parent=0
    #allocation2 [shape = 'u8[196608]{0}', space=vmem, size = 0x30000, scoped, tag = 'input window, operand 2, single buffered']
    #allocation3 [shape = 's32[1]{0}', space=sflag, size = 0x4, scoped, tag = 'scoped memory for tpu_custom_call.1']
    #allocation4 [shape = 's32[1]{0}', space=sflag, size = 0x4, scoped, tag = 'scoped memory for tpu_custom_call.1']
    #allocation5 [shape = 'u8[65536]{0}', space=vmem, size = 0x10000, scoped, tag = 'output window, operand 0, single buffered']
    %9 = vsyncpa [#allocation3], 0
    %10 = vsyncpa [#allocation4], 0
    // Predicated region
    $region2: #{tpu_custom_call.1} parent=1 // pred_check
      _
    $region3: #{tpu_custom_call.1} parent=1 // pred_check_branch
      %12 = sbr.rel (0) target = $region5
    $region4: #{tpu_custom_call.1} parent=1 // pred_region
      _
    $region5: #{tpu_custom_call.1} parent=1 // pred_fallthru
      _
    // Predicated region
    $region6: #{tpu_custom_call.1} parent=1 // pred_check
      _
    $region7: #{tpu_custom_call.1} parent=1 // pred_check_branch
      %14 = sbr.rel (0) target = $region9
    $region8: #{tpu_custom_call.1} parent=1 // pred_region
      _
    $region9: #{tpu_custom_call.1} parent=1 // pred_fallthru
      _
    // Predicated region
    $region10: #{tpu_custom_call.1} parent=1 // pred_check
      _
    $region11: #{tpu_custom_call.1} parent=1 // pred_check_branch
      %16 = sbr.rel (0) target = $region13
    $region12: #{tpu_custom_call.1} parent=1 // pred_region
      %s18 = ssub.s32 6144, 6144
      %19 = vsyncadd [#allocation3], %s18
      %s20 = sshll.u32 [#allocation2], 4
      %s21 = int_to_ptr.vmem [resolvable:$true] %s20
      %26 = dma.hbm_to_vmem [thread:$0]  %s2, 6144, %s21, [#allocation3], 64, 64, 4
    $region13: #{tpu_custom_call.1} parent=1 // pred_fallthru
      _
    // Predicated region
    $region14: #{tpu_custom_call.1} parent=1 // pred_check
      _
    $region15: #{tpu_custom_call.1} parent=1 // pred_check_branch
      %28 = sbr.rel (0) target = $region17
    $region16: #{tpu_custom_call.1} parent=1 // pred_region
      _
    $region17: #{tpu_custom_call.1} parent=1 // pred_fallthru
      _
    // Predicated region
    $region18: #{tpu_custom_call.1} parent=1 // pred_check
      _
    $region19: #{tpu_custom_call.1} parent=1 // pred_check_branch
      %30 = sbr.rel (0) target = $region21
    $region20: #{tpu_custom_call.1} parent=1 // pred_region
      %31 = dma.done [#allocation3], 6144
    $region21: #{tpu_custom_call.1} parent=1 // pred_fallthru
      _
    %v33 = vld [vmem:[%s0] sm:$0xf]
    %v34 = vld [vmem:[%s0 + $0x4] sm:$0xf]
    %v35 = vld [vmem:[%s0 + $0x8] sm:$0xf]
    %v36 = vld [vmem:[%s0 + $0xc] sm:$0xf]
    %v37 = vld [vmem:[%s0 + $0x10] sm:$0xf]
    %v38 = vld [vmem:[%s0 + $0x14] sm:$0xf]
    %v39 = vld [vmem:[%s0 + $0x18] sm:$0xf]
    %v40 = vld [vmem:[%s0 + $0x1c] sm:$0xf]
    %v41 = vld [vmem:[%s1] sm:$0xf]
    %v42 = vld [vmem:[%s1 + $0x4] sm:$0xf]
    %v43 = vld [vmem:[%s1 + $0x8] sm:$0xf]
    %v44 = vld [vmem:[%s1 + $0xc] sm:$0xf]
    %v53 = vunpack.c.l.b16 %v33
    %v54 = vunpack.c.l.b16 %v34
    %v55 = vunpack.c.l.b16 %v35
    %v56 = vunpack.c.l.b16 %v36
    %v57 = vunpack.c.l.b16 %v37
    %v58 = vunpack.c.l.b16 %v38
    %v59 = vunpack.c.l.b16 %v39
    %v60 = vunpack.c.l.b16 %v40
    %v61 = vpack.c.b16 %v54, %v53
    %v62 = vpack.c.b16 %v56, %v55
    %v63 = vpack.c.b16 %v58, %v57
    %v64 = vpack.c.b16 %v60, %v59
    %v69 = vunpack.c.l.b16 %v41
    %v70 = vunpack.c.l.b16 %v42
    %v71 = vunpack.c.l.b16 %v43
    %v72 = vunpack.c.l.b16 %v44
    %v73 = vpack.c.b16 %v70, %v69
    %v74 = vpack.c.b16 %v72, %v71
    %vm77 = vcmask 261120
    %v79 = vsel %vm77, %v61, 0
    %v82 = vsel %vm77, %v62, 0
    %v85 = vsel %vm77, %v63, 0
    %v88 = vsel %vm77, %v64, 0
    %90 = vmatprep.subr.bf16.mxu0 0
    %91 = vmatpush1.bf16.msra.mxu0 0
    %92 = vmatprep.subr.bf16.mxu0 0
    %93 = vmatpush1.bf16.msra.mxu0 0
    %94 = vmatprep.subr.bf16.mxu0 0
    %95 = vmatpush1.bf16.msra.mxu0 0
    %96 = vmatprep.subr.bf16.mxu0 0
    %97 = vmatpush1.bf16.msra.mxu0 0
    %98 = vmatprep.subr.bf16.mxu0 0
    %99 = vmatpush1.bf16.msra.mxu0 0
    %100 = vmatprep.subr.bf16.mxu0 0
    %101 = vmatpush1.bf16.msra.mxu0 0
    %102 = vmatprep.subr.bf16.mxu0 0
    %103 = vmatpush1.bf16.msra.mxu0 %v74
    %104 = vmatprep.subr.bf16.mxu0 0
    %105 = vmatpush1.bf16.msra.mxu0 %v73
    %106 = vmatprep.subr.bf16.mxu0 0
    %107 = vmatpush2.bf16.msra.mxu0 0
    %108 = vmatprep.subr.bf16.mxu0 0
    %109 = vmatpush2.bf16.msra.mxu0 0
    %110 = vmatprep.subr.bf16.mxu0 0
    %111 = vmatpush2.bf16.msra.mxu0 0
    %112 = vmatprep.subr.bf16.mxu0 0
    %113 = vmatpush2.bf16.msra.mxu0 0
    %114 = vmatprep.subr.bf16.mxu0 0
    %115 = vmatpush2.bf16.msra.mxu0 0
    %116 = vmatprep.subr.bf16.mxu0 0
    %117 = vmatpush2.bf16.msra.mxu0 0
    %118 = vmatprep.subr.bf16.mxu0 0
    %119 = vmatpush2.bf16.msra.mxu0 0
    %120 = vmatprep.subr.bf16.mxu0 0
    %121 = vmatpush2.bf16.msra.mxu0 0
    %122 = vmatprep.mubr.bf16.mxu0 0
    %123 = vmatmul.mubr.bf16.gmra.mxu0 %v79
    %v124 = vpop.f32.mrf.mxu0
    %v125 = vadd.f32 0.0, %v124
    %v126 = vpop.f32.mrf.mxu0
    %v127 = vpop.f32.mrf.mxu0
    %v128 = vadd.f32 0.0, %v127
    %v129 = vpop.f32.mrf.mxu0
    %130 = vmatprep.mubr.bf16.mxu0 0
    %131 = vmatmul.mubr.bf16.gmra.mxu0 %v82
    %v132 = vpop.f32.mrf.mxu0
    %v133 = vadd.f32 0.0, %v132
    %v134 = vpop.f32.mrf.mxu0
    %v135 = vpop.f32.mrf.mxu0
    %v136 = vadd.f32 0.0, %v135
    %v137 = vpop.f32.mrf.mxu0
    %138 = vmatprep.mubr.bf16.mxu0 0
    %139 = vmatmul.mubr.bf16.gmra.mxu0 %v85
    %v140 = vpop.f32.mrf.mxu0
    %v141 = vadd.f32 0.0, %v140
    %v142 = vpop.f32.mrf.mxu0
    %v143 = vpop.f32.mrf.mxu0
    %v144 = vadd.f32 0.0, %v143
    %v145 = vpop.f32.mrf.mxu0
    %146 = vmatprep.mubr.bf16.mxu0 0
    %147 = vmatmul.mubr.bf16.gmra.mxu0 %v88
    %v148 = vpop.f32.mrf.mxu0
    %v149 = vadd.f32 0.0, %v148
    %v150 = vpop.f32.mrf.mxu0
    %v151 = vpop.f32.mrf.mxu0
    %v152 = vadd.f32 0.0, %v151
    %v153 = vpop.f32.mrf.mxu0
    %154 = vdwg.mxu0
    %v155 = vld [vmem:[%s3] sm:$0x1]
    %v157 = vlaneseq
    %v158 = vshrl.u32 %v157, 7
    %v159 = vsub.s32 0, %v158
    %v160 = vrot.slane %v155, %v159
    %v162 = vadd.f32 %v125, %v160
    %v163 = vadd.f32 %v128, %v160
    %v164 = vadd.f32 %v133, %v160
    %v165 = vadd.f32 %v136, %v160
    %v166 = vadd.f32 %v141, %v160
    %v167 = vadd.f32 %v144, %v160
    %v168 = vadd.f32 %v149, %v160
    %v169 = vadd.f32 %v152, %v160
    %v170 = vpack.c.bf16 %v128, %v125
    %v171 = vpack.c.bf16 %v136, %v133
    %v172 = vpack.c.bf16 %v144, %v141
    %v173 = vpack.c.bf16 %v152, %v149
    %v174 = vld [vmem:[#allocation2] sm:$0xf]
    %v175 = vld [vmem:[#allocation2 + $0x4] sm:$0xf]
    %v176 = vld [vmem:[#allocation2 + $0x8] sm:$0xf]
    %v177 = vld [vmem:[#allocation2 + $0xc] sm:$0xf]
    %v178 = vld [vmem:[#allocation2 + $0x10] sm:$0xf]
    %v179 = vld [vmem:[#allocation2 + $0x14] sm:$0xf]
    %v180 = vld [vmem:[#allocation2 + $0x18] sm:$0xf]
    %v181 = vld [vmem:[#allocation2 + $0x1c] sm:$0xf]
    %v190 = vunpack.c.l.b16 %v174
    %v191 = vunpack.c.l.b16 %v175
    %v192 = vunpack.c.l.b16 %v176
    %v193 = vunpack.c.l.b16 %v177
    %v194 = vunpack.c.l.b16 %v178
    %v195 = vunpack.c.l.b16 %v179
    %v196 = vunpack.c.l.b16 %v180
    %v197 = vunpack.c.l.b16 %v181
    %v198 = vpack.c.b16 %v191, %v190
    %v199 = vpack.c.b16 %v193, %v192
    %v200 = vpack.c.b16 %v195, %v194
    %v201 = vpack.c.b16 %v197, %v196
    %206 = vrot.lane.b32.xlu0 %v170, 96
    %v207 = vpop.permute.xlu0 %206
    %208 = vrot.lane.b32.xlu0 %v171, 96
    %v209 = vpop.permute.xlu0 %208
    %210 = vrot.lane.b32.xlu0 %v172, 96
    %v211 = vpop.permute.xlu0 %210
    %212 = vrot.lane.b32.xlu0 %v173, 96
    %v213 = vpop.permute.xlu0 %212
    %vm218 = vcmask 523264
    %v220 = vsel %vm218, %v198, 0
    %v223 = vsel %vm218, %v199, 0
    %v226 = vsel %vm218, %v200, 0
    %v229 = vsel %vm218, %v201, 0
    %231 = vmatprep.subr.bf16.mxu0 0
    %232 = vmatpush1.bf16.msra.mxu0 0
    %233 = vmatprep.subr.bf16.mxu0 0
    %234 = vmatpush1.bf16.msra.mxu0 0
    %235 = vmatprep.subr.bf16.mxu0 0
    %236 = vmatpush1.bf16.msra.mxu0 0
    %237 = vmatprep.subr.bf16.mxu0 0
    %238 = vmatpush1.bf16.msra.mxu0 0
    %239 = vmatprep.subr.bf16.mxu0 0
    %240 = vmatpush1.bf16.msra.mxu0 %v213
    %241 = vmatprep.subr.bf16.mxu0 0
    %242 = vmatpush1.bf16.msra.mxu0 %v211
    %243 = vmatprep.subr.bf16.mxu0 0
    %244 = vmatpush1.bf16.msra.mxu0 %v209
    %245 = vmatprep.subr.bf16.mxu0 0
    %246 = vmatpush1.bf16.msra.mxu0 %v207
    %247 = vmatprep.subr.bf16.mxu0 0
    %248 = vmatpush2.bf16.msra.mxu0 0
    %249 = vmatprep.subr.bf16.mxu0 0
    %250 = vmatpush2.bf16.msra.mxu0 0
    %251 = vmatprep.subr.bf16.mxu0 0
    %252 = vmatpush2.bf16.msra.mxu0 0
    %253 = vmatprep.subr.bf16.mxu0 0
    %254 = vmatpush2.bf16.msra.mxu0 0
    %255 = vmatprep.subr.bf16.mxu0 0
    %256 = vmatpush2.bf16.msra.mxu0 0
    %257 = vmatprep.subr.bf16.mxu0 0
    %258 = vmatpush2.bf16.msra.mxu0 0
    %259 = vmatprep.subr.bf16.mxu0 0
    %260 = vmatpush2.bf16.msra.mxu0 0
    %261 = vmatprep.subr.bf16.mxu0 0
    %262 = vmatpush2.bf16.msra.mxu0 0
    %263 = vmatprep.mubr.bf16.mxu0 0
    %264 = vmatmul.mubr.bf16.gmra.mxu0 %v220
    %v265 = vpop.f32.mrf.mxu0
    %v266 = vadd.f32 0.0, %v265
    %v267 = vpop.f32.mrf.mxu0
    %v268 = vpop.f32.mrf.mxu0
    %v269 = vadd.f32 0.0, %v268
    %v270 = vpop.f32.mrf.mxu0
    %271 = vmatprep.mubr.bf16.mxu0 0
    %272 = vmatmul.mubr.bf16.gmra.mxu0 %v223
    %v273 = vpop.f32.mrf.mxu0
    %v274 = vadd.f32 0.0, %v273
    %v275 = vpop.f32.mrf.mxu0
    %v276 = vpop.f32.mrf.mxu0
    %v277 = vadd.f32 0.0, %v276
    %v278 = vpop.f32.mrf.mxu0
    %279 = vmatprep.mubr.bf16.mxu0 0
    %280 = vmatmul.mubr.bf16.gmra.mxu0 %v226
    %v281 = vpop.f32.mrf.mxu0
    %v282 = vadd.f32 0.0, %v281
    %v283 = vpop.f32.mrf.mxu0
    %v284 = vpop.f32.mrf.mxu0
    %v285 = vadd.f32 0.0, %v284
    %v286 = vpop.f32.mrf.mxu0
    %287 = vmatprep.mubr.bf16.mxu0 0
    %288 = vmatmul.mubr.bf16.gmra.mxu0 %v229
    %v289 = vpop.f32.mrf.mxu0
    %v290 = vadd.f32 0.0, %v289
    %v291 = vpop.f32.mrf.mxu0
    %v292 = vpop.f32.mrf.mxu0
    %v293 = vadd.f32 0.0, %v292
    %v294 = vpop.f32.mrf.mxu0
    %295 = vdwg.mxu0
    %v296 = vadd.f32 %v162, %v266
    %v297 = vadd.f32 %v163, %v269
    %v298 = vadd.f32 %v164, %v274
    %v299 = vadd.f32 %v165, %v277
    %v300 = vadd.f32 %v166, %v282
    %v301 = vadd.f32 %v167, %v285
    %v302 = vadd.f32 %v168, %v290
    %v303 = vadd.f32 %v169, %v293
    %s304 = scalar_lea.vmem [#allocation2], 32
    %v305 = vld [vmem:[%s304] sm:$0xf]
    %v306 = vld [vmem:[%s304 + $0x4] sm:$0xf]
    %v307 = vld [vmem:[%s304 + $0x8] sm:$0xf]
    %v308 = vld [vmem:[%s304 + $0xc] sm:$0xf]
    %v309 = vld [vmem:[%s304 + $0x10] sm:$0xf]
    %v310 = vld [vmem:[%s304 + $0x14] sm:$0xf]
    %v311 = vld [vmem:[%s304 + $0x18] sm:$0xf]
    %v312 = vld [vmem:[%s304 + $0x1c] sm:$0xf]
    %v321 = vunpack.c.l.b16 %v305
    %v322 = vunpack.c.l.b16 %v306
    %v323 = vunpack.c.l.b16 %v307
    %v324 = vunpack.c.l.b16 %v308
    %v325 = vunpack.c.l.b16 %v309
    %v326 = vunpack.c.l.b16 %v310
    %v327 = vunpack.c.l.b16 %v311
    %v328 = vunpack.c.l.b16 %v312
    %v329 = vpack.c.b16 %v322, %v321
    %v330 = vpack.c.b16 %v324, %v323
    %v331 = vpack.c.b16 %v326, %v325
    %v332 = vpack.c.b16 %v328, %v327
    %333 = vrot.lane.b32.xlu0 %v170, 64
    %v334 = vpop.permute.xlu0 %333
    %335 = vrot.lane.b32.xlu0 %v171, 64
    %v336 = vpop.permute.xlu0 %335
    %337 = vrot.lane.b32.xlu0 %v172, 64
    %v338 = vpop.permute.xlu0 %337
    %339 = vrot.lane.b32.xlu0 %v173, 64
    %v340 = vpop.permute.xlu0 %339
    %v346 = vsel %vm218, %v329, 0
    %v349 = vsel %vm218, %v330, 0
    %v352 = vsel %vm218, %v331, 0
    %v355 = vsel %vm218, %v332, 0
    %357 = vmatprep.subr.bf16.mxu0 0
    %358 = vmatpush1.bf16.msra.mxu0 0
    %359 = vmatprep.subr.bf16.mxu0 0
    %360 = vmatpush1.bf16.msra.mxu0 0
    %361 = vmatprep.subr.bf16.mxu0 0
    %362 = vmatpush1.bf16.msra.mxu0 0
    %363 = vmatprep.subr.bf16.mxu0 0
    %364 = vmatpush1.bf16.msra.mxu0 0
    %365 = vmatprep.subr.bf16.mxu0 0
    %366 = vmatpush1.bf16.msra.mxu0 %v340
    %367 = vmatprep.subr.bf16.mxu0 0
    %368 = vmatpush1.bf16.msra.mxu0 %v338
    %369 = vmatprep.subr.bf16.mxu0 0
    %370 = vmatpush1.bf16.msra.mxu0 %v336
    %371 = vmatprep.subr.bf16.mxu0 0
    %372 = vmatpush1.bf16.msra.mxu0 %v334
    %373 = vmatprep.subr.bf16.mxu0 0
    %374 = vmatpush2.bf16.msra.mxu0 0
    %375 = vmatprep.subr.bf16.mxu0 0
    %376 = vmatpush2.bf16.msra.mxu0 0
    %377 = vmatprep.subr.bf16.mxu0 0
    %378 = vmatpush2.bf16.msra.mxu0 0
    %379 = vmatprep.subr.bf16.mxu0 0
    %380 = vmatpush2.bf16.msra.mxu0 0
    %381 = vmatprep.subr.bf16.mxu0 0
    %382 = vmatpush2.bf16.msra.mxu0 0
    %383 = vmatprep.subr.bf16.mxu0 0
    %384 = vmatpush2.bf16.msra.mxu0 0
    %385 = vmatprep.subr.bf16.mxu0 0
    %386 = vmatpush2.bf16.msra.mxu0 0
    %387 = vmatprep.subr.bf16.mxu0 0
    %388 = vmatpush2.bf16.msra.mxu0 0
    %389 = vmatprep.mubr.bf16.mxu0 0
    %390 = vmatmul.mubr.bf16.gmra.mxu0 %v346
    %v391 = vpop.f32.mrf.mxu0
    %v392 = vadd.f32 0.0, %v391
    %v393 = vpop.f32.mrf.mxu0
    %v394 = vpop.f32.mrf.mxu0
    %v395 = vadd.f32 0.0, %v394
    %v396 = vpop.f32.mrf.mxu0
    %397 = vmatprep.mubr.bf16.mxu0 0
    %398 = vmatmul.mubr.bf16.gmra.mxu0 %v349
    %v399 = vpop.f32.mrf.mxu0
    %v400 = vadd.f32 0.0, %v399
    %v401 = vpop.f32.mrf.mxu0
    %v402 = vpop.f32.mrf.mxu0
    %v403 = vadd.f32 0.0, %v402
    %v404 = vpop.f32.mrf.mxu0
    %405 = vmatprep.mubr.bf16.mxu0 0
    %406 = vmatmul.mubr.bf16.gmra.mxu0 %v352
    %v407 = vpop.f32.mrf.mxu0
    %v408 = vadd.f32 0.0, %v407
    %v409 = vpop.f32.mrf.mxu0
    %v410 = vpop.f32.mrf.mxu0
    %v411 = vadd.f32 0.0, %v410
    %v412 = vpop.f32.mrf.mxu0
    %413 = vmatprep.mubr.bf16.mxu0 0
    %414 = vmatmul.mubr.bf16.gmra.mxu0 %v355
    %v415 = vpop.f32.mrf.mxu0
    %v416 = vadd.f32 0.0, %v415
    %v417 = vpop.f32.mrf.mxu0
    %v418 = vpop.f32.mrf.mxu0
    %v419 = vadd.f32 0.0, %v418
    %v420 = vpop.f32.mrf.mxu0
    %421 = vdwg.mxu0
    %v422 = vadd.f32 %v296, %v392
    %v423 = vadd.f32 %v297, %v395
    %v424 = vadd.f32 %v298, %v400
    %v425 = vadd.f32 %v299, %v403
    %v426 = vadd.f32 %v300, %v408
    %v427 = vadd.f32 %v301, %v411
    %v428 = vadd.f32 %v302, %v416
    %v429 = vadd.f32 %v303, %v419
    %s430 = scalar_lea.vmem [#allocation2], 64
    %v431 = vld [vmem:[%s430] sm:$0xf]
    %v432 = vld [vmem:[%s430 + $0x4] sm:$0xf]
    %v433 = vld [vmem:[%s430 + $0x8] sm:$0xf]
    %v434 = vld [vmem:[%s430 + $0xc] sm:$0xf]
    %v435 = vld [vmem:[%s430 + $0x10] sm:$0xf]
    %v436 = vld [vmem:[%s430 + $0x14] sm:$0xf]
    %v437 = vld [vmem:[%s430 + $0x18] sm:$0xf]
    %v438 = vld [vmem:[%s430 + $0x1c] sm:$0xf]
    %v447 = vunpack.c.l.b16 %v431
    %v448 = vunpack.c.l.b16 %v432
    %v449 = vunpack.c.l.b16 %v433
    %v450 = vunpack.c.l.b16 %v434
    %v451 = vunpack.c.l.b16 %v435
    %v452 = vunpack.c.l.b16 %v436
    %v453 = vunpack.c.l.b16 %v437
    %v454 = vunpack.c.l.b16 %v438
    %v455 = vpack.c.b16 %v448, %v447
    %v456 = vpack.c.b16 %v450, %v449
    %v457 = vpack.c.b16 %v452, %v451
    %v458 = vpack.c.b16 %v454, %v453
    %459 = vrot.lane.b32.xlu0 %v170, 32
    %v460 = vpop.permute.xlu0 %459
    %461 = vrot.lane.b32.xlu0 %v171, 32
    %v462 = vpop.permute.xlu0 %461
    %463 = vrot.lane.b32.xlu0 %v172, 32
    %v464 = vpop.permute.xlu0 %463
    %465 = vrot.lane.b32.xlu0 %v173, 32
    %v466 = vpop.permute.xlu0 %465
    %v472 = vsel %vm218, %v455, 0
    %v475 = vsel %vm218, %v456, 0
    %v478 = vsel %vm218, %v457, 0
    %v481 = vsel %vm218, %v458, 0
    %483 = vmatprep.subr.bf16.mxu0 0
    %484 = vmatpush1.bf16.msra.mxu0 0
    %485 = vmatprep.subr.bf16.mxu0 0
    %486 = vmatpush1.bf16.msra.mxu0 0
    %487 = vmatprep.subr.bf16.mxu0 0
    %488 = vmatpush1.bf16.msra.mxu0 0
    %489 = vmatprep.subr.bf16.mxu0 0
    %490 = vmatpush1.bf16.msra.mxu0 0
    %491 = vmatprep.subr.bf16.mxu0 0
    %492 = vmatpush1.bf16.msra.mxu0 %v466
    %493 = vmatprep.subr.bf16.mxu0 0
    %494 = vmatpush1.bf16.msra.mxu0 %v464
    %495 = vmatprep.subr.bf16.mxu0 0
    %496 = vmatpush1.bf16.msra.mxu0 %v462
    %497 = vmatprep.subr.bf16.mxu0 0
    %498 = vmatpush1.bf16.msra.mxu0 %v460
    %499 = vmatprep.subr.bf16.mxu0 0
    %500 = vmatpush2.bf16.msra.mxu0 0
    %501 = vmatprep.subr.bf16.mxu0 0
    %502 = vmatpush2.bf16.msra.mxu0 0
    %503 = vmatprep.subr.bf16.mxu0 0
    %504 = vmatpush2.bf16.msra.mxu0 0
    %505 = vmatprep.subr.bf16.mxu0 0
    %506 = vmatpush2.bf16.msra.mxu0 0
    %507 = vmatprep.subr.bf16.mxu0 0
    %508 = vmatpush2.bf16.msra.mxu0 0
    %509 = vmatprep.subr.bf16.mxu0 0
    %510 = vmatpush2.bf16.msra.mxu0 0
    %511 = vmatprep.subr.bf16.mxu0 0
    %512 = vmatpush2.bf16.msra.mxu0 0
    %513 = vmatprep.subr.bf16.mxu0 0
    %514 = vmatpush2.bf16.msra.mxu0 0
    %515 = vmatprep.mubr.bf16.mxu0 0
    %516 = vmatmul.mubr.bf16.gmra.mxu0 %v472
    %v517 = vpop.f32.mrf.mxu0
    %v518 = vadd.f32 0.0, %v517
    %v519 = vpop.f32.mrf.mxu0
    %v520 = vpop.f32.mrf.mxu0
    %v521 = vadd.f32 0.0, %v520
    %v522 = vpop.f32.mrf.mxu0
    %523 = vmatprep.mubr.bf16.mxu0 0
    %524 = vmatmul.mubr.bf16.gmra.mxu0 %v475
    %v525 = vpop.f32.mrf.mxu0
    %v526 = vadd.f32 0.0, %v525
    %v527 = vpop.f32.mrf.mxu0
    %v528 = vpop.f32.mrf.mxu0
    %v529 = vadd.f32 0.0, %v528
    %v530 = vpop.f32.mrf.mxu0
    %531 = vmatprep.mubr.bf16.mxu0 0
    %532 = vmatmul.mubr.bf16.gmra.mxu0 %v478
    %v533 = vpop.f32.mrf.mxu0
    %v534 = vadd.f32 0.0, %v533
    %v535 = vpop.f32.mrf.mxu0
    %v536 = vpop.f32.mrf.mxu0
    %v537 = vadd.f32 0.0, %v536
    %v538 = vpop.f32.mrf.mxu0
    %539 = vmatprep.mubr.bf16.mxu0 0
    %540 = vmatmul.mubr.bf16.gmra.mxu0 %v481
    %v541 = vpop.f32.mrf.mxu0
    %v542 = vadd.f32 0.0, %v541
    %v543 = vpop.f32.mrf.mxu0
    %v544 = vpop.f32.mrf.mxu0
    %v545 = vadd.f32 0.0, %v544
    %v546 = vpop.f32.mrf.mxu0
    %547 = vdwg.mxu0
    %v548 = vadd.f32 %v422, %v518
    %v549 = vadd.f32 %v423, %v521
    %v550 = vadd.f32 %v424, %v526
    %v551 = vadd.f32 %v425, %v529
    %v552 = vadd.f32 %v426, %v534
    %v553 = vadd.f32 %v427, %v537
    %v554 = vadd.f32 %v428, %v542
    %v555 = vadd.f32 %v429, %v545
    %v556 = vxor.u32 %v548, 2147483648
    %v557 = vxor.u32 %v549, 2147483648
    %v558 = vxor.u32 %v550, 2147483648
    %v559 = vxor.u32 %v551, 2147483648
    %v560 = vxor.u32 %v552, 2147483648
    %v561 = vxor.u32 %v553, 2147483648
    %v562 = vxor.u32 %v554, 2147483648
    %v563 = vxor.u32 %v555, 2147483648
    %v564 = vmul.f32 %v556, 1.442695
    %v565 = vpow.pop %v564
    %v566 = vmul.f32 %v557, 1.442695
    %v567 = vpow.pop %v566
    %v568 = vmul.f32 %v558, 1.442695
    %v569 = vpow.pop %v568
    %v570 = vmul.f32 %v559, 1.442695
    %v571 = vpow.pop %v570
    %v572 = vmul.f32 %v560, 1.442695
    %v573 = vpow.pop %v572
    %v574 = vmul.f32 %v561, 1.442695
    %v575 = vpow.pop %v574
    %v576 = vmul.f32 %v562, 1.442695
    %v577 = vpow.pop %v576
    %v578 = vmul.f32 %v563, 1.442695
    %v579 = vpow.pop %v578
    %v580 = vadd.f32 %v565, 1.0
    %v581 = vadd.f32 %v567, 1.0
    %v582 = vadd.f32 %v569, 1.0
    %v583 = vadd.f32 %v571, 1.0
    %v584 = vadd.f32 %v573, 1.0
    %v585 = vadd.f32 %v575, 1.0
    %v586 = vadd.f32 %v577, 1.0
    %v587 = vadd.f32 %v579, 1.0
    %v588 = vrcp.pop %v580
    %v589 = vmul.f32 1.0, %v588
    %v590 = vrcp.pop %v581
    %v591 = vmul.f32 1.0, %v590
    %v592 = vrcp.pop %v582
    %v593 = vmul.f32 1.0, %v592
    %v594 = vrcp.pop %v583
    %v595 = vmul.f32 1.0, %v594
    %v596 = vrcp.pop %v584
    %v597 = vmul.f32 1.0, %v596
    %v598 = vrcp.pop %v585
    %v599 = vmul.f32 1.0, %v598
    %v600 = vrcp.pop %v586
    %v601 = vmul.f32 1.0, %v600
    %v602 = vrcp.pop %v587
    %v603 = vmul.f32 1.0, %v602
    %v604 = vmul.f32 %v548, %v589
    %v605 = vmul.f32 %v549, %v591
    %v606 = vmul.f32 %v550, %v593
    %v607 = vmul.f32 %v551, %v595
    %v608 = vmul.f32 %v552, %v597
    %v609 = vmul.f32 %v553, %v599
    %v610 = vmul.f32 %v554, %v601
    %v611 = vmul.f32 %v555, %v603
    %s612 = scalar_lea.vmem %s0, 32
    %v613 = vld [vmem:[%s612] sm:$0xf]
    %v614 = vld [vmem:[%s612 + $0x4] sm:$0xf]
    %v615 = vld [vmem:[%s612 + $0x8] sm:$0xf]
    %v616 = vld [vmem:[%s612 + $0xc] sm:$0xf]
    %v617 = vld [vmem:[%s612 + $0x10] sm:$0xf]
    %v618 = vld [vmem:[%s612 + $0x14] sm:$0xf]
    %v619 = vld [vmem:[%s612 + $0x18] sm:$0xf]
    %v620 = vld [vmem:[%s612 + $0x1c] sm:$0xf]
    %s621 = scalar_lea.vmem %s1, 16
    %v622 = vld [vmem:[%s621] sm:$0xf]
    %v623 = vld [vmem:[%s621 + $0x4] sm:$0xf]
    %v624 = vld [vmem:[%s621 + $0x8] sm:$0xf]
    %v625 = vld [vmem:[%s621 + $0xc] sm:$0xf]
    %v634 = vunpack.c.l.b16 %v613
    %v635 = vunpack.c.l.b16 %v614
    %v636 = vunpack.c.l.b16 %v615
    %v637 = vunpack.c.l.b16 %v616
    %v638 = vunpack.c.l.b16 %v617
    %v639 = vunpack.c.l.b16 %v618
    %v640 = vunpack.c.l.b16 %v619
    %v641 = vunpack.c.l.b16 %v620
    %v642 = vpack.c.b16 %v635, %v634
    %v643 = vpack.c.b16 %v637, %v636
    %v644 = vpack.c.b16 %v639, %v638
    %v645 = vpack.c.b16 %v641, %v640
    %v650 = vunpack.c.l.b16 %v622
    %v651 = vunpack.c.l.b16 %v623
    %v652 = vunpack.c.l.b16 %v624
    %v653 = vunpack.c.l.b16 %v625
    %v654 = vpack.c.b16 %v651, %v650
    %v655 = vpack.c.b16 %v653, %v652
    %v659 = vsel %vm77, %v642, 0
    %v662 = vsel %vm77, %v643, 0
    %v665 = vsel %vm77, %v644, 0
    %v668 = vsel %vm77, %v645, 0
    %670 = vmatprep.subr.bf16.mxu0 0
    %671 = vmatpush1.bf16.msra.mxu0 0
    %672 = vmatprep.subr.bf16.mxu0 0
    %673 = vmatpush1.bf16.msra.mxu0 0
    %674 = vmatprep.subr.bf16.mxu0 0
    %675 = vmatpush1.bf16.msra.mxu0 0
    %676 = vmatprep.subr.bf16.mxu0 0
    %677 = vmatpush1.bf16.msra.mxu0 0
    %678 = vmatprep.subr.bf16.mxu0 0
    %679 = vmatpush1.bf16.msra.mxu0 0
    %680 = vmatprep.subr.bf16.mxu0 0
    %681 = vmatpush1.bf16.msra.mxu0 0
    %682 = vmatprep.subr.bf16.mxu0 0
    %683 = vmatpush1.bf16.msra.mxu0 %v655
    %684 = vmatprep.subr.bf16.mxu0 0
    %685 = vmatpush1.bf16.msra.mxu0 %v654
    %686 = vmatprep.subr.bf16.mxu0 0
    %687 = vmatpush2.bf16.msra.mxu0 0
    %688 = vmatprep.subr.bf16.mxu0 0
    %689 = vmatpush2.bf16.msra.mxu0 0
    %690 = vmatprep.subr.bf16.mxu0 0
    %691 = vmatpush2.bf16.msra.mxu0 0
    %692 = vmatprep.subr.bf16.mxu0 0
    %693 = vmatpush2.bf16.msra.mxu0 0
    %694 = vmatprep.subr.bf16.mxu0 0
    %695 = vmatpush2.bf16.msra.mxu0 0
    %696 = vmatprep.subr.bf16.mxu0 0
    %697 = vmatpush2.bf16.msra.mxu0 0
    %698 = vmatprep.subr.bf16.mxu0 0
    %699 = vmatpush2.bf16.msra.mxu0 0
    %700 = vmatprep.subr.bf16.mxu0 0
    %701 = vmatpush2.bf16.msra.mxu0 0
    %702 = vmatprep.mubr.bf16.mxu0 0
    %703 = vmatmul.mubr.bf16.gmra.mxu0 %v659
    %v704 = vpop.f32.mrf.mxu0
    %v705 = vadd.f32 0.0, %v704
    %v706 = vpop.f32.mrf.mxu0
    %v707 = vpop.f32.mrf.mxu0
    %v708 = vadd.f32 0.0, %v707
    %v709 = vpop.f32.mrf.mxu0
    %710 = vmatprep.mubr.bf16.mxu0 0
    %711 = vmatmul.mubr.bf16.gmra.mxu0 %v662
    %v712 = vpop.f32.mrf.mxu0
    %v713 = vadd.f32 0.0, %v712
    %v714 = vpop.f32.mrf.mxu0
    %v715 = vpop.f32.mrf.mxu0
    %v716 = vadd.f32 0.0, %v715
    %v717 = vpop.f32.mrf.mxu0
    %718 = vmatprep.mubr.bf16.mxu0 0
    %719 = vmatmul.mubr.bf16.gmra.mxu0 %v665
    %v720 = vpop.f32.mrf.mxu0
    %v721 = vadd.f32 0.0, %v720
    %v722 = vpop.f32.mrf.mxu0
    %v723 = vpop.f32.mrf.mxu0
    %v724 = vadd.f32 0.0, %v723
    %v725 = vpop.f32.mrf.mxu0
    %726 = vmatprep.mubr.bf16.mxu0 0
    %727 = vmatmul.mubr.bf16.gmra.mxu0 %v668
    %v728 = vpop.f32.mrf.mxu0
    %v729 = vadd.f32 0.0, %v728
    %v730 = vpop.f32.mrf.mxu0
    %v731 = vpop.f32.mrf.mxu0
    %v732 = vadd.f32 0.0, %v731
    %v733 = vpop.f32.mrf.mxu0
    %734 = vdwg.mxu0
    %s735 = scalar_lea.vmem %s3, 1
    %v736 = vld [vmem:[%s735] sm:$0x1]
    %v738 = vlaneseq
    %v739 = vshrl.u32 %v738, 7
    %v740 = vsub.s32 0, %v739
    %v741 = vrot.slane %v736, %v740
    %v743 = vadd.f32 %v705, %v741
    %v744 = vadd.f32 %v708, %v741
    %v745 = vadd.f32 %v713, %v741
    %v746 = vadd.f32 %v716, %v741
    %v747 = vadd.f32 %v721, %v741
    %v748 = vadd.f32 %v724, %v741
    %v749 = vadd.f32 %v729, %v741
    %v750 = vadd.f32 %v732, %v741
    %v751 = vpack.c.bf16 %v708, %v705
    %v752 = vpack.c.bf16 %v716, %v713
    %v753 = vpack.c.bf16 %v724, %v721
    %v754 = vpack.c.bf16 %v732, %v729
    %s755 = scalar_lea.vmem [#allocation2], 96
    %v756 = vld [vmem:[%s755] sm:$0xf]
    %v757 = vld [vmem:[%s755 + $0x4] sm:$0xf]
    %v758 = vld [vmem:[%s755 + $0x8] sm:$0xf]
    %v759 = vld [vmem:[%s755 + $0xc] sm:$0xf]
    %v760 = vld [vmem:[%s755 + $0x10] sm:$0xf]
    %v761 = vld [vmem:[%s755 + $0x14] sm:$0xf]
    %v762 = vld [vmem:[%s755 + $0x18] sm:$0xf]
    %v763 = vld [vmem:[%s755 + $0x1c] sm:$0xf]
    %v772 = vunpack.c.l.b16 %v756
    %v773 = vunpack.c.l.b16 %v757
    %v774 = vunpack.c.l.b16 %v758
    %v775 = vunpack.c.l.b16 %v759
    %v776 = vunpack.c.l.b16 %v760
    %v777 = vunpack.c.l.b16 %v761
    %v778 = vunpack.c.l.b16 %v762
    %v779 = vunpack.c.l.b16 %v763
    %v780 = vpack.c.b16 %v773, %v772
    %v781 = vpack.c.b16 %v775, %v774
    %v782 = vpack.c.b16 %v777, %v776
    %v783 = vpack.c.b16 %v779, %v778
    %788 = vrot.lane.b32.xlu0 %v751, 96
    %v789 = vpop.permute.xlu0 %788
    %790 = vrot.lane.b32.xlu0 %v752, 96
    %v791 = vpop.permute.xlu0 %790
    %792 = vrot.lane.b32.xlu0 %v753, 96
    %v793 = vpop.permute.xlu0 %792
    %794 = vrot.lane.b32.xlu0 %v754, 96
    %v795 = vpop.permute.xlu0 %794
    %v801 = vsel %vm218, %v780, 0
    %v804 = vsel %vm218, %v781, 0
    %v807 = vsel %vm218, %v782, 0
    %v810 = vsel %vm218, %v783, 0
    %812 = vmatprep.subr.bf16.mxu0 0
    %813 = vmatpush1.bf16.msra.mxu0 0
    %814 = vmatprep.subr.bf16.mxu0 0
    %815 = vmatpush1.bf16.msra.mxu0 0
    %816 = vmatprep.subr.bf16.mxu0 0
    %817 = vmatpush1.bf16.msra.mxu0 0
    %818 = vmatprep.subr.bf16.mxu0 0
    %819 = vmatpush1.bf16.msra.mxu0 0
    %820 = vmatprep.subr.bf16.mxu0 0
    %821 = vmatpush1.bf16.msra.mxu0 %v795
    %822 = vmatprep.subr.bf16.mxu0 0
    %823 = vmatpush1.bf16.msra.mxu0 %v793
    %824 = vmatprep.subr.bf16.mxu0 0
    %825 = vmatpush1.bf16.msra.mxu0 %v791
    %826 = vmatprep.subr.bf16.mxu0 0
    %827 = vmatpush1.bf16.msra.mxu0 %v789
    %828 = vmatprep.subr.bf16.mxu0 0
    %829 = vmatpush2.bf16.msra.mxu0 0
    %830 = vmatprep.subr.bf16.mxu0 0
    %831 = vmatpush2.bf16.msra.mxu0 0
    %832 = vmatprep.subr.bf16.mxu0 0
    %833 = vmatpush2.bf16.msra.mxu0 0
    %834 = vmatprep.subr.bf16.mxu0 0
    %835 = vmatpush2.bf16.msra.mxu0 0
    %836 = vmatprep.subr.bf16.mxu0 0
    %837 = vmatpush2.bf16.msra.mxu0 0
    %838 = vmatprep.subr.bf16.mxu0 0
    %839 = vmatpush2.bf16.msra.mxu0 0
    %840 = vmatprep.subr.bf16.mxu0 0
    %841 = vmatpush2.bf16.msra.mxu0 0
    %842 = vmatprep.subr.bf16.mxu0 0
    %843 = vmatpush2.bf16.msra.mxu0 0
    %844 = vmatprep.mubr.bf16.mxu0 0
    %845 = vmatmul.mubr.bf16.gmra.mxu0 %v801
    %v846 = vpop.f32.mrf.mxu0
    %v847 = vadd.f32 0.0, %v846
    %v848 = vpop.f32.mrf.mxu0
    %v849 = vpop.f32.mrf.mxu0
    %v850 = vadd.f32 0.0, %v849
    %v851 = vpop.f32.mrf.mxu0
    %852 = vmatprep.mubr.bf16.mxu0 0
    %853 = vmatmul.mubr.bf16.gmra.mxu0 %v804
    %v854 = vpop.f32.mrf.mxu0
    %v855 = vadd.f32 0.0, %v854
    %v856 = vpop.f32.mrf.mxu0
    %v857 = vpop.f32.mrf.mxu0
    %v858 = vadd.f32 0.0, %v857
    %v859 = vpop.f32.mrf.mxu0
    %860 = vmatprep.mubr.bf16.mxu0 0
    %861 = vmatmul.mubr.bf16.gmra.mxu0 %v807
    %v862 = vpop.f32.mrf.mxu0
    %v863 = vadd.f32 0.0, %v862
    %v864 = vpop.f32.mrf.mxu0
    %v865 = vpop.f32.mrf.mxu0
    %v866 = vadd.f32 0.0, %v865
    %v867 = vpop.f32.mrf.mxu0
    %868 = vmatprep.mubr.bf16.mxu0 0
    %869 = vmatmul.mubr.bf16.gmra.mxu0 %v810
    %v870 = vpop.f32.mrf.mxu0
    %v871 = vadd.f32 0.0, %v870
    %v872 = vpop.f32.mrf.mxu0
    %v873 = vpop.f32.mrf.mxu0
    %v874 = vadd.f32 0.0, %v873
    %v875 = vpop.f32.mrf.mxu0
    %876 = vdwg.mxu0
    %v877 = vadd.f32 %v743, %v847
    %v878 = vadd.f32 %v744, %v850
    %v879 = vadd.f32 %v745, %v855
    %v880 = vadd.f32 %v746, %v858
    %v881 = vadd.f32 %v747, %v863
    %v882 = vadd.f32 %v748, %v866
    %v883 = vadd.f32 %v749, %v871
    %v884 = vadd.f32 %v750, %v874
    %s885 = scalar_lea.vmem [#allocation2], 128
    %v886 = vld [vmem:[%s885] sm:$0xf]
    %v887 = vld [vmem:[%s885 + $0x4] sm:$0xf]
    %v888 = vld [vmem:[%s885 + $0x8] sm:$0xf]
    %v889 = vld [vmem:[%s885 + $0xc] sm:$0xf]
    %v890 = vld [vmem:[%s885 + $0x10] sm:$0xf]
    %v891 = vld [vmem:[%s885 + $0x14] sm:$0xf]
    %v892 = vld [vmem:[%s885 + $0x18] sm:$0xf]
    %v893 = vld [vmem:[%s885 + $0x1c] sm:$0xf]
    %v902 = vunpack.c.l.b16 %v886
    %v903 = vunpack.c.l.b16 %v887
    %v904 = vunpack.c.l.b16 %v888
    %v905 = vunpack.c.l.b16 %v889
    %v906 = vunpack.c.l.b16 %v890
    %v907 = vunpack.c.l.b16 %v891
    %v908 = vunpack.c.l.b16 %v892
    %v909 = vunpack.c.l.b16 %v893
    %v910 = vpack.c.b16 %v903, %v902
    %v911 = vpack.c.b16 %v905, %v904
    %v912 = vpack.c.b16 %v907, %v906
    %v913 = vpack.c.b16 %v909, %v908
    %914 = vrot.lane.b32.xlu0 %v751, 64
    %v915 = vpop.permute.xlu0 %914
    %916 = vrot.lane.b32.xlu0 %v752, 64
    %v917 = vpop.permute.xlu0 %916
    %918 = vrot.lane.b32.xlu0 %v753, 64
    %v919 = vpop.permute.xlu0 %918
    %920 = vrot.lane.b32.xlu0 %v754, 64
    %v921 = vpop.permute.xlu0 %920
    %v927 = vsel %vm218, %v910, 0
    %v930 = vsel %vm218, %v911, 0
    %v933 = vsel %vm218, %v912, 0
    %v936 = vsel %vm218, %v913, 0
    %938 = vmatprep.subr.bf16.mxu0 0
    %939 = vmatpush1.bf16.msra.mxu0 0
    %940 = vmatprep.subr.bf16.mxu0 0
    %941 = vmatpush1.bf16.msra.mxu0 0
    %942 = vmatprep.subr.bf16.mxu0 0
    %943 = vmatpush1.bf16.msra.mxu0 0
    %944 = vmatprep.subr.bf16.mxu0 0
    %945 = vmatpush1.bf16.msra.mxu0 0
    %946 = vmatprep.subr.bf16.mxu0 0
    %947 = vmatpush1.bf16.msra.mxu0 %v921
    %948 = vmatprep.subr.bf16.mxu0 0
    %949 = vmatpush1.bf16.msra.mxu0 %v919
    %950 = vmatprep.subr.bf16.mxu0 0
    %951 = vmatpush1.bf16.msra.mxu0 %v917
    %952 = vmatprep.subr.bf16.mxu0 0
    %953 = vmatpush1.bf16.msra.mxu0 %v915
    %954 = vmatprep.subr.bf16.mxu0 0
    %955 = vmatpush2.bf16.msra.mxu0 0
    %956 = vmatprep.subr.bf16.mxu0 0
    %957 = vmatpush2.bf16.msra.mxu0 0
    %958 = vmatprep.subr.bf16.mxu0 0
    %959 = vmatpush2.bf16.msra.mxu0 0
    %960 = vmatprep.subr.bf16.mxu0 0
    %961 = vmatpush2.bf16.msra.mxu0 0
    %962 = vmatprep.subr.bf16.mxu0 0
    %963 = vmatpush2.bf16.msra.mxu0 0
    %964 = vmatprep.subr.bf16.mxu0 0
    %965 = vmatpush2.bf16.msra.mxu0 0
    %966 = vmatprep.subr.bf16.mxu0 0
    %967 = vmatpush2.bf16.msra.mxu0 0
    %968 = vmatprep.subr.bf16.mxu0 0
    %969 = vmatpush2.bf16.msra.mxu0 0
    %970 = vmatprep.mubr.bf16.mxu0 0
    %971 = vmatmul.mubr.bf16.gmra.mxu0 %v927
    %v972 = vpop.f32.mrf.mxu0
    %v973 = vadd.f32 0.0, %v972
    %v974 = vpop.f32.mrf.mxu0
    %v975 = vpop.f32.mrf.mxu0
    %v976 = vadd.f32 0.0, %v975
    %v977 = vpop.f32.mrf.mxu0
    %978 = vmatprep.mubr.bf16.mxu0 0
    %979 = vmatmul.mubr.bf16.gmra.mxu0 %v930
    %v980 = vpop.f32.mrf.mxu0
    %v981 = vadd.f32 0.0, %v980
    %v982 = vpop.f32.mrf.mxu0
    %v983 = vpop.f32.mrf.mxu0
    %v984 = vadd.f32 0.0, %v983
    %v985 = vpop.f32.mrf.mxu0
    %986 = vmatprep.mubr.bf16.mxu0 0
    %987 = vmatmul.mubr.bf16.gmra.mxu0 %v933
    %v988 = vpop.f32.mrf.mxu0
    %v989 = vadd.f32 0.0, %v988
    %v990 = vpop.f32.mrf.mxu0
    %v991 = vpop.f32.mrf.mxu0
    %v992 = vadd.f32 0.0, %v991
    %v993 = vpop.f32.mrf.mxu0
    %994 = vmatprep.mubr.bf16.mxu0 0
    %995 = vmatmul.mubr.bf16.gmra.mxu0 %v936
    %v996 = vpop.f32.mrf.mxu0
    %v997 = vadd.f32 0.0, %v996
    %v998 = vpop.f32.mrf.mxu0
    %v999 = vpop.f32.mrf.mxu0
    %v1000 = vadd.f32 0.0, %v999
    %v1001 = vpop.f32.mrf.mxu0
    %1002 = vdwg.mxu0
    %v1003 = vadd.f32 %v877, %v973
    %v1004 = vadd.f32 %v878, %v976
    %v1005 = vadd.f32 %v879, %v981
    %v1006 = vadd.f32 %v880, %v984
    %v1007 = vadd.f32 %v881, %v989
    %v1008 = vadd.f32 %v882, %v992
    %v1009 = vadd.f32 %v883, %v997
    %v1010 = vadd.f32 %v884, %v1000
    %v1011 = vxor.u32 %v1003, 2147483648
    %v1012 = vxor.u32 %v1004, 2147483648
    %v1013 = vxor.u32 %v1005, 2147483648
    %v1014 = vxor.u32 %v1006, 2147483648
    %v1015 = vxor.u32 %v1007, 2147483648
    %v1016 = vxor.u32 %v1008, 2147483648
    %v1017 = vxor.u32 %v1009, 2147483648
    %v1018 = vxor.u32 %v1010, 2147483648
    %v1019 = vmul.f32 %v1011, 1.442695
    %v1020 = vpow.pop %v1019
    %v1021 = vmul.f32 %v1012, 1.442695
    %v1022 = vpow.pop %v1021
    %v1023 = vmul.f32 %v1013, 1.442695
    %v1024 = vpow.pop %v1023
    %v1025 = vmul.f32 %v1014, 1.442695
    %v1026 = vpow.pop %v1025
    %v1027 = vmul.f32 %v1015, 1.442695
    %v1028 = vpow.pop %v1027
    %v1029 = vmul.f32 %v1016, 1.442695
    %v1030 = vpow.pop %v1029
    %v1031 = vmul.f32 %v1017, 1.442695
    %v1032 = vpow.pop %v1031
    %v1033 = vmul.f32 %v1018, 1.442695
    %v1034 = vpow.pop %v1033
    %v1035 = vadd.f32 %v1020, 1.0
    %v1036 = vadd.f32 %v1022, 1.0
    %v1037 = vadd.f32 %v1024, 1.0
    %v1038 = vadd.f32 %v1026, 1.0
    %v1039 = vadd.f32 %v1028, 1.0
    %v1040 = vadd.f32 %v1030, 1.0
    %v1041 = vadd.f32 %v1032, 1.0
    %v1042 = vadd.f32 %v1034, 1.0
    %v1043 = vrcp.pop %v1035
    %v1044 = vmul.f32 1.0, %v1043
    %v1045 = vrcp.pop %v1036
    %v1046 = vmul.f32 1.0, %v1045
    %v1047 = vrcp.pop %v1037
    %v1048 = vmul.f32 1.0, %v1047
    %v1049 = vrcp.pop %v1038
    %v1050 = vmul.f32 1.0, %v1049
    %v1051 = vrcp.pop %v1039
    %v1052 = vmul.f32 1.0, %v1051
    %v1053 = vrcp.pop %v1040
    %v1054 = vmul.f32 1.0, %v1053
    %v1055 = vrcp.pop %v1041
    %v1056 = vmul.f32 1.0, %v1055
    %v1057 = vrcp.pop %v1042
    %v1058 = vmul.f32 1.0, %v1057
    %v1059 = vmul.f32 %v1003, %v1044
    %v1060 = vmul.f32 %v1004, %v1046
    %v1061 = vmul.f32 %v1005, %v1048
    %v1062 = vmul.f32 %v1006, %v1050
    %v1063 = vmul.f32 %v1007, %v1052
    %v1064 = vmul.f32 %v1008, %v1054
    %v1065 = vmul.f32 %v1009, %v1056
    %v1066 = vmul.f32 %v1010, %v1058
    %s1067 = scalar_lea.vmem %s0, 64
    %v1068 = vld [vmem:[%s1067] sm:$0xf]
    %v1069 = vld [vmem:[%s1067 + $0x4] sm:$0xf]
    %v1070 = vld [vmem:[%s1067 + $0x8] sm:$0xf]
    %v1071 = vld [vmem:[%s1067 + $0xc] sm:$0xf]
    %v1072 = vld [vmem:[%s1067 + $0x10] sm:$0xf]
    %v1073 = vld [vmem:[%s1067 + $0x14] sm:$0xf]
    %v1074 = vld [vmem:[%s1067 + $0x18] sm:$0xf]
    %v1075 = vld [vmem:[%s1067 + $0x1c] sm:$0xf]
    %s1076 = scalar_lea.vmem %s1, 32
    %v1077 = vld [vmem:[%s1076] sm:$0xf]
    %v1078 = vld [vmem:[%s1076 + $0x4] sm:$0xf]
    %v1079 = vld [vmem:[%s1076 + $0x8] sm:$0xf]
    %v1080 = vld [vmem:[%s1076 + $0xc] sm:$0xf]
    %v1089 = vunpack.c.l.b16 %v1068
    %v1090 = vunpack.c.l.b16 %v1069
    %v1091 = vunpack.c.l.b16 %v1070
    %v1092 = vunpack.c.l.b16 %v1071
    %v1093 = vunpack.c.l.b16 %v1072
    %v1094 = vunpack.c.l.b16 %v1073
    %v1095 = vunpack.c.l.b16 %v1074
    %v1096 = vunpack.c.l.b16 %v1075
    %v1097 = vpack.c.b16 %v1090, %v1089
    %v1098 = vpack.c.b16 %v1092, %v1091
    %v1099 = vpack.c.b16 %v1094, %v1093
    %v1100 = vpack.c.b16 %v1096, %v1095
    %v1105 = vunpack.c.l.b16 %v1077
    %v1106 = vunpack.c.l.b16 %v1078
    %v1107 = vunpack.c.l.b16 %v1079
    %v1108 = vunpack.c.l.b16 %v1080
    %v1109 = vpack.c.b16 %v1106, %v1105
    %v1110 = vpack.c.b16 %v1108, %v1107
    %v1114 = vsel %vm77, %v1097, 0
    %v1117 = vsel %vm77, %v1098, 0
    %v1120 = vsel %vm77, %v1099, 0
    %v1123 = vsel %vm77, %v1100, 0
    %1125 = vmatprep.subr.bf16.mxu0 0
    %1126 = vmatpush1.bf16.msra.mxu0 0
    %1127 = vmatprep.subr.bf16.mxu0 0
    %1128 = vmatpush1.bf16.msra.mxu0 0
    %1129 = vmatprep.subr.bf16.mxu0 0
    %1130 = vmatpush1.bf16.msra.mxu0 0
    %1131 = vmatprep.subr.bf16.mxu0 0
    %1132 = vmatpush1.bf16.msra.mxu0 0
    %1133 = vmatprep.subr.bf16.mxu0 0
    %1134 = vmatpush1.bf16.msra.mxu0 0
    %1135 = vmatprep.subr.bf16.mxu0 0
    %1136 = vmatpush1.bf16.msra.mxu0 0
    %1137 = vmatprep.subr.bf16.mxu0 0
    %1138 = vmatpush1.bf16.msra.mxu0 %v1110
    %1139 = vmatprep.subr.bf16.mxu0 0
    %1140 = vmatpush1.bf16.msra.mxu0 %v1109
    %1141 = vmatprep.subr.bf16.mxu0 0
    %1142 = vmatpush2.bf16.msra.mxu0 0
    %1143 = vmatprep.subr.bf16.mxu0 0
    %1144 = vmatpush2.bf16.msra.mxu0 0
    %1145 = vmatprep.subr.bf16.mxu0 0
    %1146 = vmatpush2.bf16.msra.mxu0 0
    %1147 = vmatprep.subr.bf16.mxu0 0
    %1148 = vmatpush2.bf16.msra.mxu0 0
    %1149 = vmatprep.subr.bf16.mxu0 0
    %1150 = vmatpush2.bf16.msra.mxu0 0
    %1151 = vmatprep.subr.bf16.mxu0 0
    %1152 = vmatpush2.bf16.msra.mxu0 0
    %1153 = vmatprep.subr.bf16.mxu0 0
    %1154 = vmatpush2.bf16.msra.mxu0 0
    %1155 = vmatprep.subr.bf16.mxu0 0
    %1156 = vmatpush2.bf16.msra.mxu0 0
    %1157 = vmatprep.mubr.bf16.mxu0 0
    %1158 = vmatmul.mubr.bf16.gmra.mxu0 %v1114
    %v1159 = vpop.f32.mrf.mxu0
    %v1160 = vadd.f32 0.0, %v1159
    %v1161 = vpop.f32.mrf.mxu0
    %v1162 = vpop.f32.mrf.mxu0
    %v1163 = vadd.f32 0.0, %v1162
    %v1164 = vpop.f32.mrf.mxu0
    %1165 = vmatprep.mubr.bf16.mxu0 0
    %1166 = vmatmul.mubr.bf16.gmra.mxu0 %v1117
    %v1167 = vpop.f32.mrf.mxu0
    %v1168 = vadd.f32 0.0, %v1167
    %v1169 = vpop.f32.mrf.mxu0
    %v1170 = vpop.f32.mrf.mxu0
    %v1171 = vadd.f32 0.0, %v1170
    %v1172 = vpop.f32.mrf.mxu0
    %1173 = vmatprep.mubr.bf16.mxu0 0
    %1174 = vmatmul.mubr.bf16.gmra.mxu0 %v1120
    %v1175 = vpop.f32.mrf.mxu0
    %v1176 = vadd.f32 0.0, %v1175
    %v1177 = vpop.f32.mrf.mxu0
    %v1178 = vpop.f32.mrf.mxu0
    %v1179 = vadd.f32 0.0, %v1178
    %v1180 = vpop.f32.mrf.mxu0
    %1181 = vmatprep.mubr.bf16.mxu0 0
    %1182 = vmatmul.mubr.bf16.gmra.mxu0 %v1123
    %v1183 = vpop.f32.mrf.mxu0
    %v1184 = vadd.f32 0.0, %v1183
    %v1185 = vpop.f32.mrf.mxu0
    %v1186 = vpop.f32.mrf.mxu0
    %v1187 = vadd.f32 0.0, %v1186
    %v1188 = vpop.f32.mrf.mxu0
    %1189 = vdwg.mxu0
    %s1190 = scalar_lea.vmem %s3, 2
    %v1191 = vld [vmem:[%s1190] sm:$0x1]
    %v1193 = vlaneseq
    %v1194 = vshrl.u32 %v1193, 7
    %v1195 = vsub.s32 0, %v1194
    %v1196 = vrot.slane %v1191, %v1195
    %v1198 = vadd.f32 %v1160, %v1196
    %v1199 = vadd.f32 %v1163, %v1196
    %v1200 = vadd.f32 %v1168, %v1196
    %v1201 = vadd.f32 %v1171, %v1196
    %v1202 = vadd.f32 %v1176, %v1196
    %v1203 = vadd.f32 %v1179, %v1196
    %v1204 = vadd.f32 %v1184, %v1196
    %v1205 = vadd.f32 %v1187, %v1196
    %v1206 = vpack.c.bf16 %v1163, %v1160
    %v1207 = vpack.c.bf16 %v1171, %v1168
    %v1208 = vpack.c.bf16 %v1179, %v1176
    %v1209 = vpack.c.bf16 %v1187, %v1184
    %s1210 = scalar_lea.vmem [#allocation2], 160
    %v1211 = vld [vmem:[%s1210] sm:$0xf]
    %v1212 = vld [vmem:[%s1210 + $0x4] sm:$0xf]
    %v1213 = vld [vmem:[%s1210 + $0x8] sm:$0xf]
    %v1214 = vld [vmem:[%s1210 + $0xc] sm:$0xf]
    %v1215 = vld [vmem:[%s1210 + $0x10] sm:$0xf]
    %v1216 = vld [vmem:[%s1210 + $0x14] sm:$0xf]
    %v1217 = vld [vmem:[%s1210 + $0x18] sm:$0xf]
    %v1218 = vld [vmem:[%s1210 + $0x1c] sm:$0xf]
    %v1227 = vunpack.c.l.b16 %v1211
    %v1228 = vunpack.c.l.b16 %v1212
    %v1229 = vunpack.c.l.b16 %v1213
    %v1230 = vunpack.c.l.b16 %v1214
    %v1231 = vunpack.c.l.b16 %v1215
    %v1232 = vunpack.c.l.b16 %v1216
    %v1233 = vunpack.c.l.b16 %v1217
    %v1234 = vunpack.c.l.b16 %v1218
    %v1235 = vpack.c.b16 %v1228, %v1227
    %v1236 = vpack.c.b16 %v1230, %v1229
    %v1237 = vpack.c.b16 %v1232, %v1231
    %v1238 = vpack.c.b16 %v1234, %v1233
    %1243 = vrot.lane.b32.xlu0 %v1206, 96
    %v1244 = vpop.permute.xlu0 %1243
    %1245 = vrot.lane.b32.xlu0 %v1207, 96
    %v1246 = vpop.permute.xlu0 %1245
    %1247 = vrot.lane.b32.xlu0 %v1208, 96
    %v1248 = vpop.permute.xlu0 %1247
    %1249 = vrot.lane.b32.xlu0 %v1209, 96
    %v1250 = vpop.permute.xlu0 %1249
    %v1256 = vsel %vm218, %v1235, 0
    %v1259 = vsel %vm218, %v1236, 0
    %v1262 = vsel %vm218, %v1237, 0
    %v1265 = vsel %vm218, %v1238, 0
    %1267 = vmatprep.subr.bf16.mxu0 0
    %1268 = vmatpush1.bf16.msra.mxu0 0
    %1269 = vmatprep.subr.bf16.mxu0 0
    %1270 = vmatpush1.bf16.msra.mxu0 0
    %1271 = vmatprep.subr.bf16.mxu0 0
    %1272 = vmatpush1.bf16.msra.mxu0 0
    %1273 = vmatprep.subr.bf16.mxu0 0
    %1274 = vmatpush1.bf16.msra.mxu0 0
    %1275 = vmatprep.subr.bf16.mxu0 0
    %1276 = vmatpush1.bf16.msra.mxu0 %v1250
    %1277 = vmatprep.subr.bf16.mxu0 0
    %1278 = vmatpush1.bf16.msra.mxu0 %v1248
    %1279 = vmatprep.subr.bf16.mxu0 0
    %1280 = vmatpush1.bf16.msra.mxu0 %v1246
    %1281 = vmatprep.subr.bf16.mxu0 0
    %1282 = vmatpush1.bf16.msra.mxu0 %v1244
    %1283 = vmatprep.subr.bf16.mxu0 0
    %1284 = vmatpush2.bf16.msra.mxu0 0
    %1285 = vmatprep.subr.bf16.mxu0 0
    %1286 = vmatpush2.bf16.msra.mxu0 0
    %1287 = vmatprep.subr.bf16.mxu0 0
    %1288 = vmatpush2.bf16.msra.mxu0 0
    %1289 = vmatprep.subr.bf16.mxu0 0
    %1290 = vmatpush2.bf16.msra.mxu0 0
    %1291 = vmatprep.subr.bf16.mxu0 0
    %1292 = vmatpush2.bf16.msra.mxu0 0
    %1293 = vmatprep.subr.bf16.mxu0 0
    %1294 = vmatpush2.bf16.msra.mxu0 0
    %1295 = vmatprep.subr.bf16.mxu0 0
    %1296 = vmatpush2.bf16.msra.mxu0 0
    %1297 = vmatprep.subr.bf16.mxu0 0
    %1298 = vmatpush2.bf16.msra.mxu0 0
    %1299 = vmatprep.mubr.bf16.mxu0 0
    %1300 = vmatmul.mubr.bf16.gmra.mxu0 %v1256
    %v1301 = vpop.f32.mrf.mxu0
    %v1302 = vadd.f32 0.0, %v1301
    %v1303 = vpop.f32.mrf.mxu0
    %v1304 = vpop.f32.mrf.mxu0
    %v1305 = vadd.f32 0.0, %v1304
    %v1306 = vpop.f32.mrf.mxu0
    %1307 = vmatprep.mubr.bf16.mxu0 0
    %1308 = vmatmul.mubr.bf16.gmra.mxu0 %v1259
    %v1309 = vpop.f32.mrf.mxu0
    %v1310 = vadd.f32 0.0, %v1309
    %v1311 = vpop.f32.mrf.mxu0
    %v1312 = vpop.f32.mrf.mxu0
    %v1313 = vadd.f32 0.0, %v1312
    %v1314 = vpop.f32.mrf.mxu0
    %1315 = vmatprep.mubr.bf16.mxu0 0
    %1316 = vmatmul.mubr.bf16.gmra.mxu0 %v1262
    %v1317 = vpop.f32.mrf.mxu0
    %v1318 = vadd.f32 0.0, %v1317
    %v1319 = vpop.f32.mrf.mxu0
    %v1320 = vpop.f32.mrf.mxu0
    %v1321 = vadd.f32 0.0, %v1320
    %v1322 = vpop.f32.mrf.mxu0
    %1323 = vmatprep.mubr.bf16.mxu0 0
    %1324 = vmatmul.mubr.bf16.gmra.mxu0 %v1265
    %v1325 = vpop.f32.mrf.mxu0
    %v1326 = vadd.f32 0.0, %v1325
    %v1327 = vpop.f32.mrf.mxu0
    %v1328 = vpop.f32.mrf.mxu0
    %v1329 = vadd.f32 0.0, %v1328
    %v1330 = vpop.f32.mrf.mxu0
    %1331 = vdwg.mxu0
    %v1332 = vadd.f32 %v1198, %v1302
    %v1333 = vadd.f32 %v1199, %v1305
    %v1334 = vadd.f32 %v1200, %v1310
    %v1335 = vadd.f32 %v1201, %v1313
    %v1336 = vadd.f32 %v1202, %v1318
    %v1337 = vadd.f32 %v1203, %v1321
    %v1338 = vadd.f32 %v1204, %v1326
    %v1339 = vadd.f32 %v1205, %v1329
    %s1340 = scalar_lea.vmem [#allocation2], 192
    %v1341 = vld [vmem:[%s1340] sm:$0xf]
    %v1342 = vld [vmem:[%s1340 + $0x4] sm:$0xf]
    %v1343 = vld [vmem:[%s1340 + $0x8] sm:$0xf]
    %v1344 = vld [vmem:[%s1340 + $0xc] sm:$0xf]
    %v1345 = vld [vmem:[%s1340 + $0x10] sm:$0xf]
    %v1346 = vld [vmem:[%s1340 + $0x14] sm:$0xf]
    %v1347 = vld [vmem:[%s1340 + $0x18] sm:$0xf]
    %v1348 = vld [vmem:[%s1340 + $0x1c] sm:$0xf]
    %v1357 = vunpack.c.l.b16 %v1341
    %v1358 = vunpack.c.l.b16 %v1342
    %v1359 = vunpack.c.l.b16 %v1343
    %v1360 = vunpack.c.l.b16 %v1344
    %v1361 = vunpack.c.l.b16 %v1345
    %v1362 = vunpack.c.l.b16 %v1346
    %v1363 = vunpack.c.l.b16 %v1347
    %v1364 = vunpack.c.l.b16 %v1348
    %v1365 = vpack.c.b16 %v1358, %v1357
    %v1366 = vpack.c.b16 %v1360, %v1359
    %v1367 = vpack.c.b16 %v1362, %v1361
    %v1368 = vpack.c.b16 %v1364, %v1363
    %1369 = vrot.lane.b32.xlu0 %v1206, 64
    %v1370 = vpop.permute.xlu0 %1369
    %1371 = vrot.lane.b32.xlu0 %v1207, 64
    %v1372 = vpop.permute.xlu0 %1371
    %1373 = vrot.lane.b32.xlu0 %v1208, 64
    %v1374 = vpop.permute.xlu0 %1373
    %1375 = vrot.lane.b32.xlu0 %v1209, 64
    %v1376 = vpop.permute.xlu0 %1375
    %v1382 = vsel %vm218, %v1365, 0
    %v1385 = vsel %vm218, %v1366, 0
    %v1388 = vsel %vm218, %v1367, 0
    %v1391 = vsel %vm218, %v1368, 0
    %1393 = vmatprep.subr.bf16.mxu0 0
    %1394 = vmatpush1.bf16.msra.mxu0 0
    %1395 = vmatprep.subr.bf16.mxu0 0
    %1396 = vmatpush1.bf16.msra.mxu0 0
    %1397 = vmatprep.subr.bf16.mxu0 0
    %1398 = vmatpush1.bf16.msra.mxu0 0
    %1399 = vmatprep.subr.bf16.mxu0 0
    %1400 = vmatpush1.bf16.msra.mxu0 0
    %1401 = vmatprep.subr.bf16.mxu0 0
    %1402 = vmatpush1.bf16.msra.mxu0 %v1376
    %1403 = vmatprep.subr.bf16.mxu0 0
    %1404 = vmatpush1.bf16.msra.mxu0 %v1374
    %1405 = vmatprep.subr.bf16.mxu0 0
    %1406 = vmatpush1.bf16.msra.mxu0 %v1372
    %1407 = vmatprep.subr.bf16.mxu0 0
    %1408 = vmatpush1.bf16.msra.mxu0 %v1370
    %1409 = vmatprep.subr.bf16.mxu0 0
    %1410 = vmatpush2.bf16.msra.mxu0 0
    %1411 = vmatprep.subr.bf16.mxu0 0
    %1412 = vmatpush2.bf16.msra.mxu0 0
    %1413 = vmatprep.subr.bf16.mxu0 0
    %1414 = vmatpush2.bf16.msra.mxu0 0
    %1415 = vmatprep.subr.bf16.mxu0 0
    %1416 = vmatpush2.bf16.msra.mxu0 0
    %1417 = vmatprep.subr.bf16.mxu0 0
    %1418 = vmatpush2.bf16.msra.mxu0 0
    %1419 = vmatprep.subr.bf16.mxu0 0
    %1420 = vmatpush2.bf16.msra.mxu0 0
    %1421 = vmatprep.subr.bf16.mxu0 0
    %1422 = vmatpush2.bf16.msra.mxu0 0
    %1423 = vmatprep.subr.bf16.mxu0 0
    %1424 = vmatpush2.bf16.msra.mxu0 0
    %1425 = vmatprep.mubr.bf16.mxu0 0
    %1426 = vmatmul.mubr.bf16.gmra.mxu0 %v1382
    %v1427 = vpop.f32.mrf.mxu0
    %v1428 = vadd.f32 0.0, %v1427
    %v1429 = vpop.f32.mrf.mxu0
    %v1430 = vpop.f32.mrf.mxu0
    %v1431 = vadd.f32 0.0, %v1430
    %v1432 = vpop.f32.mrf.mxu0
    %1433 = vmatprep.mubr.bf16.mxu0 0
    %1434 = vmatmul.mubr.bf16.gmra.mxu0 %v1385
    %v1435 = vpop.f32.mrf.mxu0
    %v1436 = vadd.f32 0.0, %v1435
    %v1437 = vpop.f32.mrf.mxu0
    %v1438 = vpop.f32.mrf.mxu0
    %v1439 = vadd.f32 0.0, %v1438
    %v1440 = vpop.f32.mrf.mxu0
    %1441 = vmatprep.mubr.bf16.mxu0 0
    %1442 = vmatmul.mubr.bf16.gmra.mxu0 %v1388
    %v1443 = vpop.f32.mrf.mxu0
    %v1444 = vadd.f32 0.0, %v1443
    %v1445 = vpop.f32.mrf.mxu0
    %v1446 = vpop.f32.mrf.mxu0
    %v1447 = vadd.f32 0.0, %v1446
    %v1448 = vpop.f32.mrf.mxu0
    %1449 = vmatprep.mubr.bf16.mxu0 0
    %1450 = vmatmul.mubr.bf16.gmra.mxu0 %v1391
    %v1451 = vpop.f32.mrf.mxu0
    %v1452 = vadd.f32 0.0, %v1451
    %v1453 = vpop.f32.mrf.mxu0
    %v1454 = vpop.f32.mrf.mxu0
    %v1455 = vadd.f32 0.0, %v1454
    %v1456 = vpop.f32.mrf.mxu0
    %1457 = vdwg.mxu0
    %v1458 = vadd.f32 %v1332, %v1428
    %v1459 = vadd.f32 %v1333, %v1431
    %v1460 = vadd.f32 %v1334, %v1436
    %v1461 = vadd.f32 %v1335, %v1439
    %v1462 = vadd.f32 %v1336, %v1444
    %v1463 = vadd.f32 %v1337, %v1447
    %v1464 = vadd.f32 %v1338, %v1452
    %v1465 = vadd.f32 %v1339, %v1455
    %v1466 = vxor.u32 %v1458, 2147483648
    %v1467 = vxor.u32 %v1459, 2147483648
    %v1468 = vxor.u32 %v1460, 2147483648
    %v1469 = vxor.u32 %v1461, 2147483648
    %v1470 = vxor.u32 %v1462, 2147483648
    %v1471 = vxor.u32 %v1463, 2147483648
    %v1472 = vxor.u32 %v1464, 2147483648
    %v1473 = vxor.u32 %v1465, 2147483648
    %v1474 = vmul.f32 %v1466, 1.442695
    %v1475 = vpow.pop %v1474
    %v1476 = vmul.f32 %v1467, 1.442695
    %v1477 = vpow.pop %v1476
    %v1478 = vmul.f32 %v1468, 1.442695
    %v1479 = vpow.pop %v1478
    %v1480 = vmul.f32 %v1469, 1.442695
    %v1481 = vpow.pop %v1480
    %v1482 = vmul.f32 %v1470, 1.442695
    %v1483 = vpow.pop %v1482
    %v1484 = vmul.f32 %v1471, 1.442695
    %v1485 = vpow.pop %v1484
    %v1486 = vmul.f32 %v1472, 1.442695
    %v1487 = vpow.pop %v1486
    %v1488 = vmul.f32 %v1473, 1.442695
    %v1489 = vpow.pop %v1488
    %v1490 = vadd.f32 %v1475, 1.0
    %v1491 = vadd.f32 %v1477, 1.0
    %v1492 = vadd.f32 %v1479, 1.0
    %v1493 = vadd.f32 %v1481, 1.0
    %v1494 = vadd.f32 %v1483, 1.0
    %v1495 = vadd.f32 %v1485, 1.0
    %v1496 = vadd.f32 %v1487, 1.0
    %v1497 = vadd.f32 %v1489, 1.0
    %v1498 = vrcp.pop %v1490
    %v1499 = vmul.f32 1.0, %v1498
    %v1500 = vrcp.pop %v1491
    %v1501 = vmul.f32 1.0, %v1500
    %v1502 = vrcp.pop %v1492
    %v1503 = vmul.f32 1.0, %v1502
    %v1504 = vrcp.pop %v1493
    %v1505 = vmul.f32 1.0, %v1504
    %v1506 = vrcp.pop %v1494
    %v1507 = vmul.f32 1.0, %v1506
    %v1508 = vrcp.pop %v1495
    %v1509 = vmul.f32 1.0, %v1508
    %v1510 = vrcp.pop %v1496
    %v1511 = vmul.f32 1.0, %v1510
    %v1512 = vrcp.pop %v1497
    %v1513 = vmul.f32 1.0, %v1512
    %v1514 = vmul.f32 %v1458, %v1499
    %v1515 = vmul.f32 %v1459, %v1501
    %v1516 = vmul.f32 %v1460, %v1503
    %v1517 = vmul.f32 %v1461, %v1505
    %v1518 = vmul.f32 %v1462, %v1507
    %v1519 = vmul.f32 %v1463, %v1509
    %v1520 = vmul.f32 %v1464, %v1511
    %v1521 = vmul.f32 %v1465, %v1513
    %s1522 = scalar_lea.vmem %s0, 96
    %v1523 = vld [vmem:[%s1522] sm:$0xf]
    %v1524 = vld [vmem:[%s1522 + $0x4] sm:$0xf]
    %v1525 = vld [vmem:[%s1522 + $0x8] sm:$0xf]
    %v1526 = vld [vmem:[%s1522 + $0xc] sm:$0xf]
    %v1527 = vld [vmem:[%s1522 + $0x10] sm:$0xf]
    %v1528 = vld [vmem:[%s1522 + $0x14] sm:$0xf]
    %v1529 = vld [vmem:[%s1522 + $0x18] sm:$0xf]
    %v1530 = vld [vmem:[%s1522 + $0x1c] sm:$0xf]
    %s1531 = scalar_lea.vmem %s1, 48
    %v1532 = vld [vmem:[%s1531] sm:$0xf]
    %v1533 = vld [vmem:[%s1531 + $0x4] sm:$0xf]
    %v1534 = vld [vmem:[%s1531 + $0x8] sm:$0xf]
    %v1535 = vld [vmem:[%s1531 + $0xc] sm:$0xf]
    %v1544 = vunpack.c.l.b16 %v1523
    %v1545 = vunpack.c.l.b16 %v1524
    %v1546 = vunpack.c.l.b16 %v1525
    %v1547 = vunpack.c.l.b16 %v1526
    %v1548 = vunpack.c.l.b16 %v1527
    %v1549 = vunpack.c.l.b16 %v1528
    %v1550 = vunpack.c.l.b16 %v1529
    %v1551 = vunpack.c.l.b16 %v1530
    %v1552 = vpack.c.b16 %v1545, %v1544
    %v1553 = vpack.c.b16 %v1547, %v1546
    %v1554 = vpack.c.b16 %v1549, %v1548
    %v1555 = vpack.c.b16 %v1551, %v1550
    %v1560 = vunpack.c.l.b16 %v1532
    %v1561 = vunpack.c.l.b16 %v1533
    %v1562 = vunpack.c.l.b16 %v1534
    %v1563 = vunpack.c.l.b16 %v1535
    %v1564 = vpack.c.b16 %v1561, %v1560
    %v1565 = vpack.c.b16 %v1563, %v1562
    %v1569 = vsel %vm77, %v1552, 0
    %v1572 = vsel %vm77, %v1553, 0
    %v1575 = vsel %vm77, %v1554, 0
    %v1578 = vsel %vm77, %v1555, 0
    %1580 = vmatprep.subr.bf16.mxu0 0
    %1581 = vmatpush1.bf16.msra.mxu0 0
    %1582 = vmatprep.subr.bf16.mxu0 0
    %1583 = vmatpush1.bf16.msra.mxu0 0
    %1584 = vmatprep.subr.bf16.mxu0 0
    %1585 = vmatpush1.bf16.msra.mxu0 0
    %1586 = vmatprep.subr.bf16.mxu0 0
    %1587 = vmatpush1.bf16.msra.mxu0 0
    %1588 = vmatprep.subr.bf16.mxu0 0
    %1589 = vmatpush1.bf16.msra.mxu0 0
    %1590 = vmatprep.subr.bf16.mxu0 0
    %1591 = vmatpush1.bf16.msra.mxu0 0
    %1592 = vmatprep.subr.bf16.mxu0 0
    %1593 = vmatpush1.bf16.msra.mxu0 %v1565
    %1594 = vmatprep.subr.bf16.mxu0 0
    %1595 = vmatpush1.bf16.msra.mxu0 %v1564
    %1596 = vmatprep.subr.bf16.mxu0 0
    %1597 = vmatpush2.bf16.msra.mxu0 0
    %1598 = vmatprep.subr.bf16.mxu0 0
    %1599 = vmatpush2.bf16.msra.mxu0 0
    %1600 = vmatprep.subr.bf16.mxu0 0
    %1601 = vmatpush2.bf16.msra.mxu0 0
    %1602 = vmatprep.subr.bf16.mxu0 0
    %1603 = vmatpush2.bf16.msra.mxu0 0
    %1604 = vmatprep.subr.bf16.mxu0 0
    %1605 = vmatpush2.bf16.msra.mxu0 0
    %1606 = vmatprep.subr.bf16.mxu0 0
    %1607 = vmatpush2.bf16.msra.mxu0 0
    %1608 = vmatprep.subr.bf16.mxu0 0
    %1609 = vmatpush2.bf16.msra.mxu0 0
    %1610 = vmatprep.subr.bf16.mxu0 0
    %1611 = vmatpush2.bf16.msra.mxu0 0
    %1612 = vmatprep.mubr.bf16.mxu0 0
    %1613 = vmatmul.mubr.bf16.gmra.mxu0 %v1569
    %v1614 = vpop.f32.mrf.mxu0
    %v1615 = vadd.f32 0.0, %v1614
    %v1616 = vpop.f32.mrf.mxu0
    %v1617 = vpop.f32.mrf.mxu0
    %v1618 = vadd.f32 0.0, %v1617
    %v1619 = vpop.f32.mrf.mxu0
    %1620 = vmatprep.mubr.bf16.mxu0 0
    %1621 = vmatmul.mubr.bf16.gmra.mxu0 %v1572
    %v1622 = vpop.f32.mrf.mxu0
    %v1623 = vadd.f32 0.0, %v1622
    %v1624 = vpop.f32.mrf.mxu0
    %v1625 = vpop.f32.mrf.mxu0
    %v1626 = vadd.f32 0.0, %v1625
    %v1627 = vpop.f32.mrf.mxu0
    %1628 = vmatprep.mubr.bf16.mxu0 0
    %1629 = vmatmul.mubr.bf16.gmra.mxu0 %v1575
    %v1630 = vpop.f32.mrf.mxu0
    %v1631 = vadd.f32 0.0, %v1630
    %v1632 = vpop.f32.mrf.mxu0
    %v1633 = vpop.f32.mrf.mxu0
    %v1634 = vadd.f32 0.0, %v1633
    %v1635 = vpop.f32.mrf.mxu0
    %1636 = vmatprep.mubr.bf16.mxu0 0
    %1637 = vmatmul.mubr.bf16.gmra.mxu0 %v1578
    %v1638 = vpop.f32.mrf.mxu0
    %v1639 = vadd.f32 0.0, %v1638
    %v1640 = vpop.f32.mrf.mxu0
    %v1641 = vpop.f32.mrf.mxu0
    %v1642 = vadd.f32 0.0, %v1641
    %v1643 = vpop.f32.mrf.mxu0
    %1644 = vdwg.mxu0
    %s1645 = scalar_lea.vmem %s3, 3
    %v1646 = vld [vmem:[%s1645] sm:$0x1]
    %v1648 = vlaneseq
    %v1649 = vshrl.u32 %v1648, 7
    %v1650 = vsub.s32 0, %v1649
    %v1651 = vrot.slane %v1646, %v1650
    %v1653 = vadd.f32 %v1615, %v1651
    %v1654 = vadd.f32 %v1618, %v1651
    %v1655 = vadd.f32 %v1623, %v1651
    %v1656 = vadd.f32 %v1626, %v1651
    %v1657 = vadd.f32 %v1631, %v1651
    %v1658 = vadd.f32 %v1634, %v1651
    %v1659 = vadd.f32 %v1639, %v1651
    %v1660 = vadd.f32 %v1642, %v1651
    %v1661 = vpack.c.bf16 %v1618, %v1615
    %v1662 = vpack.c.bf16 %v1626, %v1623
    %v1663 = vpack.c.bf16 %v1634, %v1631
    %v1664 = vpack.c.bf16 %v1642, %v1639
    %s1665 = scalar_lea.vmem [#allocation2], 224
    %v1666 = vld [vmem:[%s1665] sm:$0xf]
    %v1667 = vld [vmem:[%s1665 + $0x4] sm:$0xf]
    %v1668 = vld [vmem:[%s1665 + $0x8] sm:$0xf]
    %v1669 = vld [vmem:[%s1665 + $0xc] sm:$0xf]
    %v1670 = vld [vmem:[%s1665 + $0x10] sm:$0xf]
    %v1671 = vld [vmem:[%s1665 + $0x14] sm:$0xf]
    %v1672 = vld [vmem:[%s1665 + $0x18] sm:$0xf]
    %v1673 = vld [vmem:[%s1665 + $0x1c] sm:$0xf]
    %v1682 = vunpack.c.l.b16 %v1666
    %v1683 = vunpack.c.l.b16 %v1667
    %v1684 = vunpack.c.l.b16 %v1668
    %v1685 = vunpack.c.l.b16 %v1669
    %v1686 = vunpack.c.l.b16 %v1670
    %v1687 = vunpack.c.l.b16 %v1671
    %v1688 = vunpack.c.l.b16 %v1672
    %v1689 = vunpack.c.l.b16 %v1673
    %v1690 = vpack.c.b16 %v1683, %v1682
    %v1691 = vpack.c.b16 %v1685, %v1684
    %v1692 = vpack.c.b16 %v1687, %v1686
    %v1693 = vpack.c.b16 %v1689, %v1688
    %1698 = vrot.lane.b32.xlu0 %v1661, 96
    %v1699 = vpop.permute.xlu0 %1698
    %1700 = vrot.lane.b32.xlu0 %v1662, 96
    %v1701 = vpop.permute.xlu0 %1700
    %1702 = vrot.lane.b32.xlu0 %v1663, 96
    %v1703 = vpop.permute.xlu0 %1702
    %1704 = vrot.lane.b32.xlu0 %v1664, 96
    %v1705 = vpop.permute.xlu0 %1704
    %v1711 = vsel %vm218, %v1690, 0
    %v1714 = vsel %vm218, %v1691, 0
    %v1717 = vsel %vm218, %v1692, 0
    %v1720 = vsel %vm218, %v1693, 0
    %1722 = vmatprep.subr.bf16.mxu0 0
    %1723 = vmatpush1.bf16.msra.mxu0 0
    %1724 = vmatprep.subr.bf16.mxu0 0
    %1725 = vmatpush1.bf16.msra.mxu0 0
    %1726 = vmatprep.subr.bf16.mxu0 0
    %1727 = vmatpush1.bf16.msra.mxu0 0
    %1728 = vmatprep.subr.bf16.mxu0 0
    %1729 = vmatpush1.bf16.msra.mxu0 0
    %1730 = vmatprep.subr.bf16.mxu0 0
    %1731 = vmatpush1.bf16.msra.mxu0 %v1705
    %1732 = vmatprep.subr.bf16.mxu0 0
    %1733 = vmatpush1.bf16.msra.mxu0 %v1703
    %1734 = vmatprep.subr.bf16.mxu0 0
    %1735 = vmatpush1.bf16.msra.mxu0 %v1701
    %1736 = vmatprep.subr.bf16.mxu0 0
    %1737 = vmatpush1.bf16.msra.mxu0 %v1699
    %1738 = vmatprep.subr.bf16.mxu0 0
    %1739 = vmatpush2.bf16.msra.mxu0 0
    %1740 = vmatprep.subr.bf16.mxu0 0
    %1741 = vmatpush2.bf16.msra.mxu0 0
    %1742 = vmatprep.subr.bf16.mxu0 0
    %1743 = vmatpush2.bf16.msra.mxu0 0
    %1744 = vmatprep.subr.bf16.mxu0 0
    %1745 = vmatpush2.bf16.msra.mxu0 0
    %1746 = vmatprep.subr.bf16.mxu0 0
    %1747 = vmatpush2.bf16.msra.mxu0 0
    %1748 = vmatprep.subr.bf16.mxu0 0
    %1749 = vmatpush2.bf16.msra.mxu0 0
    %1750 = vmatprep.subr.bf16.mxu0 0
    %1751 = vmatpush2.bf16.msra.mxu0 0
    %1752 = vmatprep.subr.bf16.mxu0 0
    %1753 = vmatpush2.bf16.msra.mxu0 0
    %1754 = vmatprep.mubr.bf16.mxu0 0
    %1755 = vmatmul.mubr.bf16.gmra.mxu0 %v1711
    %v1756 = vpop.f32.mrf.mxu0
    %v1757 = vadd.f32 0.0, %v1756
    %v1758 = vpop.f32.mrf.mxu0
    %v1759 = vpop.f32.mrf.mxu0
    %v1760 = vadd.f32 0.0, %v1759
    %v1761 = vpop.f32.mrf.mxu0
    %1762 = vmatprep.mubr.bf16.mxu0 0
    %1763 = vmatmul.mubr.bf16.gmra.mxu0 %v1714
    %v1764 = vpop.f32.mrf.mxu0
    %v1765 = vadd.f32 0.0, %v1764
    %v1766 = vpop.f32.mrf.mxu0
    %v1767 = vpop.f32.mrf.mxu0
    %v1768 = vadd.f32 0.0, %v1767
    %v1769 = vpop.f32.mrf.mxu0
    %1770 = vmatprep.mubr.bf16.mxu0 0
    %1771 = vmatmul.mubr.bf16.gmra.mxu0 %v1717
    %v1772 = vpop.f32.mrf.mxu0
    %v1773 = vadd.f32 0.0, %v1772
    %v1774 = vpop.f32.mrf.mxu0
    %v1775 = vpop.f32.mrf.mxu0
    %v1776 = vadd.f32 0.0, %v1775
    %v1777 = vpop.f32.mrf.mxu0
    %1778 = vmatprep.mubr.bf16.mxu0 0
    %1779 = vmatmul.mubr.bf16.gmra.mxu0 %v1720
    %v1780 = vpop.f32.mrf.mxu0
    %v1781 = vadd.f32 0.0, %v1780
    %v1782 = vpop.f32.mrf.mxu0
    %v1783 = vpop.f32.mrf.mxu0
    %v1784 = vadd.f32 0.0, %v1783
    %v1785 = vpop.f32.mrf.mxu0
    %1786 = vdwg.mxu0
    %v1787 = vadd.f32 %v1653, %v1757
    %v1788 = vadd.f32 %v1654, %v1760
    %v1789 = vadd.f32 %v1655, %v1765
    %v1790 = vadd.f32 %v1656, %v1768
    %v1791 = vadd.f32 %v1657, %v1773
    %v1792 = vadd.f32 %v1658, %v1776
    %v1793 = vadd.f32 %v1659, %v1781
    %v1794 = vadd.f32 %v1660, %v1784
    %s1795 = scalar_lea.vmem [#allocation2], 256
    %v1796 = vld [vmem:[%s1795] sm:$0xf]
    %v1797 = vld [vmem:[%s1795 + $0x4] sm:$0xf]
    %v1798 = vld [vmem:[%s1795 + $0x8] sm:$0xf]
    %v1799 = vld [vmem:[%s1795 + $0xc] sm:$0xf]
    %v1800 = vld [vmem:[%s1795 + $0x10] sm:$0xf]
    %v1801 = vld [vmem:[%s1795 + $0x14] sm:$0xf]
    %v1802 = vld [vmem:[%s1795 + $0x18] sm:$0xf]
    %v1803 = vld [vmem:[%s1795 + $0x1c] sm:$0xf]
    %v1812 = vunpack.c.l.b16 %v1796
    %v1813 = vunpack.c.l.b16 %v1797
    %v1814 = vunpack.c.l.b16 %v1798
    %v1815 = vunpack.c.l.b16 %v1799
    %v1816 = vunpack.c.l.b16 %v1800
    %v1817 = vunpack.c.l.b16 %v1801
    %v1818 = vunpack.c.l.b16 %v1802
    %v1819 = vunpack.c.l.b16 %v1803
    %v1820 = vpack.c.b16 %v1813, %v1812
    %v1821 = vpack.c.b16 %v1815, %v1814
    %v1822 = vpack.c.b16 %v1817, %v1816
    %v1823 = vpack.c.b16 %v1819, %v1818
    %1824 = vrot.lane.b32.xlu0 %v1661, 64
    %v1825 = vpop.permute.xlu0 %1824
    %1826 = vrot.lane.b32.xlu0 %v1662, 64
    %v1827 = vpop.permute.xlu0 %1826
    %1828 = vrot.lane.b32.xlu0 %v1663, 64
    %v1829 = vpop.permute.xlu0 %1828
    %1830 = vrot.lane.b32.xlu0 %v1664, 64
    %v1831 = vpop.permute.xlu0 %1830
    %v1837 = vsel %vm218, %v1820, 0
    %v1840 = vsel %vm218, %v1821, 0
    %v1843 = vsel %vm218, %v1822, 0
    %v1846 = vsel %vm218, %v1823, 0
    %1848 = vmatprep.subr.bf16.mxu0 0
    %1849 = vmatpush1.bf16.msra.mxu0 0
    %1850 = vmatprep.subr.bf16.mxu0 0
    %1851 = vmatpush1.bf16.msra.mxu0 0
    %1852 = vmatprep.subr.bf16.mxu0 0
    %1853 = vmatpush1.bf16.msra.mxu0 0
    %1854 = vmatprep.subr.bf16.mxu0 0
    %1855 = vmatpush1.bf16.msra.mxu0 0
    %1856 = vmatprep.subr.bf16.mxu0 0
    %1857 = vmatpush1.bf16.msra.mxu0 %v1831
    %1858 = vmatprep.subr.bf16.mxu0 0
    %1859 = vmatpush1.bf16.msra.mxu0 %v1829
    %1860 = vmatprep.subr.bf16.mxu0 0
    %1861 = vmatpush1.bf16.msra.mxu0 %v1827
    %1862 = vmatprep.subr.bf16.mxu0 0
    %1863 = vmatpush1.bf16.msra.mxu0 %v1825
    %1864 = vmatprep.subr.bf16.mxu0 0
    %1865 = vmatpush2.bf16.msra.mxu0 0
    %1866 = vmatprep.subr.bf16.mxu0 0
    %1867 = vmatpush2.bf16.msra.mxu0 0
    %1868 = vmatprep.subr.bf16.mxu0 0
    %1869 = vmatpush2.bf16.msra.mxu0 0
    %1870 = vmatprep.subr.bf16.mxu0 0
    %1871 = vmatpush2.bf16.msra.mxu0 0
    %1872 = vmatprep.subr.bf16.mxu0 0
    %1873 = vmatpush2.bf16.msra.mxu0 0
    %1874 = vmatprep.subr.bf16.mxu0 0
    %1875 = vmatpush2.bf16.msra.mxu0 0
    %1876 = vmatprep.subr.bf16.mxu0 0
    %1877 = vmatpush2.bf16.msra.mxu0 0
    %1878 = vmatprep.subr.bf16.mxu0 0
    %1879 = vmatpush2.bf16.msra.mxu0 0
    %1880 = vmatprep.mubr.bf16.mxu0 0
    %1881 = vmatmul.mubr.bf16.gmra.mxu0 %v1837
    %v1882 = vpop.f32.mrf.mxu0
    %v1883 = vadd.f32 0.0, %v1882
    %v1884 = vpop.f32.mrf.mxu0
    %v1885 = vpop.f32.mrf.mxu0
    %v1886 = vadd.f32 0.0, %v1885
    %v1887 = vpop.f32.mrf.mxu0
    %1888 = vmatprep.mubr.bf16.mxu0 0
    %1889 = vmatmul.mubr.bf16.gmra.mxu0 %v1840
    %v1890 = vpop.f32.mrf.mxu0
    %v1891 = vadd.f32 0.0, %v1890
    %v1892 = vpop.f32.mrf.mxu0
    %v1893 = vpop.f32.mrf.mxu0
    %v1894 = vadd.f32 0.0, %v1893
    %v1895 = vpop.f32.mrf.mxu0
    %1896 = vmatprep.mubr.bf16.mxu0 0
    %1897 = vmatmul.mubr.bf16.gmra.mxu0 %v1843
    %v1898 = vpop.f32.mrf.mxu0
    %v1899 = vadd.f32 0.0, %v1898
    %v1900 = vpop.f32.mrf.mxu0
    %v1901 = vpop.f32.mrf.mxu0
    %v1902 = vadd.f32 0.0, %v1901
    %v1903 = vpop.f32.mrf.mxu0
    %1904 = vmatprep.mubr.bf16.mxu0 0
    %1905 = vmatmul.mubr.bf16.gmra.mxu0 %v1846
    %v1906 = vpop.f32.mrf.mxu0
    %v1907 = vadd.f32 0.0, %v1906
    %v1908 = vpop.f32.mrf.mxu0
    %v1909 = vpop.f32.mrf.mxu0
    %v1910 = vadd.f32 0.0, %v1909
    %v1911 = vpop.f32.mrf.mxu0
    %1912 = vdwg.mxu0
    %v1913 = vadd.f32 %v1787, %v1883
    %v1914 = vadd.f32 %v1788, %v1886
    %v1915 = vadd.f32 %v1789, %v1891
    %v1916 = vadd.f32 %v1790, %v1894
    %v1917 = vadd.f32 %v1791, %v1899
    %v1918 = vadd.f32 %v1792, %v1902
    %v1919 = vadd.f32 %v1793, %v1907
    %v1920 = vadd.f32 %v1794, %v1910
    %v1921 = vxor.u32 %v1913, 2147483648
    %v1922 = vxor.u32 %v1914, 2147483648
    %v1923 = vxor.u32 %v1915, 2147483648
    %v1924 = vxor.u32 %v1916, 2147483648
    %v1925 = vxor.u32 %v1917, 2147483648
    %v1926 = vxor.u32 %v1918, 2147483648
    %v1927 = vxor.u32 %v1919, 2147483648
    %v1928 = vxor.u32 %v1920, 2147483648
    %v1929 = vmul.f32 %v1921, 1.442695
    %v1930 = vpow.pop %v1929
    %v1931 = vmul.f32 %v1922, 1.442695
    %v1932 = vpow.pop %v1931
    %v1933 = vmul.f32 %v1923, 1.442695
    %v1934 = vpow.pop %v1933
    %v1935 = vmul.f32 %v1924, 1.442695
    %v1936 = vpow.pop %v1935
    %v1937 = vmul.f32 %v1925, 1.442695
    %v1938 = vpow.pop %v1937
    %v1939 = vmul.f32 %v1926, 1.442695
    %v1940 = vpow.pop %v1939
    %v1941 = vmul.f32 %v1927, 1.442695
    %v1942 = vpow.pop %v1941
    %v1943 = vmul.f32 %v1928, 1.442695
    %v1944 = vpow.pop %v1943
    %v1945 = vadd.f32 %v1930, 1.0
    %v1946 = vadd.f32 %v1932, 1.0
    %v1947 = vadd.f32 %v1934, 1.0
    %v1948 = vadd.f32 %v1936, 1.0
    %v1949 = vadd.f32 %v1938, 1.0
    %v1950 = vadd.f32 %v1940, 1.0
    %v1951 = vadd.f32 %v1942, 1.0
    %v1952 = vadd.f32 %v1944, 1.0
    %v1953 = vrcp.pop %v1945
    %v1954 = vmul.f32 1.0, %v1953
    %v1955 = vrcp.pop %v1946
    %v1956 = vmul.f32 1.0, %v1955
    %v1957 = vrcp.pop %v1947
    %v1958 = vmul.f32 1.0, %v1957
    %v1959 = vrcp.pop %v1948
    %v1960 = vmul.f32 1.0, %v1959
    %v1961 = vrcp.pop %v1949
    %v1962 = vmul.f32 1.0, %v1961
    %v1963 = vrcp.pop %v1950
    %v1964 = vmul.f32 1.0, %v1963
    %v1965 = vrcp.pop %v1951
    %v1966 = vmul.f32 1.0, %v1965
    %v1967 = vrcp.pop %v1952
    %v1968 = vmul.f32 1.0, %v1967
    %v1969 = vmul.f32 %v1913, %v1954
    %v1970 = vmul.f32 %v1914, %v1956
    %v1971 = vmul.f32 %v1915, %v1958
    %v1972 = vmul.f32 %v1916, %v1960
    %v1973 = vmul.f32 %v1917, %v1962
    %v1974 = vmul.f32 %v1918, %v1964
    %v1975 = vmul.f32 %v1919, %v1966
    %v1976 = vmul.f32 %v1920, %v1968
    %s1977 = scalar_lea.vmem %s0, 128
    %v1978 = vld [vmem:[%s1977] sm:$0xf]
    %v1979 = vld [vmem:[%s1977 + $0x4] sm:$0xf]
    %v1980 = vld [vmem:[%s1977 + $0x8] sm:$0xf]
    %v1981 = vld [vmem:[%s1977 + $0xc] sm:$0xf]
    %v1982 = vld [vmem:[%s1977 + $0x10] sm:$0xf]
    %v1983 = vld [vmem:[%s1977 + $0x14] sm:$0xf]
    %v1984 = vld [vmem:[%s1977 + $0x18] sm:$0xf]
    %v1985 = vld [vmem:[%s1977 + $0x1c] sm:$0xf]
    %s1986 = scalar_lea.vmem %s1, 64
    %v1987 = vld [vmem:[%s1986] sm:$0xf]
    %v1988 = vld [vmem:[%s1986 + $0x4] sm:$0xf]
    %v1989 = vld [vmem:[%s1986 + $0x8] sm:$0xf]
    %v1990 = vld [vmem:[%s1986 + $0xc] sm:$0xf]
    %v1999 = vunpack.c.l.b16 %v1978
    %v2000 = vunpack.c.l.b16 %v1979
    %v2001 = vunpack.c.l.b16 %v1980
    %v2002 = vunpack.c.l.b16 %v1981
    %v2003 = vunpack.c.l.b16 %v1982
    %v2004 = vunpack.c.l.b16 %v1983
    %v2005 = vunpack.c.l.b16 %v1984
    %v2006 = vunpack.c.l.b16 %v1985
    %v2007 = vpack.c.b16 %v2000, %v1999
    %v2008 = vpack.c.b16 %v2002, %v2001
    %v2009 = vpack.c.b16 %v2004, %v2003
    %v2010 = vpack.c.b16 %v2006, %v2005
    %v2015 = vunpack.c.l.b16 %v1987
    %v2016 = vunpack.c.l.b16 %v1988
    %v2017 = vunpack.c.l.b16 %v1989
    %v2018 = vunpack.c.l.b16 %v1990
    %v2019 = vpack.c.b16 %v2016, %v2015
    %v2020 = vpack.c.b16 %v2018, %v2017
    %v2024 = vsel %vm77, %v2007, 0
    %v2027 = vsel %vm77, %v2008, 0
    %v2030 = vsel %vm77, %v2009, 0
    %v2033 = vsel %vm77, %v2010, 0
    %2035 = vmatprep.subr.bf16.mxu0 0
    %2036 = vmatpush1.bf16.msra.mxu0 0
    %2037 = vmatprep.subr.bf16.mxu0 0
    %2038 = vmatpush1.bf16.msra.mxu0 0
    %2039 = vmatprep.subr.bf16.mxu0 0
    %2040 = vmatpush1.bf16.msra.mxu0 0
    %2041 = vmatprep.subr.bf16.mxu0 0
    %2042 = vmatpush1.bf16.msra.mxu0 0
    %2043 = vmatprep.subr.bf16.mxu0 0
    %2044 = vmatpush1.bf16.msra.mxu0 0
    %2045 = vmatprep.subr.bf16.mxu0 0
    %2046 = vmatpush1.bf16.msra.mxu0 0
    %2047 = vmatprep.subr.bf16.mxu0 0
    %2048 = vmatpush1.bf16.msra.mxu0 %v2020
    %2049 = vmatprep.subr.bf16.mxu0 0
    %2050 = vmatpush1.bf16.msra.mxu0 %v2019
    %2051 = vmatprep.subr.bf16.mxu0 0
    %2052 = vmatpush2.bf16.msra.mxu0 0
    %2053 = vmatprep.subr.bf16.mxu0 0
    %2054 = vmatpush2.bf16.msra.mxu0 0
    %2055 = vmatprep.subr.bf16.mxu0 0
    %2056 = vmatpush2.bf16.msra.mxu0 0
    %2057 = vmatprep.subr.bf16.mxu0 0
    %2058 = vmatpush2.bf16.msra.mxu0 0
    %2059 = vmatprep.subr.bf16.mxu0 0
    %2060 = vmatpush2.bf16.msra.mxu0 0
    %2061 = vmatprep.subr.bf16.mxu0 0
    %2062 = vmatpush2.bf16.msra.mxu0 0
    %2063 = vmatprep.subr.bf16.mxu0 0
    %2064 = vmatpush2.bf16.msra.mxu0 0
    %2065 = vmatprep.subr.bf16.mxu0 0
    %2066 = vmatpush2.bf16.msra.mxu0 0
    %2067 = vmatprep.mubr.bf16.mxu0 0
    %2068 = vmatmul.mubr.bf16.gmra.mxu0 %v2024
    %v2069 = vpop.f32.mrf.mxu0
    %v2070 = vadd.f32 0.0, %v2069
    %v2071 = vpop.f32.mrf.mxu0
    %v2072 = vpop.f32.mrf.mxu0
    %v2073 = vadd.f32 0.0, %v2072
    %v2074 = vpop.f32.mrf.mxu0
    %2075 = vmatprep.mubr.bf16.mxu0 0
    %2076 = vmatmul.mubr.bf16.gmra.mxu0 %v2027
    %v2077 = vpop.f32.mrf.mxu0
    %v2078 = vadd.f32 0.0, %v2077
    %v2079 = vpop.f32.mrf.mxu0
    %v2080 = vpop.f32.mrf.mxu0
    %v2081 = vadd.f32 0.0, %v2080
    %v2082 = vpop.f32.mrf.mxu0
    %2083 = vmatprep.mubr.bf16.mxu0 0
    %2084 = vmatmul.mubr.bf16.gmra.mxu0 %v2030
    %v2085 = vpop.f32.mrf.mxu0
    %v2086 = vadd.f32 0.0, %v2085
    %v2087 = vpop.f32.mrf.mxu0
    %v2088 = vpop.f32.mrf.mxu0
    %v2089 = vadd.f32 0.0, %v2088
    %v2090 = vpop.f32.mrf.mxu0
    %2091 = vmatprep.mubr.bf16.mxu0 0
    %2092 = vmatmul.mubr.bf16.gmra.mxu0 %v2033
    %v2093 = vpop.f32.mrf.mxu0
    %v2094 = vadd.f32 0.0, %v2093
    %v2095 = vpop.f32.mrf.mxu0
    %v2096 = vpop.f32.mrf.mxu0
    %v2097 = vadd.f32 0.0, %v2096
    %v2098 = vpop.f32.mrf.mxu0
    %2099 = vdwg.mxu0
    %s2100 = scalar_lea.vmem %s3, 4
    %v2101 = vld [vmem:[%s2100] sm:$0x1]
    %v2103 = vlaneseq
    %v2104 = vshrl.u32 %v2103, 7
    %v2105 = vsub.s32 0, %v2104
    %v2106 = vrot.slane %v2101, %v2105
    %v2108 = vadd.f32 %v2070, %v2106
    %v2109 = vadd.f32 %v2073, %v2106
    %v2110 = vadd.f32 %v2078, %v2106
    %v2111 = vadd.f32 %v2081, %v2106
    %v2112 = vadd.f32 %v2086, %v2106
    %v2113 = vadd.f32 %v2089, %v2106
    %v2114 = vadd.f32 %v2094, %v2106
    %v2115 = vadd.f32 %v2097, %v2106
    %v2116 = vpack.c.bf16 %v2073, %v2070
    %v2117 = vpack.c.bf16 %v2081, %v2078
    %v2118 = vpack.c.bf16 %v2089, %v2086
    %v2119 = vpack.c.bf16 %v2097, %v2094
    %s2120 = scalar_lea.vmem [#allocation2], 288
    %v2121 = vld [vmem:[%s2120] sm:$0xf]
    %v2122 = vld [vmem:[%s2120 + $0x4] sm:$0xf]
    %v2123 = vld [vmem:[%s2120 + $0x8] sm:$0xf]
    %v2124 = vld [vmem:[%s2120 + $0xc] sm:$0xf]
    %v2125 = vld [vmem:[%s2120 + $0x10] sm:$0xf]
    %v2126 = vld [vmem:[%s2120 + $0x14] sm:$0xf]
    %v2127 = vld [vmem:[%s2120 + $0x18] sm:$0xf]
    %v2128 = vld [vmem:[%s2120 + $0x1c] sm:$0xf]
    %v2137 = vunpack.c.l.b16 %v2121
    %v2138 = vunpack.c.l.b16 %v2122
    %v2139 = vunpack.c.l.b16 %v2123
    %v2140 = vunpack.c.l.b16 %v2124
    %v2141 = vunpack.c.l.b16 %v2125
    %v2142 = vunpack.c.l.b16 %v2126
    %v2143 = vunpack.c.l.b16 %v2127
    %v2144 = vunpack.c.l.b16 %v2128
    %v2145 = vpack.c.b16 %v2138, %v2137
    %v2146 = vpack.c.b16 %v2140, %v2139
    %v2147 = vpack.c.b16 %v2142, %v2141
    %v2148 = vpack.c.b16 %v2144, %v2143
    %2153 = vrot.lane.b32.xlu0 %v2116, 96
    %v2154 = vpop.permute.xlu0 %2153
    %2155 = vrot.lane.b32.xlu0 %v2117, 96
    %v2156 = vpop.permute.xlu0 %2155
    %2157 = vrot.lane.b32.xlu0 %v2118, 96
    %v2158 = vpop.permute.xlu0 %2157
    %2159 = vrot.lane.b32.xlu0 %v2119, 96
    %v2160 = vpop.permute.xlu0 %2159
    %v2166 = vsel %vm218, %v2145, 0
    %v2169 = vsel %vm218, %v2146, 0
    %v2172 = vsel %vm218, %v2147, 0
    %v2175 = vsel %vm218, %v2148, 0
    %2177 = vmatprep.subr.bf16.mxu0 0
    %2178 = vmatpush1.bf16.msra.mxu0 0
    %2179 = vmatprep.subr.bf16.mxu0 0
    %2180 = vmatpush1.bf16.msra.mxu0 0
    %2181 = vmatprep.subr.bf16.mxu0 0
    %2182 = vmatpush1.bf16.msra.mxu0 0
    %2183 = vmatprep.subr.bf16.mxu0 0
    %2184 = vmatpush1.bf16.msra.mxu0 0
    %2185 = vmatprep.subr.bf16.mxu0 0
    %2186 = vmatpush1.bf16.msra.mxu0 %v2160
    %2187 = vmatprep.subr.bf16.mxu0 0
    %2188 = vmatpush1.bf16.msra.mxu0 %v2158
    %2189 = vmatprep.subr.bf16.mxu0 0
    %2190 = vmatpush1.bf16.msra.mxu0 %v2156
    %2191 = vmatprep.subr.bf16.mxu0 0
    %2192 = vmatpush1.bf16.msra.mxu0 %v2154
    %2193 = vmatprep.subr.bf16.mxu0 0
    %2194 = vmatpush2.bf16.msra.mxu0 0
    %2195 = vmatprep.subr.bf16.mxu0 0
    %2196 = vmatpush2.bf16.msra.mxu0 0
    %2197 = vmatprep.subr.bf16.mxu0 0
    %2198 = vmatpush2.bf16.msra.mxu0 0
    %2199 = vmatprep.subr.bf16.mxu0 0
    %2200 = vmatpush2.bf16.msra.mxu0 0
    %2201 = vmatprep.subr.bf16.mxu0 0
    %2202 = vmatpush2.bf16.msra.mxu0 0
    %2203 = vmatprep.subr.bf16.mxu0 0
    %2204 = vmatpush2.bf16.msra.mxu0 0
    %2205 = vmatprep.subr.bf16.mxu0 0
    %2206 = vmatpush2.bf16.msra.mxu0 0
    %2207 = vmatprep.subr.bf16.mxu0 0
    %2208 = vmatpush2.bf16.msra.mxu0 0
    %2209 = vmatprep.mubr.bf16.mxu0 0
    %2210 = vmatmul.mubr.bf16.gmra.mxu0 %v2166
    %v2211 = vpop.f32.mrf.mxu0
    %v2212 = vadd.f32 0.0, %v2211
    %v2213 = vpop.f32.mrf.mxu0
    %v2214 = vpop.f32.mrf.mxu0
    %v2215 = vadd.f32 0.0, %v2214
    %v2216 = vpop.f32.mrf.mxu0
    %2217 = vmatprep.mubr.bf16.mxu0 0
    %2218 = vmatmul.mubr.bf16.gmra.mxu0 %v2169
    %v2219 = vpop.f32.mrf.mxu0
    %v2220 = vadd.f32 0.0, %v2219
    %v2221 = vpop.f32.mrf.mxu0
    %v2222 = vpop.f32.mrf.mxu0
    %v2223 = vadd.f32 0.0, %v2222
    %v2224 = vpop.f32.mrf.mxu0
    %2225 = vmatprep.mubr.bf16.mxu0 0
    %2226 = vmatmul.mubr.bf16.gmra.mxu0 %v2172
    %v2227 = vpop.f32.mrf.mxu0
    %v2228 = vadd.f32 0.0, %v2227
    %v2229 = vpop.f32.mrf.mxu0
    %v2230 = vpop.f32.mrf.mxu0
    %v2231 = vadd.f32 0.0, %v2230
    %v2232 = vpop.f32.mrf.mxu0
    %2233 = vmatprep.mubr.bf16.mxu0 0
    %2234 = vmatmul.mubr.bf16.gmra.mxu0 %v2175
    %v2235 = vpop.f32.mrf.mxu0
    %v2236 = vadd.f32 0.0, %v2235
    %v2237 = vpop.f32.mrf.mxu0
    %v2238 = vpop.f32.mrf.mxu0
    %v2239 = vadd.f32 0.0, %v2238
    %v2240 = vpop.f32.mrf.mxu0
    %2241 = vdwg.mxu0
    %v2242 = vadd.f32 %v2108, %v2212
    %v2243 = vadd.f32 %v2109, %v2215
    %v2244 = vadd.f32 %v2110, %v2220
    %v2245 = vadd.f32 %v2111, %v2223
    %v2246 = vadd.f32 %v2112, %v2228
    %v2247 = vadd.f32 %v2113, %v2231
    %v2248 = vadd.f32 %v2114, %v2236
    %v2249 = vadd.f32 %v2115, %v2239
    %v2250 = vxor.u32 %v2242, 2147483648
    %v2251 = vxor.u32 %v2243, 2147483648
    %v2252 = vxor.u32 %v2244, 2147483648
    %v2253 = vxor.u32 %v2245, 2147483648
    %v2254 = vxor.u32 %v2246, 2147483648
    %v2255 = vxor.u32 %v2247, 2147483648
    %v2256 = vxor.u32 %v2248, 2147483648
    %v2257 = vxor.u32 %v2249, 2147483648
    %v2258 = vmul.f32 %v2250, 1.442695
    %v2259 = vpow.pop %v2258
    %v2260 = vmul.f32 %v2251, 1.442695
    %v2261 = vpow.pop %v2260
    %v2262 = vmul.f32 %v2252, 1.442695
    %v2263 = vpow.pop %v2262
    %v2264 = vmul.f32 %v2253, 1.442695
    %v2265 = vpow.pop %v2264
    %v2266 = vmul.f32 %v2254, 1.442695
    %v2267 = vpow.pop %v2266
    %v2268 = vmul.f32 %v2255, 1.442695
    %v2269 = vpow.pop %v2268
    %v2270 = vmul.f32 %v2256, 1.442695
    %v2271 = vpow.pop %v2270
    %v2272 = vmul.f32 %v2257, 1.442695
    %v2273 = vpow.pop %v2272
    %v2274 = vadd.f32 %v2259, 1.0
    %v2275 = vadd.f32 %v2261, 1.0
    %v2276 = vadd.f32 %v2263, 1.0
    %v2277 = vadd.f32 %v2265, 1.0
    %v2278 = vadd.f32 %v2267, 1.0
    %v2279 = vadd.f32 %v2269, 1.0
    %v2280 = vadd.f32 %v2271, 1.0
    %v2281 = vadd.f32 %v2273, 1.0
    %v2282 = vrcp.pop %v2274
    %v2283 = vmul.f32 1.0, %v2282
    %v2284 = vrcp.pop %v2275
    %v2285 = vmul.f32 1.0, %v2284
    %v2286 = vrcp.pop %v2276
    %v2287 = vmul.f32 1.0, %v2286
    %v2288 = vrcp.pop %v2277
    %v2289 = vmul.f32 1.0, %v2288
    %v2290 = vrcp.pop %v2278
    %v2291 = vmul.f32 1.0, %v2290
    %v2292 = vrcp.pop %v2279
    %v2293 = vmul.f32 1.0, %v2292
    %v2294 = vrcp.pop %v2280
    %v2295 = vmul.f32 1.0, %v2294
    %v2296 = vrcp.pop %v2281
    %v2297 = vmul.f32 1.0, %v2296
    %v2298 = vmul.f32 %v2242, %v2283
    %v2299 = vmul.f32 %v2243, %v2285
    %v2300 = vmul.f32 %v2244, %v2287
    %v2301 = vmul.f32 %v2245, %v2289
    %v2302 = vmul.f32 %v2246, %v2291
    %v2303 = vmul.f32 %v2247, %v2293
    %v2304 = vmul.f32 %v2248, %v2295
    %v2305 = vmul.f32 %v2249, %v2297
    %s2306 = scalar_lea.vmem %s0, 160
    %v2307 = vld [vmem:[%s2306] sm:$0xf]
    %v2308 = vld [vmem:[%s2306 + $0x4] sm:$0xf]
    %v2309 = vld [vmem:[%s2306 + $0x8] sm:$0xf]
    %v2310 = vld [vmem:[%s2306 + $0xc] sm:$0xf]
    %v2311 = vld [vmem:[%s2306 + $0x10] sm:$0xf]
    %v2312 = vld [vmem:[%s2306 + $0x14] sm:$0xf]
    %v2313 = vld [vmem:[%s2306 + $0x18] sm:$0xf]
    %v2314 = vld [vmem:[%s2306 + $0x1c] sm:$0xf]
    %s2315 = scalar_lea.vmem %s1, 80
    %v2316 = vld [vmem:[%s2315] sm:$0xf]
    %v2317 = vld [vmem:[%s2315 + $0x4] sm:$0xf]
    %v2318 = vld [vmem:[%s2315 + $0x8] sm:$0xf]
    %v2319 = vld [vmem:[%s2315 + $0xc] sm:$0xf]
    %v2328 = vunpack.c.l.b16 %v2307
    %v2329 = vunpack.c.l.b16 %v2308
    %v2330 = vunpack.c.l.b16 %v2309
    %v2331 = vunpack.c.l.b16 %v2310
    %v2332 = vunpack.c.l.b16 %v2311
    %v2333 = vunpack.c.l.b16 %v2312
    %v2334 = vunpack.c.l.b16 %v2313
    %v2335 = vunpack.c.l.b16 %v2314
    %v2336 = vpack.c.b16 %v2329, %v2328
    %v2337 = vpack.c.b16 %v2331, %v2330
    %v2338 = vpack.c.b16 %v2333, %v2332
    %v2339 = vpack.c.b16 %v2335, %v2334
    %v2344 = vunpack.c.l.b16 %v2316
    %v2345 = vunpack.c.l.b16 %v2317
    %v2346 = vunpack.c.l.b16 %v2318
    %v2347 = vunpack.c.l.b16 %v2319
    %v2348 = vpack.c.b16 %v2345, %v2344
    %v2349 = vpack.c.b16 %v2347, %v2346
    %v2353 = vsel %vm77, %v2336, 0
    %v2356 = vsel %vm77, %v2337, 0
    %v2359 = vsel %vm77, %v2338, 0
    %v2362 = vsel %vm77, %v2339, 0
    %2364 = vmatprep.subr.bf16.mxu0 0
    %2365 = vmatpush1.bf16.msra.mxu0 0
    %2366 = vmatprep.subr.bf16.mxu0 0
    %2367 = vmatpush1.bf16.msra.mxu0 0
    %2368 = vmatprep.subr.bf16.mxu0 0
    %2369 = vmatpush1.bf16.msra.mxu0 0
    %2370 = vmatprep.subr.bf16.mxu0 0
    %2371 = vmatpush1.bf16.msra.mxu0 0
    %2372 = vmatprep.subr.bf16.mxu0 0
    %2373 = vmatpush1.bf16.msra.mxu0 0
    %2374 = vmatprep.subr.bf16.mxu0 0
    %2375 = vmatpush1.bf16.msra.mxu0 0
    %2376 = vmatprep.subr.bf16.mxu0 0
    %2377 = vmatpush1.bf16.msra.mxu0 %v2349
    %2378 = vmatprep.subr.bf16.mxu0 0
    %2379 = vmatpush1.bf16.msra.mxu0 %v2348
    %2380 = vmatprep.subr.bf16.mxu0 0
    %2381 = vmatpush2.bf16.msra.mxu0 0
    %2382 = vmatprep.subr.bf16.mxu0 0
    %2383 = vmatpush2.bf16.msra.mxu0 0
    %2384 = vmatprep.subr.bf16.mxu0 0
    %2385 = vmatpush2.bf16.msra.mxu0 0
    %2386 = vmatprep.subr.bf16.mxu0 0
    %2387 = vmatpush2.bf16.msra.mxu0 0
    %2388 = vmatprep.subr.bf16.mxu0 0
    %2389 = vmatpush2.bf16.msra.mxu0 0
    %2390 = vmatprep.subr.bf16.mxu0 0
    %2391 = vmatpush2.bf16.msra.mxu0 0
    %2392 = vmatprep.subr.bf16.mxu0 0
    %2393 = vmatpush2.bf16.msra.mxu0 0
    %2394 = vmatprep.subr.bf16.mxu0 0
    %2395 = vmatpush2.bf16.msra.mxu0 0
    %2396 = vmatprep.mubr.bf16.mxu0 0
    %2397 = vmatmul.mubr.bf16.gmra.mxu0 %v2353
    %v2398 = vpop.f32.mrf.mxu0
    %v2399 = vadd.f32 0.0, %v2398
    %v2400 = vpop.f32.mrf.mxu0
    %v2401 = vpop.f32.mrf.mxu0
    %v2402 = vadd.f32 0.0, %v2401
    %v2403 = vpop.f32.mrf.mxu0
    %2404 = vmatprep.mubr.bf16.mxu0 0
    %2405 = vmatmul.mubr.bf16.gmra.mxu0 %v2356
    %v2406 = vpop.f32.mrf.mxu0
    %v2407 = vadd.f32 0.0, %v2406
    %v2408 = vpop.f32.mrf.mxu0
    %v2409 = vpop.f32.mrf.mxu0
    %v2410 = vadd.f32 0.0, %v2409
    %v2411 = vpop.f32.mrf.mxu0
    %2412 = vmatprep.mubr.bf16.mxu0 0
    %2413 = vmatmul.mubr.bf16.gmra.mxu0 %v2359
    %v2414 = vpop.f32.mrf.mxu0
    %v2415 = vadd.f32 0.0, %v2414
    %v2416 = vpop.f32.mrf.mxu0
    %v2417 = vpop.f32.mrf.mxu0
    %v2418 = vadd.f32 0.0, %v2417
    %v2419 = vpop.f32.mrf.mxu0
    %2420 = vmatprep.mubr.bf16.mxu0 0
    %2421 = vmatmul.mubr.bf16.gmra.mxu0 %v2362
    %v2422 = vpop.f32.mrf.mxu0
    %v2423 = vadd.f32 0.0, %v2422
    %v2424 = vpop.f32.mrf.mxu0
    %v2425 = vpop.f32.mrf.mxu0
    %v2426 = vadd.f32 0.0, %v2425
    %v2427 = vpop.f32.mrf.mxu0
    %2428 = vdwg.mxu0
    %s2429 = scalar_lea.vmem %s3, 5
    %v2430 = vld [vmem:[%s2429] sm:$0x1]
    %v2432 = vlaneseq
    %v2433 = vshrl.u32 %v2432, 7
    %v2434 = vsub.s32 0, %v2433
    %v2435 = vrot.slane %v2430, %v2434
    %v2437 = vadd.f32 %v2399, %v2435
    %v2438 = vadd.f32 %v2402, %v2435
    %v2439 = vadd.f32 %v2407, %v2435
    %v2440 = vadd.f32 %v2410, %v2435
    %v2441 = vadd.f32 %v2415, %v2435
    %v2442 = vadd.f32 %v2418, %v2435
    %v2443 = vadd.f32 %v2423, %v2435
    %v2444 = vadd.f32 %v2426, %v2435
    %v2445 = vpack.c.bf16 %v2402, %v2399
    %v2446 = vpack.c.bf16 %v2410, %v2407
    %v2447 = vpack.c.bf16 %v2418, %v2415
    %v2448 = vpack.c.bf16 %v2426, %v2423
    %s2449 = scalar_lea.vmem [#allocation2], 320
    %v2450 = vld [vmem:[%s2449] sm:$0xf]
    %v2451 = vld [vmem:[%s2449 + $0x4] sm:$0xf]
    %v2452 = vld [vmem:[%s2449 + $0x8] sm:$0xf]
    %v2453 = vld [vmem:[%s2449 + $0xc] sm:$0xf]
    %v2454 = vld [vmem:[%s2449 + $0x10] sm:$0xf]
    %v2455 = vld [vmem:[%s2449 + $0x14] sm:$0xf]
    %v2456 = vld [vmem:[%s2449 + $0x18] sm:$0xf]
    %v2457 = vld [vmem:[%s2449 + $0x1c] sm:$0xf]
    %v2466 = vunpack.c.l.b16 %v2450
    %v2467 = vunpack.c.l.b16 %v2451
    %v2468 = vunpack.c.l.b16 %v2452
    %v2469 = vunpack.c.l.b16 %v2453
    %v2470 = vunpack.c.l.b16 %v2454
    %v2471 = vunpack.c.l.b16 %v2455
    %v2472 = vunpack.c.l.b16 %v2456
    %v2473 = vunpack.c.l.b16 %v2457
    %v2474 = vpack.c.b16 %v2467, %v2466
    %v2475 = vpack.c.b16 %v2469, %v2468
    %v2476 = vpack.c.b16 %v2471, %v2470
    %v2477 = vpack.c.b16 %v2473, %v2472
    %2482 = vrot.lane.b32.xlu0 %v2445, 96
    %v2483 = vpop.permute.xlu0 %2482
    %2484 = vrot.lane.b32.xlu0 %v2446, 96
    %v2485 = vpop.permute.xlu0 %2484
    %2486 = vrot.lane.b32.xlu0 %v2447, 96
    %v2487 = vpop.permute.xlu0 %2486
    %2488 = vrot.lane.b32.xlu0 %v2448, 96
    %v2489 = vpop.permute.xlu0 %2488
    %v2495 = vsel %vm218, %v2474, 0
    %v2498 = vsel %vm218, %v2475, 0
    %v2501 = vsel %vm218, %v2476, 0
    %v2504 = vsel %vm218, %v2477, 0
    %2506 = vmatprep.subr.bf16.mxu0 0
    %2507 = vmatpush1.bf16.msra.mxu0 0
    %2508 = vmatprep.subr.bf16.mxu0 0
    %2509 = vmatpush1.bf16.msra.mxu0 0
    %2510 = vmatprep.subr.bf16.mxu0 0
    %2511 = vmatpush1.bf16.msra.mxu0 0
    %2512 = vmatprep.subr.bf16.mxu0 0
    %2513 = vmatpush1.bf16.msra.mxu0 0
    %2514 = vmatprep.subr.bf16.mxu0 0
    %2515 = vmatpush1.bf16.msra.mxu0 %v2489
    %2516 = vmatprep.subr.bf16.mxu0 0
    %2517 = vmatpush1.bf16.msra.mxu0 %v2487
    %2518 = vmatprep.subr.bf16.mxu0 0
    %2519 = vmatpush1.bf16.msra.mxu0 %v2485
    %2520 = vmatprep.subr.bf16.mxu0 0
    %2521 = vmatpush1.bf16.msra.mxu0 %v2483
    %2522 = vmatprep.subr.bf16.mxu0 0
    %2523 = vmatpush2.bf16.msra.mxu0 0
    %2524 = vmatprep.subr.bf16.mxu0 0
    %2525 = vmatpush2.bf16.msra.mxu0 0
    %2526 = vmatprep.subr.bf16.mxu0 0
    %2527 = vmatpush2.bf16.msra.mxu0 0
    %2528 = vmatprep.subr.bf16.mxu0 0
    %2529 = vmatpush2.bf16.msra.mxu0 0
    %2530 = vmatprep.subr.bf16.mxu0 0
    %2531 = vmatpush2.bf16.msra.mxu0 0
    %2532 = vmatprep.subr.bf16.mxu0 0
    %2533 = vmatpush2.bf16.msra.mxu0 0
    %2534 = vmatprep.subr.bf16.mxu0 0
    %2535 = vmatpush2.bf16.msra.mxu0 0
    %2536 = vmatprep.subr.bf16.mxu0 0
    %2537 = vmatpush2.bf16.msra.mxu0 0
    %2538 = vmatprep.mubr.bf16.mxu0 0
    %2539 = vmatmul.mubr.bf16.gmra.mxu0 %v2495
    %v2540 = vpop.f32.mrf.mxu0
    %v2541 = vadd.f32 0.0, %v2540
    %v2542 = vpop.f32.mrf.mxu0
    %v2543 = vpop.f32.mrf.mxu0
    %v2544 = vadd.f32 0.0, %v2543
    %v2545 = vpop.f32.mrf.mxu0
    %2546 = vmatprep.mubr.bf16.mxu0 0
    %2547 = vmatmul.mubr.bf16.gmra.mxu0 %v2498
    %v2548 = vpop.f32.mrf.mxu0
    %v2549 = vadd.f32 0.0, %v2548
    %v2550 = vpop.f32.mrf.mxu0
    %v2551 = vpop.f32.mrf.mxu0
    %v2552 = vadd.f32 0.0, %v2551
    %v2553 = vpop.f32.mrf.mxu0
    %2554 = vmatprep.mubr.bf16.mxu0 0
    %2555 = vmatmul.mubr.bf16.gmra.mxu0 %v2501
    %v2556 = vpop.f32.mrf.mxu0
    %v2557 = vadd.f32 0.0, %v2556
    %v2558 = vpop.f32.mrf.mxu0
    %v2559 = vpop.f32.mrf.mxu0
    %v2560 = vadd.f32 0.0, %v2559
    %v2561 = vpop.f32.mrf.mxu0
    %2562 = vmatprep.mubr.bf16.mxu0 0
    %2563 = vmatmul.mubr.bf16.gmra.mxu0 %v2504
    %v2564 = vpop.f32.mrf.mxu0
    %v2565 = vadd.f32 0.0, %v2564
    %v2566 = vpop.f32.mrf.mxu0
    %v2567 = vpop.f32.mrf.mxu0
    %v2568 = vadd.f32 0.0, %v2567
    %v2569 = vpop.f32.mrf.mxu0
    %2570 = vdwg.mxu0
    %v2571 = vadd.f32 %v2437, %v2541
    %v2572 = vadd.f32 %v2438, %v2544
    %v2573 = vadd.f32 %v2439, %v2549
    %v2574 = vadd.f32 %v2440, %v2552
    %v2575 = vadd.f32 %v2441, %v2557
    %v2576 = vadd.f32 %v2442, %v2560
    %v2577 = vadd.f32 %v2443, %v2565
    %v2578 = vadd.f32 %v2444, %v2568
    %v2579 = vxor.u32 %v2571, 2147483648
    %v2580 = vxor.u32 %v2572, 2147483648
    %v2581 = vxor.u32 %v2573, 2147483648
    %v2582 = vxor.u32 %v2574, 2147483648
    %v2583 = vxor.u32 %v2575, 2147483648
    %v2584 = vxor.u32 %v2576, 2147483648
    %v2585 = vxor.u32 %v2577, 2147483648
    %v2586 = vxor.u32 %v2578, 2147483648
    %v2587 = vmul.f32 %v2579, 1.442695
    %v2588 = vpow.pop %v2587
    %v2589 = vmul.f32 %v2580, 1.442695
    %v2590 = vpow.pop %v2589
    %v2591 = vmul.f32 %v2581, 1.442695
    %v2592 = vpow.pop %v2591
    %v2593 = vmul.f32 %v2582, 1.442695
    %v2594 = vpow.pop %v2593
    %v2595 = vmul.f32 %v2583, 1.442695
    %v2596 = vpow.pop %v2595
    %v2597 = vmul.f32 %v2584, 1.442695
    %v2598 = vpow.pop %v2597
    %v2599 = vmul.f32 %v2585, 1.442695
    %v2600 = vpow.pop %v2599
    %v2601 = vmul.f32 %v2586, 1.442695
    %v2602 = vpow.pop %v2601
    %v2603 = vadd.f32 %v2588, 1.0
    %v2604 = vadd.f32 %v2590, 1.0
    %v2605 = vadd.f32 %v2592, 1.0
    %v2606 = vadd.f32 %v2594, 1.0
    %v2607 = vadd.f32 %v2596, 1.0
    %v2608 = vadd.f32 %v2598, 1.0
    %v2609 = vadd.f32 %v2600, 1.0
    %v2610 = vadd.f32 %v2602, 1.0
    %v2611 = vrcp.pop %v2603
    %v2612 = vmul.f32 1.0, %v2611
    %v2613 = vrcp.pop %v2604
    %v2614 = vmul.f32 1.0, %v2613
    %v2615 = vrcp.pop %v2605
    %v2616 = vmul.f32 1.0, %v2615
    %v2617 = vrcp.pop %v2606
    %v2618 = vmul.f32 1.0, %v2617
    %v2619 = vrcp.pop %v2607
    %v2620 = vmul.f32 1.0, %v2619
    %v2621 = vrcp.pop %v2608
    %v2622 = vmul.f32 1.0, %v2621
    %v2623 = vrcp.pop %v2609
    %v2624 = vmul.f32 1.0, %v2623
    %v2625 = vrcp.pop %v2610
    %v2626 = vmul.f32 1.0, %v2625
    %v2627 = vmul.f32 %v2571, %v2612
    %v2628 = vmul.f32 %v2572, %v2614
    %v2629 = vmul.f32 %v2573, %v2616
    %v2630 = vmul.f32 %v2574, %v2618
    %v2631 = vmul.f32 %v2575, %v2620
    %v2632 = vmul.f32 %v2576, %v2622
    %v2633 = vmul.f32 %v2577, %v2624
    %v2634 = vmul.f32 %v2578, %v2626
    %s2635 = scalar_lea.vmem %s0, 192
    %v2636 = vld [vmem:[%s2635] sm:$0xf]
    %v2637 = vld [vmem:[%s2635 + $0x4] sm:$0xf]
    %v2638 = vld [vmem:[%s2635 + $0x8] sm:$0xf]
    %v2639 = vld [vmem:[%s2635 + $0xc] sm:$0xf]
    %v2640 = vld [vmem:[%s2635 + $0x10] sm:$0xf]
    %v2641 = vld [vmem:[%s2635 + $0x14] sm:$0xf]
    %v2642 = vld [vmem:[%s2635 + $0x18] sm:$0xf]
    %v2643 = vld [vmem:[%s2635 + $0x1c] sm:$0xf]
    %s2644 = scalar_lea.vmem %s1, 96
    %v2645 = vld [vmem:[%s2644] sm:$0xf]
    %v2646 = vld [vmem:[%s2644 + $0x4] sm:$0xf]
    %v2647 = vld [vmem:[%s2644 + $0x8] sm:$0xf]
    %v2648 = vld [vmem:[%s2644 + $0xc] sm:$0xf]
    %v2657 = vunpack.c.l.b16 %v2636
    %v2658 = vunpack.c.l.b16 %v2637
    %v2659 = vunpack.c.l.b16 %v2638
    %v2660 = vunpack.c.l.b16 %v2639
    %v2661 = vunpack.c.l.b16 %v2640
    %v2662 = vunpack.c.l.b16 %v2641
    %v2663 = vunpack.c.l.b16 %v2642
    %v2664 = vunpack.c.l.b16 %v2643
    %v2665 = vpack.c.b16 %v2658, %v2657
    %v2666 = vpack.c.b16 %v2660, %v2659
    %v2667 = vpack.c.b16 %v2662, %v2661
    %v2668 = vpack.c.b16 %v2664, %v2663
    %v2673 = vunpack.c.l.b16 %v2645
    %v2674 = vunpack.c.l.b16 %v2646
    %v2675 = vunpack.c.l.b16 %v2647
    %v2676 = vunpack.c.l.b16 %v2648
    %v2677 = vpack.c.b16 %v2674, %v2673
    %v2678 = vpack.c.b16 %v2676, %v2675
    %v2682 = vsel %vm77, %v2665, 0
    %v2685 = vsel %vm77, %v2666, 0
    %v2688 = vsel %vm77, %v2667, 0
    %v2691 = vsel %vm77, %v2668, 0
    %2693 = vmatprep.subr.bf16.mxu0 0
    %2694 = vmatpush1.bf16.msra.mxu0 0
    %2695 = vmatprep.subr.bf16.mxu0 0
    %2696 = vmatpush1.bf16.msra.mxu0 0
    %2697 = vmatprep.subr.bf16.mxu0 0
    %2698 = vmatpush1.bf16.msra.mxu0 0
    %2699 = vmatprep.subr.bf16.mxu0 0
    %2700 = vmatpush1.bf16.msra.mxu0 0
    %2701 = vmatprep.subr.bf16.mxu0 0
    %2702 = vmatpush1.bf16.msra.mxu0 0
    %2703 = vmatprep.subr.bf16.mxu0 0
    %2704 = vmatpush1.bf16.msra.mxu0 0
    %2705 = vmatprep.subr.bf16.mxu0 0
    %2706 = vmatpush1.bf16.msra.mxu0 %v2678
    %2707 = vmatprep.subr.bf16.mxu0 0
    %2708 = vmatpush1.bf16.msra.mxu0 %v2677
    %2709 = vmatprep.subr.bf16.mxu0 0
    %2710 = vmatpush2.bf16.msra.mxu0 0
    %2711 = vmatprep.subr.bf16.mxu0 0
    %2712 = vmatpush2.bf16.msra.mxu0 0
    %2713 = vmatprep.subr.bf16.mxu0 0
    %2714 = vmatpush2.bf16.msra.mxu0 0
    %2715 = vmatprep.subr.bf16.mxu0 0
    %2716 = vmatpush2.bf16.msra.mxu0 0
    %2717 = vmatprep.subr.bf16.mxu0 0
    %2718 = vmatpush2.bf16.msra.mxu0 0
    %2719 = vmatprep.subr.bf16.mxu0 0
    %2720 = vmatpush2.bf16.msra.mxu0 0
    %2721 = vmatprep.subr.bf16.mxu0 0
    %2722 = vmatpush2.bf16.msra.mxu0 0
    %2723 = vmatprep.subr.bf16.mxu0 0
    %2724 = vmatpush2.bf16.msra.mxu0 0
    %2725 = vmatprep.mubr.bf16.mxu0 0
    %2726 = vmatmul.mubr.bf16.gmra.mxu0 %v2682
    %v2727 = vpop.f32.mrf.mxu0
    %v2728 = vadd.f32 0.0, %v2727
    %v2729 = vpop.f32.mrf.mxu0
    %v2730 = vpop.f32.mrf.mxu0
    %v2731 = vadd.f32 0.0, %v2730
    %v2732 = vpop.f32.mrf.mxu0
    %2733 = vmatprep.mubr.bf16.mxu0 0
    %2734 = vmatmul.mubr.bf16.gmra.mxu0 %v2685
    %v2735 = vpop.f32.mrf.mxu0
    %v2736 = vadd.f32 0.0, %v2735
    %v2737 = vpop.f32.mrf.mxu0
    %v2738 = vpop.f32.mrf.mxu0
    %v2739 = vadd.f32 0.0, %v2738
    %v2740 = vpop.f32.mrf.mxu0
    %2741 = vmatprep.mubr.bf16.mxu0 0
    %2742 = vmatmul.mubr.bf16.gmra.mxu0 %v2688
    %v2743 = vpop.f32.mrf.mxu0
    %v2744 = vadd.f32 0.0, %v2743
    %v2745 = vpop.f32.mrf.mxu0
    %v2746 = vpop.f32.mrf.mxu0
    %v2747 = vadd.f32 0.0, %v2746
    %v2748 = vpop.f32.mrf.mxu0
    %2749 = vmatprep.mubr.bf16.mxu0 0
    %2750 = vmatmul.mubr.bf16.gmra.mxu0 %v2691
    %v2751 = vpop.f32.mrf.mxu0
    %v2752 = vadd.f32 0.0, %v2751
    %v2753 = vpop.f32.mrf.mxu0
    %v2754 = vpop.f32.mrf.mxu0
    %v2755 = vadd.f32 0.0, %v2754
    %v2756 = vpop.f32.mrf.mxu0
    %2757 = vdwg.mxu0
    %s2758 = scalar_lea.vmem %s3, 6
    %v2759 = vld [vmem:[%s2758] sm:$0x1]
    %v2761 = vlaneseq
    %v2762 = vshrl.u32 %v2761, 7
    %v2763 = vsub.s32 0, %v2762
    %v2764 = vrot.slane %v2759, %v2763
    %v2766 = vadd.f32 %v2728, %v2764
    %v2767 = vadd.f32 %v2731, %v2764
    %v2768 = vadd.f32 %v2736, %v2764
    %v2769 = vadd.f32 %v2739, %v2764
    %v2770 = vadd.f32 %v2744, %v2764
    %v2771 = vadd.f32 %v2747, %v2764
    %v2772 = vadd.f32 %v2752, %v2764
    %v2773 = vadd.f32 %v2755, %v2764
    %v2774 = vpack.c.bf16 %v2731, %v2728
    %v2775 = vpack.c.bf16 %v2739, %v2736
    %v2776 = vpack.c.bf16 %v2747, %v2744
    %v2777 = vpack.c.bf16 %v2755, %v2752
    %s2778 = scalar_lea.vmem [#allocation2], 352
    %v2779 = vld [vmem:[%s2778] sm:$0xf]
    %v2780 = vld [vmem:[%s2778 + $0x4] sm:$0xf]
    %v2781 = vld [vmem:[%s2778 + $0x8] sm:$0xf]
    %v2782 = vld [vmem:[%s2778 + $0xc] sm:$0xf]
    %v2783 = vld [vmem:[%s2778 + $0x10] sm:$0xf]
    %v2784 = vld [vmem:[%s2778 + $0x14] sm:$0xf]
    %v2785 = vld [vmem:[%s2778 + $0x18] sm:$0xf]
    %v2786 = vld [vmem:[%s2778 + $0x1c] sm:$0xf]
    %v2795 = vunpack.c.l.b16 %v2779
    %v2796 = vunpack.c.l.b16 %v2780
    %v2797 = vunpack.c.l.b16 %v2781
    %v2798 = vunpack.c.l.b16 %v2782
    %v2799 = vunpack.c.l.b16 %v2783
    %v2800 = vunpack.c.l.b16 %v2784
    %v2801 = vunpack.c.l.b16 %v2785
    %v2802 = vunpack.c.l.b16 %v2786
    %v2803 = vpack.c.b16 %v2796, %v2795
    %v2804 = vpack.c.b16 %v2798, %v2797
    %v2805 = vpack.c.b16 %v2800, %v2799
    %v2806 = vpack.c.b16 %v2802, %v2801
    %2811 = vrot.lane.b32.xlu0 %v2774, 96
    %v2812 = vpop.permute.xlu0 %2811
    %2813 = vrot.lane.b32.xlu0 %v2775, 96
    %v2814 = vpop.permute.xlu0 %2813
    %2815 = vrot.lane.b32.xlu0 %v2776, 96
    %v2816 = vpop.permute.xlu0 %2815
    %2817 = vrot.lane.b32.xlu0 %v2777, 96
    %v2818 = vpop.permute.xlu0 %2817
    %v2824 = vsel %vm218, %v2803, 0
    %v2827 = vsel %vm218, %v2804, 0
    %v2830 = vsel %vm218, %v2805, 0
    %v2833 = vsel %vm218, %v2806, 0
    %2835 = vmatprep.subr.bf16.mxu0 0
    %2836 = vmatpush1.bf16.msra.mxu0 0
    %2837 = vmatprep.subr.bf16.mxu0 0
    %2838 = vmatpush1.bf16.msra.mxu0 0
    %2839 = vmatprep.subr.bf16.mxu0 0
    %2840 = vmatpush1.bf16.msra.mxu0 0
    %2841 = vmatprep.subr.bf16.mxu0 0
    %2842 = vmatpush1.bf16.msra.mxu0 0
    %2843 = vmatprep.subr.bf16.mxu0 0
    %2844 = vmatpush1.bf16.msra.mxu0 %v2818
    %2845 = vmatprep.subr.bf16.mxu0 0
    %2846 = vmatpush1.bf16.msra.mxu0 %v2816
    %2847 = vmatprep.subr.bf16.mxu0 0
    %2848 = vmatpush1.bf16.msra.mxu0 %v2814
    %2849 = vmatprep.subr.bf16.mxu0 0
    %2850 = vmatpush1.bf16.msra.mxu0 %v2812
    %2851 = vmatprep.subr.bf16.mxu0 0
    %2852 = vmatpush2.bf16.msra.mxu0 0
    %2853 = vmatprep.subr.bf16.mxu0 0
    %2854 = vmatpush2.bf16.msra.mxu0 0
    %2855 = vmatprep.subr.bf16.mxu0 0
    %2856 = vmatpush2.bf16.msra.mxu0 0
    %2857 = vmatprep.subr.bf16.mxu0 0
    %2858 = vmatpush2.bf16.msra.mxu0 0
    %2859 = vmatprep.subr.bf16.mxu0 0
    %2860 = vmatpush2.bf16.msra.mxu0 0
    %2861 = vmatprep.subr.bf16.mxu0 0
    %2862 = vmatpush2.bf16.msra.mxu0 0
    %2863 = vmatprep.subr.bf16.mxu0 0
    %2864 = vmatpush2.bf16.msra.mxu0 0
    %2865 = vmatprep.subr.bf16.mxu0 0
    %2866 = vmatpush2.bf16.msra.mxu0 0
    %2867 = vmatprep.mubr.bf16.mxu0 0
    %2868 = vmatmul.mubr.bf16.gmra.mxu0 %v2824
    %v2869 = vpop.f32.mrf.mxu0
    %v2870 = vadd.f32 0.0, %v2869
    %v2871 = vpop.f32.mrf.mxu0
    %v2872 = vpop.f32.mrf.mxu0
    %v2873 = vadd.f32 0.0, %v2872
    %v2874 = vpop.f32.mrf.mxu0
    %2875 = vmatprep.mubr.bf16.mxu0 0
    %2876 = vmatmul.mubr.bf16.gmra.mxu0 %v2827
    %v2877 = vpop.f32.mrf.mxu0
    %v2878 = vadd.f32 0.0, %v2877
    %v2879 = vpop.f32.mrf.mxu0
    %v2880 = vpop.f32.mrf.mxu0
    %v2881 = vadd.f32 0.0, %v2880
    %v2882 = vpop.f32.mrf.mxu0
    %2883 = vmatprep.mubr.bf16.mxu0 0
    %2884 = vmatmul.mubr.bf16.gmra.mxu0 %v2830
    %v2885 = vpop.f32.mrf.mxu0
    %v2886 = vadd.f32 0.0, %v2885
    %v2887 = vpop.f32.mrf.mxu0
    %v2888 = vpop.f32.mrf.mxu0
    %v2889 = vadd.f32 0.0, %v2888
    %v2890 = vpop.f32.mrf.mxu0
    %2891 = vmatprep.mubr.bf16.mxu0 0
    %2892 = vmatmul.mubr.bf16.gmra.mxu0 %v2833
    %v2893 = vpop.f32.mrf.mxu0
    %v2894 = vadd.f32 0.0, %v2893
    %v2895 = vpop.f32.mrf.mxu0
    %v2896 = vpop.f32.mrf.mxu0
    %v2897 = vadd.f32 0.0, %v2896
    %v2898 = vpop.f32.mrf.mxu0
    %2899 = vdwg.mxu0
    %v2900 = vadd.f32 %v2766, %v2870
    %v2901 = vadd.f32 %v2767, %v2873
    %v2902 = vadd.f32 %v2768, %v2878
    %v2903 = vadd.f32 %v2769, %v2881
    %v2904 = vadd.f32 %v2770, %v2886
    %v2905 = vadd.f32 %v2771, %v2889
    %v2906 = vadd.f32 %v2772, %v2894
    %v2907 = vadd.f32 %v2773, %v2897
    %v2908 = vxor.u32 %v2900, 2147483648
    %v2909 = vxor.u32 %v2901, 2147483648
    %v2910 = vxor.u32 %v2902, 2147483648
    %v2911 = vxor.u32 %v2903, 2147483648
    %v2912 = vxor.u32 %v2904, 2147483648
    %v2913 = vxor.u32 %v2905, 2147483648
    %v2914 = vxor.u32 %v2906, 2147483648
    %v2915 = vxor.u32 %v2907, 2147483648
    %v2916 = vmul.f32 %v2908, 1.442695
    %v2917 = vpow.pop %v2916
    %v2918 = vmul.f32 %v2909, 1.442695
    %v2919 = vpow.pop %v2918
    %v2920 = vmul.f32 %v2910, 1.442695
    %v2921 = vpow.pop %v2920
    %v2922 = vmul.f32 %v2911, 1.442695
    %v2923 = vpow.pop %v2922
    %v2924 = vmul.f32 %v2912, 1.442695
    %v2925 = vpow.pop %v2924
    %v2926 = vmul.f32 %v2913, 1.442695
    %v2927 = vpow.pop %v2926
    %v2928 = vmul.f32 %v2914, 1.442695
    %v2929 = vpow.pop %v2928
    %v2930 = vmul.f32 %v2915, 1.442695
    %v2931 = vpow.pop %v2930
    %v2932 = vadd.f32 %v2917, 1.0
    %v2933 = vadd.f32 %v2919, 1.0
    %v2934 = vadd.f32 %v2921, 1.0
    %v2935 = vadd.f32 %v2923, 1.0
    %v2936 = vadd.f32 %v2925, 1.0
    %v2937 = vadd.f32 %v2927, 1.0
    %v2938 = vadd.f32 %v2929, 1.0
    %v2939 = vadd.f32 %v2931, 1.0
    %v2940 = vrcp.pop %v2932
    %v2941 = vmul.f32 1.0, %v2940
    %v2942 = vrcp.pop %v2933
    %v2943 = vmul.f32 1.0, %v2942
    %v2944 = vrcp.pop %v2934
    %v2945 = vmul.f32 1.0, %v2944
    %v2946 = vrcp.pop %v2935
    %v2947 = vmul.f32 1.0, %v2946
    %v2948 = vrcp.pop %v2936
    %v2949 = vmul.f32 1.0, %v2948
    %v2950 = vrcp.pop %v2937
    %v2951 = vmul.f32 1.0, %v2950
    %v2952 = vrcp.pop %v2938
    %v2953 = vmul.f32 1.0, %v2952
    %v2954 = vrcp.pop %v2939
    %v2955 = vmul.f32 1.0, %v2954
    %v2956 = vmul.f32 %v2900, %v2941
    %v2957 = vmul.f32 %v2901, %v2943
    %v2958 = vmul.f32 %v2902, %v2945
    %v2959 = vmul.f32 %v2903, %v2947
    %v2960 = vmul.f32 %v2904, %v2949
    %v2961 = vmul.f32 %v2905, %v2951
    %v2962 = vmul.f32 %v2906, %v2953
    %v2963 = vmul.f32 %v2907, %v2955
    %2972 = vrot.lane.b32.xlu0 %v1059, 32
    %v2973 = vpop.permute.xlu0 %2972
    %2974 = vrot.lane.b32.xlu0 %v1060, 32
    %v2975 = vpop.permute.xlu0 %2974
    %2976 = vrot.lane.b32.xlu0 %v1061, 32
    %v2977 = vpop.permute.xlu0 %2976
    %2978 = vrot.lane.b32.xlu0 %v1062, 32
    %v2979 = vpop.permute.xlu0 %2978
    %2980 = vrot.lane.b32.xlu0 %v1063, 32
    %v2981 = vpop.permute.xlu0 %2980
    %2982 = vrot.lane.b32.xlu0 %v1064, 32
    %v2983 = vpop.permute.xlu0 %2982
    %2984 = vrot.lane.b32.xlu0 %v1065, 32
    %v2985 = vpop.permute.xlu0 %2984
    %2986 = vrot.lane.b32.xlu0 %v1066, 32
    %v2987 = vpop.permute.xlu0 %2986
    %3004 = vrot.lane.b32.xlu0 %v1514, 64
    %v3005 = vpop.permute.xlu0 %3004
    %3006 = vrot.lane.b32.xlu0 %v1515, 64
    %v3007 = vpop.permute.xlu0 %3006
    %3008 = vrot.lane.b32.xlu0 %v1516, 64
    %v3009 = vpop.permute.xlu0 %3008
    %3010 = vrot.lane.b32.xlu0 %v1517, 64
    %v3011 = vpop.permute.xlu0 %3010
    %3012 = vrot.lane.b32.xlu0 %v1518, 64
    %v3013 = vpop.permute.xlu0 %3012
    %3014 = vrot.lane.b32.xlu0 %v1519, 64
    %v3015 = vpop.permute.xlu0 %3014
    %3016 = vrot.lane.b32.xlu0 %v1520, 64
    %v3017 = vpop.permute.xlu0 %3016
    %3018 = vrot.lane.b32.xlu0 %v1521, 64
    %v3019 = vpop.permute.xlu0 %3018
    %3036 = vrot.lane.b32.xlu0 %v1969, 96
    %v3037 = vpop.permute.xlu0 %3036
    %3038 = vrot.lane.b32.xlu0 %v1970, 96
    %v3039 = vpop.permute.xlu0 %3038
    %3040 = vrot.lane.b32.xlu0 %v1971, 96
    %v3041 = vpop.permute.xlu0 %3040
    %3042 = vrot.lane.b32.xlu0 %v1972, 96
    %v3043 = vpop.permute.xlu0 %3042
    %3044 = vrot.lane.b32.xlu0 %v1973, 96
    %v3045 = vpop.permute.xlu0 %3044
    %3046 = vrot.lane.b32.xlu0 %v1974, 96
    %v3047 = vpop.permute.xlu0 %3046
    %3048 = vrot.lane.b32.xlu0 %v1975, 96
    %v3049 = vpop.permute.xlu0 %3048
    %3050 = vrot.lane.b32.xlu0 %v1976, 96
    %v3051 = vpop.permute.xlu0 %3050
    %3068 = vrot.lane.b32.xlu0 %v2627, 32
    %v3069 = vpop.permute.xlu0 %3068
    %3070 = vrot.lane.b32.xlu0 %v2628, 32
    %v3071 = vpop.permute.xlu0 %3070
    %3072 = vrot.lane.b32.xlu0 %v2629, 32
    %v3073 = vpop.permute.xlu0 %3072
    %3074 = vrot.lane.b32.xlu0 %v2630, 32
    %v3075 = vpop.permute.xlu0 %3074
    %3076 = vrot.lane.b32.xlu0 %v2631, 32
    %v3077 = vpop.permute.xlu0 %3076
    %3078 = vrot.lane.b32.xlu0 %v2632, 32
    %v3079 = vpop.permute.xlu0 %3078
    %3080 = vrot.lane.b32.xlu0 %v2633, 32
    %v3081 = vpop.permute.xlu0 %3080
    %3082 = vrot.lane.b32.xlu0 %v2634, 32
    %v3083 = vpop.permute.xlu0 %3082
    %3100 = vrot.lane.b32.xlu0 %v2956, 64
    %v3101 = vpop.permute.xlu0 %3100
    %3102 = vrot.lane.b32.xlu0 %v2957, 64
    %v3103 = vpop.permute.xlu0 %3102
    %3104 = vrot.lane.b32.xlu0 %v2958, 64
    %v3105 = vpop.permute.xlu0 %3104
    %3106 = vrot.lane.b32.xlu0 %v2959, 64
    %v3107 = vpop.permute.xlu0 %3106
    %3108 = vrot.lane.b32.xlu0 %v2960, 64
    %v3109 = vpop.permute.xlu0 %3108
    %3110 = vrot.lane.b32.xlu0 %v2961, 64
    %v3111 = vpop.permute.xlu0 %3110
    %3112 = vrot.lane.b32.xlu0 %v2962, 64
    %v3113 = vpop.permute.xlu0 %3112
    %3114 = vrot.lane.b32.xlu0 %v2963, 64
    %v3115 = vpop.permute.xlu0 %3114
    %v3124 = vsel %vm77, %v604, %v2973
    %v3125 = vsel %vm77, %v605, %v2975
    %v3126 = vsel %vm77, %v606, %v2977
    %v3127 = vsel %vm77, %v607, %v2979
    %v3128 = vsel %vm77, %v608, %v2981
    %v3129 = vsel %vm77, %v609, %v2983
    %v3130 = vsel %vm77, %v610, %v2985
    %v3131 = vsel %vm77, %v611, %v2987
    %v3132 = vsel %vm218, %v3124, %v3005
    %v3133 = vsel %vm218, %v3125, %v3007
    %v3134 = vsel %vm218, %v3126, %v3009
    %v3135 = vsel %vm218, %v3127, %v3011
    %v3136 = vsel %vm218, %v3128, %v3013
    %v3137 = vsel %vm218, %v3129, %v3015
    %v3138 = vsel %vm218, %v3130, %v3017
    %v3139 = vsel %vm218, %v3131, %v3019
    %vm3140 = vcmask 785408
    %v3141 = vsel %vm3140, %v3132, %v3037
    %v3142 = vsel %vm3140, %v3133, %v3039
    %v3143 = vsel %vm3140, %v3134, %v3041
    %v3144 = vsel %vm3140, %v3135, %v3043
    %v3145 = vsel %vm3140, %v3136, %v3045
    %v3146 = vsel %vm3140, %v3137, %v3047
    %v3147 = vsel %vm3140, %v3138, %v3049
    %v3148 = vsel %vm3140, %v3139, %v3051
    %v3149 = vsel %vm77, %v2298, %v3069
    %v3150 = vsel %vm77, %v2299, %v3071
    %v3151 = vsel %vm77, %v2300, %v3073
    %v3152 = vsel %vm77, %v2301, %v3075
    %v3153 = vsel %vm77, %v2302, %v3077
    %v3154 = vsel %vm77, %v2303, %v3079
    %v3155 = vsel %vm77, %v2304, %v3081
    %v3156 = vsel %vm77, %v2305, %v3083
    %v3157 = vsel %vm218, %v3149, %v3101
    %v3158 = vsel %vm218, %v3150, %v3103
    %v3159 = vsel %vm218, %v3151, %v3105
    %v3160 = vsel %vm218, %v3152, %v3107
    %v3161 = vsel %vm218, %v3153, %v3109
    %v3162 = vsel %vm218, %v3154, %v3111
    %v3163 = vsel %vm218, %v3155, %v3113
    %v3164 = vsel %vm218, %v3156, %v3115
    %v3165 = vsel %vm3140, %v3157, 0.0
    %v3166 = vsel %vm3140, %v3158, 0.0
    %v3167 = vsel %vm3140, %v3159, 0.0
    %v3168 = vsel %vm3140, %v3160, 0.0
    %v3169 = vsel %vm3140, %v3161, 0.0
    %v3170 = vsel %vm3140, %v3162, 0.0
    %v3171 = vsel %vm3140, %v3163, 0.0
    %v3172 = vsel %vm3140, %v3164, 0.0
    %3173 = vst [vmem:[#allocation5] sm:$0xff] %v3141
    %3174 = vst [vmem:[#allocation5 + $0x8] sm:$0xff] %v3165
    %3175 = vst [vmem:[#allocation5 + $0x10] sm:$0xff] %v3142
    %3176 = vst [vmem:[#allocation5 + $0x18] sm:$0xff] %v3166
    %3177 = vst [vmem:[#allocation5 + $0x20] sm:$0xff] %v3143
    %3178 = vst [vmem:[#allocation5 + $0x28] sm:$0xff] %v3167
    %3179 = vst [vmem:[#allocation5 + $0x30] sm:$0xff] %v3144
    %3180 = vst [vmem:[#allocation5 + $0x38] sm:$0xff] %v3168
    %3181 = vst [vmem:[#allocation5 + $0x40] sm:$0xff] %v3145
    %3182 = vst [vmem:[#allocation5 + $0x48] sm:$0xff] %v3169
    %3183 = vst [vmem:[#allocation5 + $0x50] sm:$0xff] %v3146
    %3184 = vst [vmem:[#allocation5 + $0x58] sm:$0xff] %v3170
    %3185 = vst [vmem:[#allocation5 + $0x60] sm:$0xff] %v3147
    %3186 = vst [vmem:[#allocation5 + $0x68] sm:$0xff] %v3171
    %3187 = vst [vmem:[#allocation5 + $0x70] sm:$0xff] %v3148
    %3188 = vst [vmem:[#allocation5 + $0x78] sm:$0xff] %v3172
    // Predicated region
    $region22: #{tpu_custom_call.1} parent=1 // pred_check
      _
    $region23: #{tpu_custom_call.1} parent=1 // pred_check_branch
      %3190 = sbr.rel (0) target = $region25
    $region24: #{tpu_custom_call.1} parent=1 // pred_region
      %s3192 = ssub.s32 2048, 2048
      %3193 = vsyncadd [#allocation4], %s3192
      %s3194 = sshll.u32 [#allocation5], 4
      %s3195 = int_to_ptr.vmem [resolvable:$true] %s3194
      %3200 = dma.vmem_to_hbm [thread:$0]  %s3195, 2048, %s4, [#allocation4], 256, 256, 16
    $region25: #{tpu_custom_call.1} parent=1 // pred_fallthru
      _
    // Predicated region
    $region26: #{tpu_custom_call.1} parent=1 // pred_check
      _
    $region27: #{tpu_custom_call.1} parent=1 // pred_check_branch
      %3202 = sbr.rel (0) target = $region29
    $region28: #{tpu_custom_call.1} parent=1 // pred_region
      %3203 = dma.done [#allocation4], 2048
    $region29: #{tpu_custom_call.1} parent=1 // pred_fallthru
      _
    %3204 = vsyncpa [#allocation3], 1
    %3205 = vsyncpa [#allocation4], 1

</llo_original>
